<compile_context>
chip_gen: v7x
topology: tpu7x:2x2x1
jax: 0.10.0
libtpu: 0.0.40
codegen_flags: <defaults>
</compile_context>

<pallas_src>
import jax
import jax.numpy as jnp
from jax import lax
from jax.experimental import pallas as pl
from jax.experimental.pallas import tpu as pltpu


# ----------------------------- fused Pallas kernel ---------------------------

def _make_fused_tan_kernel(k, grid_side, n_layers):
    """All conv layers + pred head on a fixed `grid_side x grid_side` grid."""
    c = (k - 1) // 2
    # static flat shift for every tap (dy, dx), row-major
    shifts = [(dy - c) * grid_side + (dx - c) for dy in range(k) for dx in range(k)]

    def kernel(*refs):
        # refs = [x] + [w_i, b_i, mw_i] * n_layers + [pred_w, pred_b, out]
        x_ref = refs[0]
        layer_refs = [refs[1 + 3 * i: 4 + 3 * i] for i in range(n_layers)]
        predw_ref = refs[1 + 3 * n_layers]
        predb_ref = refs[2 + 3 * n_layers]          # SMEM (1,1) scalar
        o_ref = refs[3 + 3 * n_layers]

        p_lanes = x_ref.shape[-1]
        h = x_ref[0]                                # (Cin, P) f32, lane-dense
        for li in range(n_layers):
            w_ref, b_ref, mw_ref = layer_refs[li]
            acc = None
            for t, d in enumerate(shifts):
                # tap operand: opnd[ch, p] = h[ch, p + d].  Wrapped border /
                # lane-pad positions are garbage but only land on outputs the
                # zero-embedded mask weight kills.
                opnd = h if d == 0 else pltpu.roll(h, (-d) % p_lanes, axis=1)
                part = jnp.dot(w_ref[t], opnd, preferred_element_type=jnp.float32)
                acc = part if acc is None else acc + part
            # bias (Cout,1) broadcasts along lanes; mask (1,P) along sublanes
            h = jnp.maximum(acc + b_ref[...], 0.0) * mw_ref[...]
        # 1x1 pred head: (1, C) @ (C, P) -> lane-dense (1, P) row
        row = jnp.dot(predw_ref[...], h, preferred_element_type=jnp.float32)
        o_ref[0] = (row + predb_ref[0, 0]).astype(o_ref.dtype)

    return kernel


# ------------------------------- wrapper --------------------------------------

def tan_predictor_forward(x_nchw, params, mask_weights, first_padding, *,
                          fold_batch=False):
    """Non-causal TANPredictor.forward. x_nchw: (B, input_size, nclip, nclip).

    fold_batch=False : grid=(B,) "parallel" (v7x: one batch per TensorCore).
    fold_batch=True  : batch folded into the lane axis, single grid step
                       (best on single-TC v5e / v6e).
    """
    B, cin, nclip, _ = x_nchw.shape
    k = int(params['convs'][0][0].shape[-1])
    assert k % 2 == 1, "kernel assumes odd conv kernel size (as in TAN)"
    n_layers = len(params['convs'])
    c = (k - 1) // 2
    S = nclip + 2 * first_padding                 # fixed spatial grid side
    P = S * S
    P_pad = ((P + 127) // 128) * 128              # lane-pad flat spatial axis

    # input -> (B, Cin, P_pad) flat, zero padded (spatial halo + lane tail)
    x = x_nchw.astype(jnp.float32)
    x = jnp.pad(x, ((0, 0), (0, 0), (first_padding,) * 2, (first_padding,) * 2))
    x = jnp.pad(x.reshape(B, cin, P), ((0, 0), (0, 0), (0, P_pad - P)))

    # embed each layer's mask weight into the S x S grid -> lane-dense (1, P_pad)
    mw_rows = []
    for i, mw in enumerate(mask_weights):
        side = int(mw.shape[0])
        off = (i + 1) * c
        assert side == S - (i + 1) * (k - 1), (side, S, i, k)
        full = jnp.zeros((S, S), jnp.float32)
        full = full.at[off:off + side, off:off + side].set(mw.astype(jnp.float32))
        mw_rows.append(jnp.pad(full.reshape(1, P), ((0, 0), (0, P_pad - P))))

    if fold_batch:
        # batch folded into lanes: (1, Cin, B*P_pad); interior positions never
        # read across batch segments (cross-segment wraps are masked to zero).
        x = jnp.transpose(x, (1, 0, 2)).reshape(1, cin, B * P_pad)
        mw_rows = [jnp.tile(r, (1, B)) for r in mw_rows]
        n_steps, p_lanes = 1, B * P_pad
    else:
        n_steps, p_lanes = B, P_pad

    args = [x]
    in_specs = [pl.BlockSpec((1, cin, p_lanes), lambda b: (b, 0, 0))]
    for (w_oihw, bias), mw_row in zip(params['convs'], mw_rows):
        cout, cin_i = int(w_oihw.shape[0]), int(w_oihw.shape[1])
        # OIHW -> (k*k, Cout, Cin): tap-major so the kernel indexes w_ref[tap]
        w_taps = jnp.transpose(w_oihw, (2, 3, 0, 1)).reshape(k * k, cout, cin_i)
        args += [w_taps, bias.reshape(cout, 1), mw_row]
        in_specs += [
            pl.BlockSpec((k * k, cout, cin_i), lambda b: (0, 0, 0)),
            pl.BlockSpec((cout, 1), lambda b: (0, 0)),
            pl.BlockSpec((1, p_lanes), lambda b: (0, 0)),
        ]
    hidden = int(params['pred_w'].shape[1])
    args += [params['pred_w'].reshape(1, hidden), params['pred_b'].reshape(1, 1)]
    in_specs += [pl.BlockSpec((1, hidden), lambda b: (0, 0)),
                 pl.BlockSpec(memory_space=pltpu.MemorySpace.SMEM)]

    out = pl.pallas_call(
        _make_fused_tan_kernel(k, S, n_layers),
        out_shape=jax.ShapeDtypeStruct((n_steps, 1, p_lanes), jnp.float32),
        grid=(n_steps,),
        in_specs=in_specs,
        out_specs=pl.BlockSpec((1, 1, p_lanes), lambda b: (b, 0, 0)),
        compiler_params=pltpu.CompilerParams(dimension_semantics=("parallel",)),
    )(*args)

    # lane-dense (n_steps, 1, p_lanes) -> (B, S, S) grid; valid output = interior
    grid_out = out.reshape(B, P_pad)[:, :P].reshape(B, S, S)
    off = n_layers * c                            # == first_padding for odd k
    return grid_out[:, off:off + nclip, off:off + nclip]


# -------------------- module glue (init-time, plain JAX) ----------------------

def mask2weight(mask2d, k, padding=0):
    """torch.conv2d(mask, ones(k,k), padding) then reciprocal where > 0."""
    m = mask2d.astype(jnp.float32)[None, None]
    kern = jnp.ones((1, 1, k, k), jnp.float32)
    w = lax.conv_general_dilated(
        m, kern, (1, 1), [(padding, padding), (padding, padding)],
        dimension_numbers=('NCHW', 'OIHW', 'NCHW'))[0, 0]
    return jnp.where(w > 0, 1.0 / jnp.where(w > 0, w, 1.0), w)


def init_params(key, input_size, hidden_size, k, num_stack_layers):
    convs = []
    cin = input_size
    for _ in range(num_stack_layers):
        key, k1, k2 = jax.random.split(key, 3)
        fan_in = cin * k * k
        w = jax.random.normal(k1, (hidden_size, cin, k, k), jnp.float32) / jnp.sqrt(fan_in)
        b = jax.random.normal(k2, (hidden_size,), jnp.float32) * 0.01
        convs.append((w, b))
        cin = hidden_size
    key, k1, k2 = jax.random.split(key, 3)
    pred_w = jax.random.normal(k1, (1, hidden_size, 1, 1), jnp.float32) / jnp.sqrt(hidden_size)
    pred_b = jax.random.normal(k2, (1,), jnp.float32) * 0.01
    return {'convs': convs, 'pred_w': pred_w, 'pred_b': pred_b}


# ----------------------------- pure-JAX reference -----------------------------

def reference_forward(x_nchw, params, mask_weights, first_padding):
    x = x_nchw
    pads = [first_padding] + [0] * (len(params['convs']) - 1)
    for (w, b), mw, pad in zip(params['convs'], mask_weights, pads):
        x = lax.conv_general_dilated(
            x, w, (1, 1), [(pad, pad), (pad, pad)],
            dimension_numbers=('NCHW', 'OIHW', 'NCHW'),
            precision=lax.Precision.HIGHEST)
        x = jnp.maximum(x + b[None, :, None, None], 0.0) * mw[None, None]
    x = lax.conv_general_dilated(
        x, params['pred_w'], (1, 1), 'VALID',
        dimension_numbers=('NCHW', 'OIHW', 'NCHW'),
        precision=lax.Precision.HIGHEST)
    return x[:, 0] + params['pred_b'][0]


# ----------------------------------- main --------------------------------------

if __name__ == "__main__":
    B, input_size, hidden_size = 2, 32, 32
    k, num_stack_layers, nclip = 3, 2, 16
    first_padding = (k - 1) * num_stack_layers // 2       # = 2

    key = jax.random.PRNGKey(0)
    key, xk, pk = jax.random.split(key, 3)
    x = jax.random.normal(xk, (B, input_size, nclip, nclip), jnp.float32)

    # TAN-style valid-proposal mask: upper-triangular (start <= end)
    mask2d = jnp.triu(jnp.ones((nclip, nclip), jnp.float32)) > 0

    # per-layer mask weights (module __init__ precomputation)
    mask_weights = [mask2weight(mask2d, k, padding=first_padding)]
    for _ in range(num_stack_layers - 1):
        mask_weights.append(mask2weight(mask_weights[-1] > 0, k, padding=0))

    params = init_params(pk, input_size, hidden_size, k, num_stack_layers)

    fwd = jax.jit(lambda xin: tan_predictor_forward(
        xin, params, mask_weights, first_padding))
    out = jax.block_until_ready(fwd(x))

    ref = reference_forward(x, params, mask_weights, first_padding)
    assert out.shape == (B, nclip, nclip), out.shape
    assert jnp.allclose(out, ref, rtol=2e-2, atol=2e-2), \
        float(jnp.max(jnp.abs(out - ref)))
    print("KERNEL_OK")
</pallas_src>

<mosaic_0001>
module attributes {stable_mosaic.version = 11 : i64} {
  func.func @kernel(%arg0: i32, %arg1: memref<1x32x512xf32, #tpu.memory_space<vmem>>, %arg2: memref<9x32x32xf32, #tpu.memory_space<vmem>>, %arg3: memref<32x1xf32, #tpu.memory_space<vmem>>, %arg4: memref<1x512xf32, #tpu.memory_space<vmem>>, %arg5: memref<9x32x32xf32, #tpu.memory_space<vmem>>, %arg6: memref<32x1xf32, #tpu.memory_space<vmem>>, %arg7: memref<1x512xf32, #tpu.memory_space<vmem>>, %arg8: memref<1x32xf32, #tpu.memory_space<vmem>>, %arg9: memref<1x1xf32, #tpu.memory_space<smem>>, %arg10: memref<1x1x512xf32, #tpu.memory_space<vmem>>) attributes {dimension_semantics = [#tpu.dimension_semantics<parallel>], iteration_bounds = array<i64: 2>, scalar_prefetch = 0 : i64, scratch_operands = 0 : i64, tpu.core_type = #tpu.core_type<tc>, window_params = [{transform_indices = @transform_0, window_bounds = array<i64: 1, 32, 512>}, {pipeline_mode = #tpu.pipeline_mode<synchronous>, transform_indices = @transform_1, window_bounds = array<i64: 9, 32, 32>}, {pipeline_mode = #tpu.pipeline_mode<synchronous>, transform_indices = @transform_2, window_bounds = array<i64: 32, 1>}, {pipeline_mode = #tpu.pipeline_mode<synchronous>, transform_indices = @transform_3, window_bounds = array<i64: 1, 512>}, {pipeline_mode = #tpu.pipeline_mode<synchronous>, transform_indices = @transform_4, window_bounds = array<i64: 9, 32, 32>}, {pipeline_mode = #tpu.pipeline_mode<synchronous>, transform_indices = @transform_5, window_bounds = array<i64: 32, 1>}, {pipeline_mode = #tpu.pipeline_mode<synchronous>, transform_indices = @transform_6, window_bounds = array<i64: 1, 512>}, {pipeline_mode = #tpu.pipeline_mode<synchronous>, transform_indices = @transform_7, window_bounds = array<i64: 1, 32>}, {transform_indices = @transform_8, window_bounds = array<i64: 1, 1>}, {transform_indices = @transform_9, window_bounds = array<i64: 1, 1, 512>}]} {
    %c0 = arith.constant 0 : index
    %c0_0 = arith.constant 0 : index
    %c0_1 = arith.constant 0 : index
    %0 = vector.load %arg1[%c0, %c0_0, %c0_1] : memref<1x32x512xf32, #tpu.memory_space<vmem>>, vector<1x32x512xf32>
    %1 = vector.shape_cast %0 : vector<1x32x512xf32> to vector<32x512xf32>
    %c21_i32 = arith.constant 21 : i32
    %2 = tpu.dynamic_rotate %1 by %c21_i32 dim 1 : vector<32x512xf32>, i32 -> vector<32x512xf32>
    %c0_2 = arith.constant 0 : index
    %c0_3 = arith.constant 0 : index
    %c0_4 = arith.constant 0 : index
    %3 = vector.load %arg2[%c0_2, %c0_3, %c0_4] : memref<9x32x32xf32, #tpu.memory_space<vmem>>, vector<1x32x32xf32>
    %4 = vector.shape_cast %3 : vector<1x32x32xf32> to vector<32x32xf32>
    %cst = arith.constant dense<0.000000e+00> : vector<32x512xf32>
    %5 = tpu.matmul %4, %2, %cst {dimension_numbers = #tpu.dot_dimension_numbers<[1], [0], [0], [1], [0, 0, 1, 1], [], []>} : vector<32x32xf32>, vector<32x512xf32>, vector<32x512xf32> -> vector<32x512xf32>
    %c20_i32 = arith.constant 20 : i32
    %6 = tpu.dynamic_rotate %1 by %c20_i32 dim 1 : vector<32x512xf32>, i32 -> vector<32x512xf32>
    %c1 = arith.constant 1 : index
    %c0_5 = arith.constant 0 : index
    %c0_6 = arith.constant 0 : index
    %7 = vector.load %arg2[%c1, %c0_5, %c0_6] : memref<9x32x32xf32, #tpu.memory_space<vmem>>, vector<1x32x32xf32>
    %8 = vector.shape_cast %7 : vector<1x32x32xf32> to vector<32x32xf32>
    %cst_7 = arith.constant dense<0.000000e+00> : vector<32x512xf32>
    %9 = tpu.matmul %8, %6, %cst_7 {dimension_numbers = #tpu.dot_dimension_numbers<[1], [0], [0], [1], [0, 0, 1, 1], [], []>} : vector<32x32xf32>, vector<32x512xf32>, vector<32x512xf32> -> vector<32x512xf32>
    %10 = arith.addf %5, %9 : vector<32x512xf32>
    %c19_i32 = arith.constant 19 : i32
    %11 = tpu.dynamic_rotate %1 by %c19_i32 dim 1 : vector<32x512xf32>, i32 -> vector<32x512xf32>
    %c2 = arith.constant 2 : index
    %c0_8 = arith.constant 0 : index
    %c0_9 = arith.constant 0 : index
    %12 = vector.load %arg2[%c2, %c0_8, %c0_9] : memref<9x32x32xf32, #tpu.memory_space<vmem>>, vector<1x32x32xf32>
    %13 = vector.shape_cast %12 : vector<1x32x32xf32> to vector<32x32xf32>
    %cst_10 = arith.constant dense<0.000000e+00> : vector<32x512xf32>
    %14 = tpu.matmul %13, %11, %cst_10 {dimension_numbers = #tpu.dot_dimension_numbers<[1], [0], [0], [1], [0, 0, 1, 1], [], []>} : vector<32x32xf32>, vector<32x512xf32>, vector<32x512xf32> -> vector<32x512xf32>
    %15 = arith.addf %10, %14 : vector<32x512xf32>
    %c1_i32 = arith.constant 1 : i32
    %16 = tpu.dynamic_rotate %1 by %c1_i32 dim 1 : vector<32x512xf32>, i32 -> vector<32x512xf32>
    %c3 = arith.constant 3 : index
    %c0_11 = arith.constant 0 : index
    %c0_12 = arith.constant 0 : index
    %17 = vector.load %arg2[%c3, %c0_11, %c0_12] : memref<9x32x32xf32, #tpu.memory_space<vmem>>, vector<1x32x32xf32>
    %18 = vector.shape_cast %17 : vector<1x32x32xf32> to vector<32x32xf32>
    %cst_13 = arith.constant dense<0.000000e+00> : vector<32x512xf32>
    %19 = tpu.matmul %18, %16, %cst_13 {dimension_numbers = #tpu.dot_dimension_numbers<[1], [0], [0], [1], [0, 0, 1, 1], [], []>} : vector<32x32xf32>, vector<32x512xf32>, vector<32x512xf32> -> vector<32x512xf32>
    %20 = arith.addf %15, %19 : vector<32x512xf32>
    %c4 = arith.constant 4 : index
    %c0_14 = arith.constant 0 : index
    %c0_15 = arith.constant 0 : index
    %21 = vector.load %arg2[%c4, %c0_14, %c0_15] : memref<9x32x32xf32, #tpu.memory_space<vmem>>, vector<1x32x32xf32>
    %22 = vector.shape_cast %21 : vector<1x32x32xf32> to vector<32x32xf32>
    %cst_16 = arith.constant dense<0.000000e+00> : vector<32x512xf32>
    %23 = tpu.matmul %22, %1, %cst_16 {dimension_numbers = #tpu.dot_dimension_numbers<[1], [0], [0], [1], [0, 0, 1, 1], [], []>} : vector<32x32xf32>, vector<32x512xf32>, vector<32x512xf32> -> vector<32x512xf32>
    %24 = arith.addf %20, %23 : vector<32x512xf32>
    %c511_i32 = arith.constant 511 : i32
    %25 = tpu.dynamic_rotate %1 by %c511_i32 dim 1 : vector<32x512xf32>, i32 -> vector<32x512xf32>
    %c5 = arith.constant 5 : index
    %c0_17 = arith.constant 0 : index
    %c0_18 = arith.constant 0 : index
    %26 = vector.load %arg2[%c5, %c0_17, %c0_18] : memref<9x32x32xf32, #tpu.memory_space<vmem>>, vector<1x32x32xf32>
    %27 = vector.shape_cast %26 : vector<1x32x32xf32> to vector<32x32xf32>
    %cst_19 = arith.constant dense<0.000000e+00> : vector<32x512xf32>
    %28 = tpu.matmul %27, %25, %cst_19 {dimension_numbers = #tpu.dot_dimension_numbers<[1], [0], [0], [1], [0, 0, 1, 1], [], []>} : vector<32x32xf32>, vector<32x512xf32>, vector<32x512xf32> -> vector<32x512xf32>
    %29 = arith.addf %24, %28 : vector<32x512xf32>
    %c493_i32 = arith.constant 493 : i32
    %30 = tpu.dynamic_rotate %1 by %c493_i32 dim 1 : vector<32x512xf32>, i32 -> vector<32x512xf32>
    %c6 = arith.constant 6 : index
    %c0_20 = arith.constant 0 : index
    %c0_21 = arith.constant 0 : index
    %31 = vector.load %arg2[%c6, %c0_20, %c0_21] : memref<9x32x32xf32, #tpu.memory_space<vmem>>, vector<1x32x32xf32>
    %32 = vector.shape_cast %31 : vector<1x32x32xf32> to vector<32x32xf32>
    %cst_22 = arith.constant dense<0.000000e+00> : vector<32x512xf32>
    %33 = tpu.matmul %32, %30, %cst_22 {dimension_numbers = #tpu.dot_dimension_numbers<[1], [0], [0], [1], [0, 0, 1, 1], [], []>} : vector<32x32xf32>, vector<32x512xf32>, vector<32x512xf32> -> vector<32x512xf32>
    %34 = arith.addf %29, %33 : vector<32x512xf32>
    %c492_i32 = arith.constant 492 : i32
    %35 = tpu.dynamic_rotate %1 by %c492_i32 dim 1 : vector<32x512xf32>, i32 -> vector<32x512xf32>
    %c7 = arith.constant 7 : index
    %c0_23 = arith.constant 0 : index
    %c0_24 = arith.constant 0 : index
    %36 = vector.load %arg2[%c7, %c0_23, %c0_24] : memref<9x32x32xf32, #tpu.memory_space<vmem>>, vector<1x32x32xf32>
    %37 = vector.shape_cast %36 : vector<1x32x32xf32> to vector<32x32xf32>
    %cst_25 = arith.constant dense<0.000000e+00> : vector<32x512xf32>
    %38 = tpu.matmul %37, %35, %cst_25 {dimension_numbers = #tpu.dot_dimension_numbers<[1], [0], [0], [1], [0, 0, 1, 1], [], []>} : vector<32x32xf32>, vector<32x512xf32>, vector<32x512xf32> -> vector<32x512xf32>
    %39 = arith.addf %34, %38 : vector<32x512xf32>
    %c491_i32 = arith.constant 491 : i32
    %40 = tpu.dynamic_rotate %1 by %c491_i32 dim 1 : vector<32x512xf32>, i32 -> vector<32x512xf32>
    %c8 = arith.constant 8 : index
    %c0_26 = arith.constant 0 : index
    %c0_27 = arith.constant 0 : index
    %41 = vector.load %arg2[%c8, %c0_26, %c0_27] : memref<9x32x32xf32, #tpu.memory_space<vmem>>, vector<1x32x32xf32>
    %42 = vector.shape_cast %41 : vector<1x32x32xf32> to vector<32x32xf32>
    %cst_28 = arith.constant dense<0.000000e+00> : vector<32x512xf32>
    %43 = tpu.matmul %42, %40, %cst_28 {dimension_numbers = #tpu.dot_dimension_numbers<[1], [0], [0], [1], [0, 0, 1, 1], [], []>} : vector<32x32xf32>, vector<32x512xf32>, vector<32x512xf32> -> vector<32x512xf32>
    %44 = arith.addf %39, %43 : vector<32x512xf32>
    %c0_29 = arith.constant 0 : index
    %c0_30 = arith.constant 0 : index
    %45 = vector.load %arg3[%c0_29, %c0_30] : memref<32x1xf32, #tpu.memory_space<vmem>>, vector<32x1xf32>
    %46 = vector.broadcast %45 : vector<32x1xf32> to vector<32x512xf32>
    %47 = arith.addf %44, %46 : vector<32x512xf32>
    %cst_31 = arith.constant 0.000000e+00 : f32
    %48 = vector.broadcast %cst_31 : f32 to vector<32x512xf32>
    %49 = arith.maximumf %47, %48 : vector<32x512xf32>
    %c0_32 = arith.constant 0 : index
    %c0_33 = arith.constant 0 : index
    %50 = vector.load %arg4[%c0_32, %c0_33] : memref<1x512xf32, #tpu.memory_space<vmem>>, vector<1x512xf32>
    %51 = vector.broadcast %50 : vector<1x512xf32> to vector<32x512xf32>
    %52 = arith.mulf %49, %51 : vector<32x512xf32>
    %c21_i32_34 = arith.constant 21 : i32
    %53 = tpu.dynamic_rotate %52 by %c21_i32_34 dim 1 : vector<32x512xf32>, i32 -> vector<32x512xf32>
    %c0_35 = arith.constant 0 : index
    %c0_36 = arith.constant 0 : index
    %c0_37 = arith.constant 0 : index
    %54 = vector.load %arg5[%c0_35, %c0_36, %c0_37] : memref<9x32x32xf32, #tpu.memory_space<vmem>>, vector<1x32x32xf32>
    %55 = vector.shape_cast %54 : vector<1x32x32xf32> to vector<32x32xf32>
    %cst_38 = arith.constant dense<0.000000e+00> : vector<32x512xf32>
    %56 = tpu.matmul %55, %53, %cst_38 {dimension_numbers = #tpu.dot_dimension_numbers<[1], [0], [0], [1], [0, 0, 1, 1], [], []>} : vector<32x32xf32>, vector<32x512xf32>, vector<32x512xf32> -> vector<32x512xf32>
    %c20_i32_39 = arith.constant 20 : i32
    %57 = tpu.dynamic_rotate %52 by %c20_i32_39 dim 1 : vector<32x512xf32>, i32 -> vector<32x512xf32>
    %c1_40 = arith.constant 1 : index
    %c0_41 = arith.constant 0 : index
    %c0_42 = arith.constant 0 : index
    %58 = vector.load %arg5[%c1_40, %c0_41, %c0_42] : memref<9x32x32xf32, #tpu.memory_space<vmem>>, vector<1x32x32xf32>
    %59 = vector.shape_cast %58 : vector<1x32x32xf32> to vector<32x32xf32>
    %cst_43 = arith.constant dense<0.000000e+00> : vector<32x512xf32>
    %60 = tpu.matmul %59, %57, %cst_43 {dimension_numbers = #tpu.dot_dimension_numbers<[1], [0], [0], [1], [0, 0, 1, 1], [], []>} : vector<32x32xf32>, vector<32x512xf32>, vector<32x512xf32> -> vector<32x512xf32>
    %61 = arith.addf %56, %60 : vector<32x512xf32>
    %c19_i32_44 = arith.constant 19 : i32
    %62 = tpu.dynamic_rotate %52 by %c19_i32_44 dim 1 : vector<32x512xf32>, i32 -> vector<32x512xf32>
    %c2_45 = arith.constant 2 : index
    %c0_46 = arith.constant 0 : index
    %c0_47 = arith.constant 0 : index
    %63 = vector.load %arg5[%c2_45, %c0_46, %c0_47] : memref<9x32x32xf32, #tpu.memory_space<vmem>>, vector<1x32x32xf32>
    %64 = vector.shape_cast %63 : vector<1x32x32xf32> to vector<32x32xf32>
    %cst_48 = arith.constant dense<0.000000e+00> : vector<32x512xf32>
    %65 = tpu.matmul %64, %62, %cst_48 {dimension_numbers = #tpu.dot_dimension_numbers<[1], [0], [0], [1], [0, 0, 1, 1], [], []>} : vector<32x32xf32>, vector<32x512xf32>, vector<32x512xf32> -> vector<32x512xf32>
    %66 = arith.addf %61, %65 : vector<32x512xf32>
    %c1_i32_49 = arith.constant 1 : i32
    %67 = tpu.dynamic_rotate %52 by %c1_i32_49 dim 1 : vector<32x512xf32>, i32 -> vector<32x512xf32>
    %c3_50 = arith.constant 3 : index
    %c0_51 = arith.constant 0 : index
    %c0_52 = arith.constant 0 : index
    %68 = vector.load %arg5[%c3_50, %c0_51, %c0_52] : memref<9x32x32xf32, #tpu.memory_space<vmem>>, vector<1x32x32xf32>
    %69 = vector.shape_cast %68 : vector<1x32x32xf32> to vector<32x32xf32>
    %cst_53 = arith.constant dense<0.000000e+00> : vector<32x512xf32>
    %70 = tpu.matmul %69, %67, %cst_53 {dimension_numbers = #tpu.dot_dimension_numbers<[1], [0], [0], [1], [0, 0, 1, 1], [], []>} : vector<32x32xf32>, vector<32x512xf32>, vector<32x512xf32> -> vector<32x512xf32>
    %71 = arith.addf %66, %70 : vector<32x512xf32>
    %c4_54 = arith.constant 4 : index
    %c0_55 = arith.constant 0 : index
    %c0_56 = arith.constant 0 : index
    %72 = vector.load %arg5[%c4_54, %c0_55, %c0_56] : memref<9x32x32xf32, #tpu.memory_space<vmem>>, vector<1x32x32xf32>
    %73 = vector.shape_cast %72 : vector<1x32x32xf32> to vector<32x32xf32>
    %cst_57 = arith.constant dense<0.000000e+00> : vector<32x512xf32>
    %74 = tpu.matmul %73, %52, %cst_57 {dimension_numbers = #tpu.dot_dimension_numbers<[1], [0], [0], [1], [0, 0, 1, 1], [], []>} : vector<32x32xf32>, vector<32x512xf32>, vector<32x512xf32> -> vector<32x512xf32>
    %75 = arith.addf %71, %74 : vector<32x512xf32>
    %c511_i32_58 = arith.constant 511 : i32
    %76 = tpu.dynamic_rotate %52 by %c511_i32_58 dim 1 : vector<32x512xf32>, i32 -> vector<32x512xf32>
    %c5_59 = arith.constant 5 : index
    %c0_60 = arith.constant 0 : index
    %c0_61 = arith.constant 0 : index
    %77 = vector.load %arg5[%c5_59, %c0_60, %c0_61] : memref<9x32x32xf32, #tpu.memory_space<vmem>>, vector<1x32x32xf32>
    %78 = vector.shape_cast %77 : vector<1x32x32xf32> to vector<32x32xf32>
    %cst_62 = arith.constant dense<0.000000e+00> : vector<32x512xf32>
    %79 = tpu.matmul %78, %76, %cst_62 {dimension_numbers = #tpu.dot_dimension_numbers<[1], [0], [0], [1], [0, 0, 1, 1], [], []>} : vector<32x32xf32>, vector<32x512xf32>, vector<32x512xf32> -> vector<32x512xf32>
    %80 = arith.addf %75, %79 : vector<32x512xf32>
    %c493_i32_63 = arith.constant 493 : i32
    %81 = tpu.dynamic_rotate %52 by %c493_i32_63 dim 1 : vector<32x512xf32>, i32 -> vector<32x512xf32>
    %c6_64 = arith.constant 6 : index
    %c0_65 = arith.constant 0 : index
    %c0_66 = arith.constant 0 : index
    %82 = vector.load %arg5[%c6_64, %c0_65, %c0_66] : memref<9x32x32xf32, #tpu.memory_space<vmem>>, vector<1x32x32xf32>
    %83 = vector.shape_cast %82 : vector<1x32x32xf32> to vector<32x32xf32>
    %cst_67 = arith.constant dense<0.000000e+00> : vector<32x512xf32>
    %84 = tpu.matmul %83, %81, %cst_67 {dimension_numbers = #tpu.dot_dimension_numbers<[1], [0], [0], [1], [0, 0, 1, 1], [], []>} : vector<32x32xf32>, vector<32x512xf32>, vector<32x512xf32> -> vector<32x512xf32>
    %85 = arith.addf %80, %84 : vector<32x512xf32>
    %c492_i32_68 = arith.constant 492 : i32
    %86 = tpu.dynamic_rotate %52 by %c492_i32_68 dim 1 : vector<32x512xf32>, i32 -> vector<32x512xf32>
    %c7_69 = arith.constant 7 : index
    %c0_70 = arith.constant 0 : index
    %c0_71 = arith.constant 0 : index
    %87 = vector.load %arg5[%c7_69, %c0_70, %c0_71] : memref<9x32x32xf32, #tpu.memory_space<vmem>>, vector<1x32x32xf32>
    %88 = vector.shape_cast %87 : vector<1x32x32xf32> to vector<32x32xf32>
    %cst_72 = arith.constant dense<0.000000e+00> : vector<32x512xf32>
    %89 = tpu.matmul %88, %86, %cst_72 {dimension_numbers = #tpu.dot_dimension_numbers<[1], [0], [0], [1], [0, 0, 1, 1], [], []>} : vector<32x32xf32>, vector<32x512xf32>, vector<32x512xf32> -> vector<32x512xf32>
    %90 = arith.addf %85, %89 : vector<32x512xf32>
    %c491_i32_73 = arith.constant 491 : i32
    %91 = tpu.dynamic_rotate %52 by %c491_i32_73 dim 1 : vector<32x512xf32>, i32 -> vector<32x512xf32>
    %c8_74 = arith.constant 8 : index
    %c0_75 = arith.constant 0 : index
    %c0_76 = arith.constant 0 : index
    %92 = vector.load %arg5[%c8_74, %c0_75, %c0_76] : memref<9x32x32xf32, #tpu.memory_space<vmem>>, vector<1x32x32xf32>
    %93 = vector.shape_cast %92 : vector<1x32x32xf32> to vector<32x32xf32>
    %cst_77 = arith.constant dense<0.000000e+00> : vector<32x512xf32>
    %94 = tpu.matmul %93, %91, %cst_77 {dimension_numbers = #tpu.dot_dimension_numbers<[1], [0], [0], [1], [0, 0, 1, 1], [], []>} : vector<32x32xf32>, vector<32x512xf32>, vector<32x512xf32> -> vector<32x512xf32>
    %95 = arith.addf %90, %94 : vector<32x512xf32>
    %c0_78 = arith.constant 0 : index
    %c0_79 = arith.constant 0 : index
    %96 = vector.load %arg6[%c0_78, %c0_79] : memref<32x1xf32, #tpu.memory_space<vmem>>, vector<32x1xf32>
    %97 = vector.broadcast %96 : vector<32x1xf32> to vector<32x512xf32>
    %98 = arith.addf %95, %97 : vector<32x512xf32>
    %cst_80 = arith.constant 0.000000e+00 : f32
    %99 = vector.broadcast %cst_80 : f32 to vector<32x512xf32>
    %100 = arith.maximumf %98, %99 : vector<32x512xf32>
    %c0_81 = arith.constant 0 : index
    %c0_82 = arith.constant 0 : index
    %101 = vector.load %arg7[%c0_81, %c0_82] : memref<1x512xf32, #tpu.memory_space<vmem>>, vector<1x512xf32>
    %102 = vector.broadcast %101 : vector<1x512xf32> to vector<32x512xf32>
    %103 = arith.mulf %100, %102 : vector<32x512xf32>
    %c0_83 = arith.constant 0 : index
    %c0_84 = arith.constant 0 : index
    %104 = vector.load %arg8[%c0_83, %c0_84] : memref<1x32xf32, #tpu.memory_space<vmem>>, vector<1x32xf32>
    %cst_85 = arith.constant dense<0.000000e+00> : vector<1x512xf32>
    %105 = tpu.matmul %104, %103, %cst_85 {dimension_numbers = #tpu.dot_dimension_numbers<[1], [0], [0], [1], [0, 0, 1, 1], [], []>} : vector<1x32xf32>, vector<32x512xf32>, vector<1x512xf32> -> vector<1x512xf32>
    %c0_86 = arith.constant 0 : index
    %c0_87 = arith.constant 0 : index
    %106 = memref.load %arg9[%c0_86, %c0_87] : memref<1x1xf32, #tpu.memory_space<smem>>
    %107 = vector.broadcast %106 : f32 to vector<1x512xf32>
    %108 = arith.addf %105, %107 : vector<1x512xf32>
    %c0_88 = arith.constant 0 : index
    %c0_89 = arith.constant 0 : index
    %c0_90 = arith.constant 0 : index
    %109 = vector.load %arg10[%c0_88, %c0_89, %c0_90] : memref<1x1x512xf32, #tpu.memory_space<vmem>>, vector<1x1x512xf32>
    %110 = vector.shape_cast %109 : vector<1x1x512xf32> to vector<1x512xf32>
    %111 = vector.shape_cast %108 : vector<1x512xf32> to vector<1x1x512xf32>
    tpu.vector_store %arg10[%c0_88, %c0_89, %c0_90], %111 {strides = array<i32>} : memref<1x1x512xf32, #tpu.memory_space<vmem>>, vector<1x1x512xf32>,
    return
  }
  func.func @transform_0(%arg0: i32) -> (i32, i32, i32) {
    %c0_i32 = arith.constant 0 : i32
    %c0_i32_0 = arith.constant 0 : i32
    %c0_i32_1 = arith.constant 0 : i32
    return %arg0, %c0_i32, %c0_i32_0 : i32, i32, i32
  }
  func.func @transform_1(%arg0: i32) -> (i32, i32, i32) {
    %c0_i32 = arith.constant 0 : i32
    %c0_i32_0 = arith.constant 0 : i32
    %c0_i32_1 = arith.constant 0 : i32
    %c0_i32_2 = arith.constant 0 : i32
    return %c0_i32, %c0_i32_0, %c0_i32_1 : i32, i32, i32
  }
  func.func @transform_2(%arg0: i32) -> (i32, i32) {
    %c0_i32 = arith.constant 0 : i32
    %c0_i32_0 = arith.constant 0 : i32
    %c0_i32_1 = arith.constant 0 : i32
    return %c0_i32, %c0_i32_0 : i32, i32
  }
  func.func @transform_3(%arg0: i32) -> (i32, i32) {
    %c0_i32 = arith.constant 0 : i32
    %c0_i32_0 = arith.constant 0 : i32
    %c0_i32_1 = arith.constant 0 : i32
    return %c0_i32, %c0_i32_0 : i32, i32
  }
  func.func @transform_4(%arg0: i32) -> (i32, i32, i32) {
    %c0_i32 = arith.constant 0 : i32
    %c0_i32_0 = arith.constant 0 : i32
    %c0_i32_1 = arith.constant 0 : i32
    %c0_i32_2 = arith.constant 0 : i32
    return %c0_i32, %c0_i32_0, %c0_i32_1 : i32, i32, i32
  }
  func.func @transform_5(%arg0: i32) -> (i32, i32) {
    %c0_i32 = arith.constant 0 : i32
    %c0_i32_0 = arith.constant 0 : i32
    %c0_i32_1 = arith.constant 0 : i32
    return %c0_i32, %c0_i32_0 : i32, i32
  }
  func.func @transform_6(%arg0: i32) -> (i32, i32) {
    %c0_i32 = arith.constant 0 : i32
    %c0_i32_0 = arith.constant 0 : i32
    %c0_i32_1 = arith.constant 0 : i32
    return %c0_i32, %c0_i32_0 : i32, i32
  }
  func.func @transform_7(%arg0: i32) -> (i32, i32) {
    %c0_i32 = arith.constant 0 : i32
    %c0_i32_0 = arith.constant 0 : i32
    %c0_i32_1 = arith.constant 0 : i32
    return %c0_i32, %c0_i32_0 : i32, i32
  }
  func.func @transform_8(%arg0: i32) -> (i32, i32) {
    %c0_i32 = arith.constant 0 : i32
    %c0_i32_0 = arith.constant 0 : i32
    %c0_i32_1 = arith.constant 0 : i32
    return %c0_i32, %c0_i32_0 : i32, i32
  }
  func.func @transform_9(%arg0: i32) -> (i32, i32, i32) {
    %c0_i32 = arith.constant 0 : i32
    %c0_i32_0 = arith.constant 0 : i32
    %c0_i32_1 = arith.constant 0 : i32
    return %arg0, %c0_i32, %c0_i32_0 : i32, i32, i32
  }
}

</mosaic_0001>

<llo_original>
// kernel: _lambda_.1
$region0: #{_lambda_.1}
  #allocation0 [shape = 'u32[]', space=smem, size = 0x4, offset = 0x4, fixed_abs, tag = 'smem constant byte address 0x4 - core index']
  #allocation1 [shape = 'u32[144,128]{1,0:T(1,128)}', space=vmem, size = 0x12000, scoped, tag = 'internal scratch']
  #allocation2 [shape = 'f32[1,1]{1,0:T(1,128)S(6)}', space=smem, size = 0x200, scoped, tag = 'scoped memory for _lambda_.1']
  %s0 = inlined_call_operand.vmem [shape: f32[2,32,512], index: 0, kind: input, shape index: {}]
  %s1 = inlined_call_operand.vmem [shape: f32[9,32,32], index: 1, kind: input, shape index: {}]
  %s2 = inlined_call_operand.vmem [shape: f32[32,1], index: 2, kind: input, shape index: {}]
  %s3 = inlined_call_operand.vmem [shape: f32[1,512], index: 3, kind: input, shape index: {}]
  %s4 = inlined_call_operand.vmem [shape: f32[9,32,32], index: 4, kind: input, shape index: {}]
  %s5 = inlined_call_operand.vmem [shape: f32[32,1], index: 5, kind: input, shape index: {}]
  %s6 = inlined_call_operand.vmem [shape: f32[1,512], index: 6, kind: input, shape index: {}]
  %s7 = inlined_call_operand.vmem [shape: f32[1,32], index: 7, kind: input, shape index: {}]
  %s8 = inlined_call_operand.<no memory space> [shape: f32[1,1], index: 8, kind: input, shape index: {}]
  %s9 = inlined_call_operand.vmem [shape: f32[2,1,512], index: 9, kind: output, shape index: {}]
  %s10 = sld [smem:[#allocation0]]
  $region69: #{_lambda_.1} parent=0
    _
  %s12 = ssub.s32 1, %s10
  %s13 = scalar_select 0, %s12, %s10
  %14 = sst [smem:[#allocation2]] %s8
  loop: start=0, step=1, limit=4
  $region2: #{_lambda_.1} parent=0 // loop_pre_header
    _
  $region3: #{_lambda_.1} parent=0 // loop_header
    %s16 = sphi 0, %s20
    %p17 = scmp.ge.s32.totalorder %s16, 4
    %s26 = sphi 0, %s28
    %s29 = sphi 0, %s26
    %s30 = sphi 0, %s29
    %s46 = sphi 0, %s30
    %s50 = sphi 0, %s50
    %s52 = sphi 0, %s50
    %s53 = sphi 0, %s52
    %s67 = sphi 0, %s53
    %s71 = sphi 0, %s71
    %s73 = sphi 0, %s71
    %s74 = sphi 0, %s73
    %s88 = sphi 0, %s74
    %s92 = sphi 0, %s92
    %s94 = sphi 0, %s92
    %s95 = sphi 0, %s94
    %s109 = sphi 0, %s95
    %s113 = sphi 0, %s113
    %s115 = sphi 0, %s113
    %s116 = sphi 0, %s115
    %s130 = sphi 0, %s116
    %s134 = sphi 0, %s134
    %s136 = sphi 0, %s134
    %s137 = sphi 0, %s136
    %s151 = sphi 0, %s137
    %s155 = sphi 0, %s155
    %s157 = sphi 0, %s155
    %s158 = sphi 0, %s157
    %s172 = sphi 0, %s158
    %s176 = sphi 0, %s176
    %s178 = sphi 0, %s176
    %s179 = sphi 0, %s178
    %s193 = sphi 0, %s179
    %s197 = sphi 0, %s197
    %s199 = sphi 0, %s197
    %s200 = sphi 0, %s199
    %s214 = sphi 0, %s200
    %s220 = sphi 0, %s222
    %s223 = sphi 0, %s220
    %s224 = sphi 0, %s223
    %s240 = sphi 0, %s224
  $region4: #{_lambda_.1} parent=0 // loop_header_branch
    %19 = sbr.rel (%p17) target = $region8
  $region5: #{_lambda_.1} parent=0 // loop_body
    %s21 = ssub.s32 %s16, 1
    %s22 = ssub.s32 %s16, 2
    %s23 = sadd.s32 %s16, 1
    %s24 = ssub.s32 %s16, %s23
    %p25 = scmp.eq.s32.totalorder %s24, 0
    %s27 = sadd.s32 %s26, 1
    %s28 = scalar_select %p25, %s26, %s27
    %p31 = pneg %p25
    %p32 = scmp.eq.s32.totalorder %s16, 1
    %p33 = por %p31, %p32
    %p34 = scmp.ne.s32.totalorder %s26, %s29
    %p35 = scmp.eq.s32.totalorder %s16, 0
    %p36 = por %p34, %p35
    %p37 = scmp.ne.s32.totalorder %s26, %s29
    %p38 = scmp.eq.s32.totalorder %s21, 1
    %p39 = por %p37, %p38
    %p40 = scmp.ne.s32.totalorder %s29, %s30
    %p41 = scmp.eq.s32.totalorder %s21, 0
    %p42 = por %p40, %p41
    %p43 = scmp.ne.s32.totalorder %s29, %s30
    %p44 = scmp.eq.s32.totalorder %s22, 1
    %p45 = por %p43, %p44
    %p47 = scmp.ne.s32.totalorder %s30, %s46
    %p48 = scmp.eq.s32.totalorder %s22, 0
    %p49 = por %p47, %p48
    %s51 = sadd.s32 %s50, 1
    %p54 = scmp.eq.s32.totalorder %s16, 1
    %p55 = scmp.ne.s32.totalorder %s50, %s52
    %p56 = scmp.eq.s32.totalorder %s16, 0
    %p57 = por %p55, %p56
    %p58 = scmp.ne.s32.totalorder %s50, %s52
    %p59 = scmp.eq.s32.totalorder %s21, 1
    %p60 = por %p58, %p59
    %p61 = scmp.ne.s32.totalorder %s52, %s53
    %p62 = scmp.eq.s32.totalorder %s21, 0
    %p63 = por %p61, %p62
    %p64 = scmp.ne.s32.totalorder %s52, %s53
    %p65 = scmp.eq.s32.totalorder %s22, 1
    %p66 = por %p64, %p65
    %p68 = scmp.ne.s32.totalorder %s53, %s67
    %p69 = scmp.eq.s32.totalorder %s22, 0
    %p70 = por %p68, %p69
    %s72 = sadd.s32 %s71, 1
    %p75 = scmp.eq.s32.totalorder %s16, 1
    %p76 = scmp.ne.s32.totalorder %s71, %s73
    %p77 = scmp.eq.s32.totalorder %s16, 0
    %p78 = por %p76, %p77
    %p79 = scmp.ne.s32.totalorder %s71, %s73
    %p80 = scmp.eq.s32.totalorder %s21, 1
    %p81 = por %p79, %p80
    %p82 = scmp.ne.s32.totalorder %s73, %s74
    %p83 = scmp.eq.s32.totalorder %s21, 0
    %p84 = por %p82, %p83
    %p85 = scmp.ne.s32.totalorder %s73, %s74
    %p86 = scmp.eq.s32.totalorder %s22, 1
    %p87 = por %p85, %p86
    %p89 = scmp.ne.s32.totalorder %s74, %s88
    %p90 = scmp.eq.s32.totalorder %s22, 0
    %p91 = por %p89, %p90
    %s93 = sadd.s32 %s92, 1
    %p96 = scmp.eq.s32.totalorder %s16, 1
    %p97 = scmp.ne.s32.totalorder %s92, %s94
    %p98 = scmp.eq.s32.totalorder %s16, 0
    %p99 = por %p97, %p98
    %p100 = scmp.ne.s32.totalorder %s92, %s94
    %p101 = scmp.eq.s32.totalorder %s21, 1
    %p102 = por %p100, %p101
    %p103 = scmp.ne.s32.totalorder %s94, %s95
    %p104 = scmp.eq.s32.totalorder %s21, 0
    %p105 = por %p103, %p104
    %p106 = scmp.ne.s32.totalorder %s94, %s95
    %p107 = scmp.eq.s32.totalorder %s22, 1
    %p108 = por %p106, %p107
    %p110 = scmp.ne.s32.totalorder %s95, %s109
    %p111 = scmp.eq.s32.totalorder %s22, 0
    %p112 = por %p110, %p111
    %s114 = sadd.s32 %s113, 1
    %p117 = scmp.eq.s32.totalorder %s16, 1
    %p118 = scmp.ne.s32.totalorder %s113, %s115
    %p119 = scmp.eq.s32.totalorder %s16, 0
    %p120 = por %p118, %p119
    %p121 = scmp.ne.s32.totalorder %s113, %s115
    %p122 = scmp.eq.s32.totalorder %s21, 1
    %p123 = por %p121, %p122
    %p124 = scmp.ne.s32.totalorder %s115, %s116
    %p125 = scmp.eq.s32.totalorder %s21, 0
    %p126 = por %p124, %p125
    %p127 = scmp.ne.s32.totalorder %s115, %s116
    %p128 = scmp.eq.s32.totalorder %s22, 1
    %p129 = por %p127, %p128
    %p131 = scmp.ne.s32.totalorder %s116, %s130
    %p132 = scmp.eq.s32.totalorder %s22, 0
    %p133 = por %p131, %p132
    %s135 = sadd.s32 %s134, 1
    %p138 = scmp.eq.s32.totalorder %s16, 1
    %p139 = scmp.ne.s32.totalorder %s134, %s136
    %p140 = scmp.eq.s32.totalorder %s16, 0
    %p141 = por %p139, %p140
    %p142 = scmp.ne.s32.totalorder %s134, %s136
    %p143 = scmp.eq.s32.totalorder %s21, 1
    %p144 = por %p142, %p143
    %p145 = scmp.ne.s32.totalorder %s136, %s137
    %p146 = scmp.eq.s32.totalorder %s21, 0
    %p147 = por %p145, %p146
    %p148 = scmp.ne.s32.totalorder %s136, %s137
    %p149 = scmp.eq.s32.totalorder %s22, 1
    %p150 = por %p148, %p149
    %p152 = scmp.ne.s32.totalorder %s137, %s151
    %p153 = scmp.eq.s32.totalorder %s22, 0
    %p154 = por %p152, %p153
    %s156 = sadd.s32 %s155, 1
    %p159 = scmp.eq.s32.totalorder %s16, 1
    %p160 = scmp.ne.s32.totalorder %s155, %s157
    %p161 = scmp.eq.s32.totalorder %s16, 0
    %p162 = por %p160, %p161
    %p163 = scmp.ne.s32.totalorder %s155, %s157
    %p164 = scmp.eq.s32.totalorder %s21, 1
    %p165 = por %p163, %p164
    %p166 = scmp.ne.s32.totalorder %s157, %s158
    %p167 = scmp.eq.s32.totalorder %s21, 0
    %p168 = por %p166, %p167
    %p169 = scmp.ne.s32.totalorder %s157, %s158
    %p170 = scmp.eq.s32.totalorder %s22, 1
    %p171 = por %p169, %p170
    %p173 = scmp.ne.s32.totalorder %s158, %s172
    %p174 = scmp.eq.s32.totalorder %s22, 0
    %p175 = por %p173, %p174
    %s177 = sadd.s32 %s176, 1
    %p180 = scmp.eq.s32.totalorder %s16, 1
    %p181 = scmp.ne.s32.totalorder %s176, %s178
    %p182 = scmp.eq.s32.totalorder %s16, 0
    %p183 = por %p181, %p182
    %p184 = scmp.ne.s32.totalorder %s176, %s178
    %p185 = scmp.eq.s32.totalorder %s21, 1
    %p186 = por %p184, %p185
    %p187 = scmp.ne.s32.totalorder %s178, %s179
    %p188 = scmp.eq.s32.totalorder %s21, 0
    %p189 = por %p187, %p188
    %p190 = scmp.ne.s32.totalorder %s178, %s179
    %p191 = scmp.eq.s32.totalorder %s22, 1
    %p192 = por %p190, %p191
    %p194 = scmp.ne.s32.totalorder %s179, %s193
    %p195 = scmp.eq.s32.totalorder %s22, 0
    %p196 = por %p194, %p195
    %s198 = sadd.s32 %s197, 1
    %p201 = scmp.eq.s32.totalorder %s16, 1
    %p202 = scmp.ne.s32.totalorder %s197, %s199
    %p203 = scmp.eq.s32.totalorder %s16, 0
    %p204 = por %p202, %p203
    %p205 = scmp.ne.s32.totalorder %s197, %s199
    %p206 = scmp.eq.s32.totalorder %s21, 1
    %p207 = por %p205, %p206
    %p208 = scmp.ne.s32.totalorder %s199, %s200
    %p209 = scmp.eq.s32.totalorder %s21, 0
    %p210 = por %p208, %p209
    %p211 = scmp.ne.s32.totalorder %s199, %s200
    %p212 = scmp.eq.s32.totalorder %s22, 1
    %p213 = por %p211, %p212
    %p215 = scmp.ne.s32.totalorder %s200, %s214
    %p216 = scmp.eq.s32.totalorder %s22, 0
    %p217 = por %p215, %p216
    %s218 = ssub.s32 %s16, %s23
    %p219 = scmp.eq.s32.totalorder %s218, 0
    %s221 = sadd.s32 %s220, 1
    %s222 = scalar_select %p219, %s220, %s221
    %p225 = pneg %p219
    %p226 = scmp.eq.s32.totalorder %s16, 1
    %p227 = por %p225, %p226
    %p228 = scmp.ne.s32.totalorder %s220, %s223
    %p229 = scmp.eq.s32.totalorder %s16, 0
    %p230 = por %p228, %p229
    %p231 = scmp.ne.s32.totalorder %s220, %s223
    %p232 = scmp.eq.s32.totalorder %s21, 1
    %p233 = por %p231, %p232
    %p234 = scmp.ne.s32.totalorder %s223, %s224
    %p235 = scmp.eq.s32.totalorder %s21, 0
    %p236 = por %p234, %p235
    %p237 = scmp.ne.s32.totalorder %s223, %s224
    %p238 = scmp.eq.s32.totalorder %s22, 1
    %p239 = por %p237, %p238
    %p241 = scmp.ne.s32.totalorder %s224, %s240
    %p242 = scmp.eq.s32.totalorder %s22, 0
    %p243 = por %p241, %p242
    %p244 = scmp.le.s32.totalorder 1, %s16
    %p245 = scmp.lt.s32.totalorder %s16, 3
    %p246 = pnand %p244, %p245
    %p247 = pneg %p246
    // Predicated region
    $region9: #{_lambda_.1} parent=5 // pred_check
      _
    $region10: #{_lambda_.1} parent=5 // pred_check_branch
      %249 = sbr.rel (%p246) target = $region12
    $region11: #{_lambda_.1} parent=5 // pred_region
      %s250 = ssub.s32 %s16, 1
      // Predicated region
      $region13: #{_lambda_.1} parent=11 // pred_check
        %p251 = pneg %p63
      $region14: #{_lambda_.1} parent=11 // pred_check_branch
        %253 = sbr.rel (%p251) target = $region16
      $region15: #{_lambda_.1} parent=11 // pred_region
        _
      $region16: #{_lambda_.1} parent=11 // pred_fallthru
        _
      // Predicated region
      $region17: #{_lambda_.1} parent=11 // pred_check
        %p254 = pneg %p84
      $region18: #{_lambda_.1} parent=11 // pred_check_branch
        %256 = sbr.rel (%p254) target = $region20
      $region19: #{_lambda_.1} parent=11 // pred_region
        _
      $region20: #{_lambda_.1} parent=11 // pred_fallthru
        _
      // Predicated region
      $region21: #{_lambda_.1} parent=11 // pred_check
        %p257 = pneg %p105
      $region22: #{_lambda_.1} parent=11 // pred_check_branch
        %259 = sbr.rel (%p257) target = $region24
      $region23: #{_lambda_.1} parent=11 // pred_region
        _
      $region24: #{_lambda_.1} parent=11 // pred_fallthru
        _
      // Predicated region
      $region25: #{_lambda_.1} parent=11 // pred_check
        %p260 = pneg %p126
      $region26: #{_lambda_.1} parent=11 // pred_check_branch
        %262 = sbr.rel (%p260) target = $region28
      $region27: #{_lambda_.1} parent=11 // pred_region
        _
      $region28: #{_lambda_.1} parent=11 // pred_fallthru
        _
      // Predicated region
      $region29: #{_lambda_.1} parent=11 // pred_check
        %p263 = pneg %p147
      $region30: #{_lambda_.1} parent=11 // pred_check_branch
        %265 = sbr.rel (%p263) target = $region32
      $region31: #{_lambda_.1} parent=11 // pred_region
        _
      $region32: #{_lambda_.1} parent=11 // pred_fallthru
        _
      // Predicated region
      $region33: #{_lambda_.1} parent=11 // pred_check
        %p266 = pneg %p168
      $region34: #{_lambda_.1} parent=11 // pred_check_branch
        %268 = sbr.rel (%p266) target = $region36
      $region35: #{_lambda_.1} parent=11 // pred_region
        _
      $region36: #{_lambda_.1} parent=11 // pred_fallthru
        _
      // Predicated region
      $region37: #{_lambda_.1} parent=11 // pred_check
        %p269 = pneg %p189
      $region38: #{_lambda_.1} parent=11 // pred_check_branch
        %271 = sbr.rel (%p269) target = $region40
      $region39: #{_lambda_.1} parent=11 // pred_region
        _
      $region40: #{_lambda_.1} parent=11 // pred_fallthru
        _
      // Predicated region
      $region41: #{_lambda_.1} parent=11 // pred_check
        %p272 = pneg %p210
      $region42: #{_lambda_.1} parent=11 // pred_check_branch
        %274 = sbr.rel (%p272) target = $region44
      $region43: #{_lambda_.1} parent=11 // pred_region
        _
      $region44: #{_lambda_.1} parent=11 // pred_fallthru
        _
    $region12: #{_lambda_.1} parent=5 // pred_fallthru
      _
    %p275 = scmp.lt.s32.totalorder %s16, 2
    // Predicated region
    $region45: #{_lambda_.1} parent=5 // pred_check
      %p276 = pneg %p275
    $region46: #{_lambda_.1} parent=5 // pred_check_branch
      %278 = sbr.rel (%p276) target = $region48
    $region47: #{_lambda_.1} parent=5 // pred_region
      // Predicated region
      $region49: #{_lambda_.1} parent=47 // pred_check
        %p279 = pneg %p36
      $region50: #{_lambda_.1} parent=47 // pred_check_branch
        %281 = sbr.rel (%p279) target = $region52
      $region51: #{_lambda_.1} parent=47 // pred_region
        %p282 = scmp.lt.s32.totalorder %s16, 1
        %s283 = scalar_select %p282, %s16, 1
        %s284 = smul.addr %s283, 16
        %s285 = smul.addr %s284, 8
        %s286 = scalar_lea.vmem %s0, %s285
      $region52: #{_lambda_.1} parent=47 // pred_fallthru
        _
    $region48: #{_lambda_.1} parent=5 // pred_fallthru
      _
    %p287 = scmp.le.s32.totalorder 1, %s16
    %p288 = scmp.lt.s32.totalorder %s16, 3
    %p289 = pnand %p287, %p288
    %p290 = pneg %p289
    // Predicated region
    $region53: #{_lambda_.1} parent=5 // pred_check
      _
    $region54: #{_lambda_.1} parent=5 // pred_check_branch
      %292 = sbr.rel (%p289) target = $region56
    $region55: #{_lambda_.1} parent=5 // pred_region
      %s293 = ssub.s32 %s16, 1
      %p294 = scmp.lt.s32.totalorder %s21, 1
      %s295 = scalar_select %p294, %s21, 1
      %s296 = smul.addr %s295, 16
      %s297 = smul.addr %s296, 8
      %s298 = scalar_lea.vmem %s0, %s297
      %p299 = pneg %p42
      %p300 = pneg %p39
      %p301 = pneg %p63
      %p302 = pneg %p60
      %p303 = pneg %p84
      %p304 = pneg %p81
      %p305 = pneg %p105
      %p306 = pneg %p102
      %p307 = pneg %p126
      %p308 = pneg %p123
      %p309 = pneg %p147
      %p310 = pneg %p144
      %p311 = pneg %p168
      %p312 = pneg %p165
      %p313 = pneg %p189
      %p314 = pneg %p186
      %p315 = pneg %p210
      %p316 = pneg %p207
      %p317 = pneg %p236
      %p318 = pneg %p233
      %p319 = scmp.lt.s32.totalorder %s21, 1
      %s320 = scalar_select %p319, %s21, 1
      %s321 = smul.addr %s320, 4
      %s322 = scalar_lea.vmem %s9, %s321
      %p323 = scmp.lt.s32.totalorder %s21, 1
      %s324 = scalar_select %p323, %s21, 1
      %s325 = smul.addr %s324, 16
      %s326 = smul.addr %s325, 8
      %s327 = scalar_lea.vmem %s0, %s326
      %p328 = scmp.lt.s32.totalorder %s21, 1
      %s329 = scalar_select %p328, %s21, 1
      %s330 = smul.addr %s329, 4
      %s331 = scalar_lea.vmem %s9, %s330
      %v332 = vld [vmem:[%s327] sm:$0xff]
      %v333 = vld [vmem:[%s327 + $0x8] sm:$0xff]
      %v334 = vld [vmem:[%s327 + $0x10] sm:$0xff]
      %v335 = vld [vmem:[%s327 + $0x18] sm:$0xff]
      %v336 = vld [vmem:[%s327 + $0x20] sm:$0xff]
      %v337 = vld [vmem:[%s327 + $0x28] sm:$0xff]
      %v338 = vld [vmem:[%s327 + $0x30] sm:$0xff]
      %v339 = vld [vmem:[%s327 + $0x38] sm:$0xff]
      %v340 = vld [vmem:[%s327 + $0x40] sm:$0xff]
      %v341 = vld [vmem:[%s327 + $0x48] sm:$0xff]
      %v342 = vld [vmem:[%s327 + $0x50] sm:$0xff]
      %v343 = vld [vmem:[%s327 + $0x58] sm:$0xff]
      %v344 = vld [vmem:[%s327 + $0x60] sm:$0xff]
      %v345 = vld [vmem:[%s327 + $0x68] sm:$0xff]
      %v346 = vld [vmem:[%s327 + $0x70] sm:$0xff]
      %v347 = vld [vmem:[%s327 + $0x78] sm:$0xff]
      %348 = vrot.lane.b32.xlu0 %v332, 21
      %v349 = vpop.permute.xlu0 %348
      %350 = vrot.lane.b32.xlu0 %v336, 21
      %v351 = vpop.permute.xlu0 %350
      %352 = vrot.lane.b32.xlu0 %v340, 21
      %v353 = vpop.permute.xlu0 %352
      %354 = vrot.lane.b32.xlu0 %v344, 21
      %v355 = vpop.permute.xlu0 %354
      %356 = vrot.lane.b32.xlu0 %v333, 21
      %v357 = vpop.permute.xlu0 %356
      %358 = vrot.lane.b32.xlu0 %v337, 21
      %v359 = vpop.permute.xlu0 %358
      %360 = vrot.lane.b32.xlu0 %v341, 21
      %v361 = vpop.permute.xlu0 %360
      %362 = vrot.lane.b32.xlu0 %v345, 21
      %v363 = vpop.permute.xlu0 %362
      %364 = vrot.lane.b32.xlu0 %v334, 21
      %v365 = vpop.permute.xlu0 %364
      %366 = vrot.lane.b32.xlu0 %v338, 21
      %v367 = vpop.permute.xlu0 %366
      %368 = vrot.lane.b32.xlu0 %v342, 21
      %v369 = vpop.permute.xlu0 %368
      %370 = vrot.lane.b32.xlu0 %v346, 21
      %v371 = vpop.permute.xlu0 %370
      %372 = vrot.lane.b32.xlu0 %v335, 21
      %v373 = vpop.permute.xlu0 %372
      %374 = vrot.lane.b32.xlu0 %v339, 21
      %v375 = vpop.permute.xlu0 %374
      %376 = vrot.lane.b32.xlu0 %v343, 21
      %v377 = vpop.permute.xlu0 %376
      %378 = vrot.lane.b32.xlu0 %v347, 21
      %v379 = vpop.permute.xlu0 %378
      %v380 = vlaneseq
      %v381 = vand.u32 %v380, 127
      %vm382 = vcmp.lt.s32.totalorder %v381, 21
      %v383 = vsel %vm382, %v365, %v373
      %v384 = vsel %vm382, %v367, %v375
      %v385 = vsel %vm382, %v369, %v377
      %v386 = vsel %vm382, %v371, %v379
      %v387 = vsel %vm382, %v357, %v365
      %v388 = vsel %vm382, %v359, %v367
      %v389 = vsel %vm382, %v361, %v369
      %v390 = vsel %vm382, %v363, %v371
      %v391 = vsel %vm382, %v349, %v357
      %v392 = vsel %vm382, %v351, %v359
      %v393 = vsel %vm382, %v353, %v361
      %v394 = vsel %vm382, %v355, %v363
      %v395 = vsel %vm382, %v373, %v349
      %v396 = vsel %vm382, %v375, %v351
      %v397 = vsel %vm382, %v377, %v353
      %v398 = vsel %vm382, %v379, %v355
      %v399 = vld [vmem:[%s1] sm:$0xff]
      %v400 = vld [vmem:[%s1 + $0x8] sm:$0xff]
      %v401 = vld [vmem:[%s1 + $0x10] sm:$0xff]
      %v402 = vld [vmem:[%s1 + $0x18] sm:$0xff]
      %403 = vrot.lane.b32.xlu0 %v332, 20
      %v404 = vpop.permute.xlu0 %403
      %405 = vrot.lane.b32.xlu0 %v336, 20
      %v406 = vpop.permute.xlu0 %405
      %407 = vrot.lane.b32.xlu0 %v340, 20
      %v408 = vpop.permute.xlu0 %407
      %409 = vrot.lane.b32.xlu0 %v344, 20
      %v410 = vpop.permute.xlu0 %409
      %411 = vrot.lane.b32.xlu0 %v333, 20
      %v412 = vpop.permute.xlu0 %411
      %413 = vrot.lane.b32.xlu0 %v337, 20
      %v414 = vpop.permute.xlu0 %413
      %415 = vrot.lane.b32.xlu0 %v341, 20
      %v416 = vpop.permute.xlu0 %415
      %417 = vrot.lane.b32.xlu0 %v345, 20
      %v418 = vpop.permute.xlu0 %417
      %419 = vrot.lane.b32.xlu0 %v334, 20
      %v420 = vpop.permute.xlu0 %419
      %421 = vrot.lane.b32.xlu0 %v338, 20
      %v422 = vpop.permute.xlu0 %421
      %423 = vrot.lane.b32.xlu0 %v342, 20
      %v424 = vpop.permute.xlu0 %423
      %425 = vrot.lane.b32.xlu0 %v346, 20
      %v426 = vpop.permute.xlu0 %425
      %427 = vrot.lane.b32.xlu0 %v335, 20
      %v428 = vpop.permute.xlu0 %427
      %429 = vrot.lane.b32.xlu0 %v339, 20
      %v430 = vpop.permute.xlu0 %429
      %431 = vrot.lane.b32.xlu0 %v343, 20
      %v432 = vpop.permute.xlu0 %431
      %433 = vrot.lane.b32.xlu0 %v347, 20
      %v434 = vpop.permute.xlu0 %433
      %vm435 = vcmp.lt.s32.totalorder %v381, 20
      %v436 = vsel %vm435, %v420, %v428
      %v437 = vsel %vm435, %v422, %v430
      %v438 = vsel %vm435, %v424, %v432
      %v439 = vsel %vm435, %v426, %v434
      %v440 = vsel %vm435, %v412, %v420
      %v441 = vsel %vm435, %v414, %v422
      %v442 = vsel %vm435, %v416, %v424
      %v443 = vsel %vm435, %v418, %v426
      %v444 = vsel %vm435, %v404, %v412
      %v445 = vsel %vm435, %v406, %v414
      %v446 = vsel %vm435, %v408, %v416
      %v447 = vsel %vm435, %v410, %v418
      %v448 = vsel %vm435, %v428, %v404
      %v449 = vsel %vm435, %v430, %v406
      %v450 = vsel %vm435, %v432, %v408
      %v451 = vsel %vm435, %v434, %v410
      %s452 = scalar_lea.vmem %s1, 32
      %v453 = vld [vmem:[%s452] sm:$0xff]
      %v454 = vld [vmem:[%s452 + $0x8] sm:$0xff]
      %v455 = vld [vmem:[%s452 + $0x10] sm:$0xff]
      %v456 = vld [vmem:[%s452 + $0x18] sm:$0xff]
      %vm457 = vcmask 261120
      %v459 = vsel %vm457, %v453, 0
      %v462 = vsel %vm457, %v454, 0
      %v465 = vsel %vm457, %v455, 0
      %v468 = vsel %vm457, %v456, 0
      %470 = vmatprep.subr.mxu0 %v444
      %471 = vmatpush1.msra.mxu0 %v448
      %472 = vmatprep.subr.mxu0 %v445
      %473 = vmatpush1.msra.mxu0 %v449
      %474 = vmatprep.subr.mxu0 %v446
      %475 = vmatpush1.msra.mxu0 %v450
      %476 = vmatprep.subr.mxu0 %v447
      %477 = vmatpush1.msra.mxu0 %v451
      %478 = vmatprep.subr.mxu0 0.0
      %479 = vmatpush1.msra.mxu0 0.0
      %480 = vmatprep.subr.mxu0 0.0
      %481 = vmatpush1.msra.mxu0 0.0
      %482 = vmatprep.subr.mxu0 0.0
      %483 = vmatpush1.msra.mxu0 0.0
      %484 = vmatprep.subr.mxu0 0.0
      %485 = vmatpush1.msra.mxu0 0.0
      %486 = vmatprep.subr.mxu0 0.0
      %487 = vmatpush1.msra.mxu0 0.0
      %488 = vmatprep.subr.mxu0 0.0
      %489 = vmatpush1.msra.mxu0 0.0
      %490 = vmatprep.subr.mxu0 0.0
      %491 = vmatpush1.msra.mxu0 0.0
      %492 = vmatprep.subr.mxu0 0.0
      %493 = vmatpush1.msra.mxu0 0.0
      %494 = vmatprep.subr.mxu0 0.0
      %495 = vmatpush1.msra.mxu0 0.0
      %496 = vmatprep.subr.mxu0 0.0
      %497 = vmatpush1.msra.mxu0 0.0
      %498 = vmatprep.subr.mxu0 0.0
      %499 = vmatpush1.msra.mxu0 0.0
      %500 = vmatprep.subr.mxu0 0.0
      %501 = vmatpush1.msra.mxu0 0.0
      %502 = vmatprep.subr.mxu0 0.0
      %503 = vmatpush1.msra.mxu0 0.0
      %504 = vmatprep.subr.mxu0 0.0
      %505 = vmatpush1.msra.mxu0 0.0
      %506 = vmatprep.subr.mxu0 0.0
      %507 = vmatpush1.msra.mxu0 0.0
      %508 = vmatprep.subr.mxu0 0.0
      %509 = vmatpush1.msra.mxu0 0.0
      %510 = vmatprep.subr.mxu0 0.0
      %511 = vmatpush1.msra.mxu0 0.0
      %512 = vmatprep.subr.mxu0 0.0
      %513 = vmatpush1.msra.mxu0 0.0
      %514 = vmatprep.subr.mxu0 0.0
      %515 = vmatpush1.msra.mxu0 0.0
      %516 = vmatprep.subr.mxu0 0.0
      %517 = vmatpush1.msra.mxu0 0.0
      %518 = vmatprep.subr.mxu0 0.0
      %519 = vmatpush1.msra.mxu0 0.0
      %520 = vmatprep.subr.mxu0 0.0
      %521 = vmatpush1.msra.mxu0 0.0
      %522 = vmatprep.subr.mxu0 0.0
      %523 = vmatpush1.msra.mxu0 0.0
      %524 = vmatprep.subr.mxu0 0.0
      %525 = vmatpush1.msra.mxu0 0.0
      %526 = vmatprep.subr.mxu0 0.0
      %527 = vmatpush1.msra.mxu0 0.0
      %528 = vmatprep.subr.mxu0 0.0
      %529 = vmatpush1.msra.mxu0 0.0
      %530 = vmatprep.subr.mxu0 0.0
      %531 = vmatpush1.msra.mxu0 0.0
      %532 = vmatprep.subr.mxu0 0.0
      %533 = vmatpush1.msra.mxu0 0.0
      %534 = vmatprep.mubr.f32.mxu0 0.0
      %535 = vmatmul.mubr.f32.gmra.mrb[0].mxu0 %v459
      %v536 = vpop.f32.mrb[0].mxu0
      %v537 = vadd.f32 0.0, %v536
      %v538 = vpop.f32.mrb[0].mxu0
      %v539 = vadd.f32 0.0, %v538
      %540 = vmatprep.mubr.f32.mxu0 0.0
      %541 = vmatmul.mubr.f32.gmra.mrb[0].mxu0 %v462
      %v542 = vpop.f32.mrb[0].mxu0
      %v543 = vadd.f32 0.0, %v542
      %v544 = vpop.f32.mrb[0].mxu0
      %v545 = vadd.f32 0.0, %v544
      %546 = vmatprep.mubr.f32.mxu0 0.0
      %547 = vmatmul.mubr.f32.gmra.mrb[0].mxu0 %v465
      %v548 = vpop.f32.mrb[0].mxu0
      %v549 = vadd.f32 0.0, %v548
      %v550 = vpop.f32.mrb[0].mxu0
      %v551 = vadd.f32 0.0, %v550
      %552 = vmatprep.mubr.f32.mxu0 0.0
      %553 = vmatmul.mubr.f32.gmra.mrb[0].mxu0 %v468
      %v554 = vpop.f32.mrb[0].mxu0
      %v555 = vadd.f32 0.0, %v554
      %v556 = vpop.f32.mrb[0].mxu0
      %v557 = vadd.f32 0.0, %v556
      %558 = vdwg.mxu0
      %559 = vmatprep.subr.mxu0 %v436
      %560 = vmatpush1.msra.mxu0 %v440
      %561 = vmatprep.subr.mxu0 %v437
      %562 = vmatpush1.msra.mxu0 %v441
      %563 = vmatprep.subr.mxu0 %v438
      %564 = vmatpush1.msra.mxu0 %v442
      %565 = vmatprep.subr.mxu0 %v439
      %566 = vmatpush1.msra.mxu0 %v443
      %567 = vmatprep.subr.mxu0 0.0
      %568 = vmatpush1.msra.mxu0 0.0
      %569 = vmatprep.subr.mxu0 0.0
      %570 = vmatpush1.msra.mxu0 0.0
      %571 = vmatprep.subr.mxu0 0.0
      %572 = vmatpush1.msra.mxu0 0.0
      %573 = vmatprep.subr.mxu0 0.0
      %574 = vmatpush1.msra.mxu0 0.0
      %575 = vmatprep.subr.mxu0 0.0
      %576 = vmatpush1.msra.mxu0 0.0
      %577 = vmatprep.subr.mxu0 0.0
      %578 = vmatpush1.msra.mxu0 0.0
      %579 = vmatprep.subr.mxu0 0.0
      %580 = vmatpush1.msra.mxu0 0.0
      %581 = vmatprep.subr.mxu0 0.0
      %582 = vmatpush1.msra.mxu0 0.0
      %583 = vmatprep.subr.mxu0 0.0
      %584 = vmatpush1.msra.mxu0 0.0
      %585 = vmatprep.subr.mxu0 0.0
      %586 = vmatpush1.msra.mxu0 0.0
      %587 = vmatprep.subr.mxu0 0.0
      %588 = vmatpush1.msra.mxu0 0.0
      %589 = vmatprep.subr.mxu0 0.0
      %590 = vmatpush1.msra.mxu0 0.0
      %591 = vmatprep.subr.mxu0 0.0
      %592 = vmatpush1.msra.mxu0 0.0
      %593 = vmatprep.subr.mxu0 0.0
      %594 = vmatpush1.msra.mxu0 0.0
      %595 = vmatprep.subr.mxu0 0.0
      %596 = vmatpush1.msra.mxu0 0.0
      %597 = vmatprep.subr.mxu0 0.0
      %598 = vmatpush1.msra.mxu0 0.0
      %599 = vmatprep.subr.mxu0 0.0
      %600 = vmatpush1.msra.mxu0 0.0
      %601 = vmatprep.subr.mxu0 0.0
      %602 = vmatpush1.msra.mxu0 0.0
      %603 = vmatprep.subr.mxu0 0.0
      %604 = vmatpush1.msra.mxu0 0.0
      %605 = vmatprep.subr.mxu0 0.0
      %606 = vmatpush1.msra.mxu0 0.0
      %607 = vmatprep.subr.mxu0 0.0
      %608 = vmatpush1.msra.mxu0 0.0
      %609 = vmatprep.subr.mxu0 0.0
      %610 = vmatpush1.msra.mxu0 0.0
      %611 = vmatprep.subr.mxu0 0.0
      %612 = vmatpush1.msra.mxu0 0.0
      %613 = vmatprep.subr.mxu0 0.0
      %614 = vmatpush1.msra.mxu0 0.0
      %615 = vmatprep.subr.mxu0 0.0
      %616 = vmatpush1.msra.mxu0 0.0
      %617 = vmatprep.subr.mxu0 0.0
      %618 = vmatpush1.msra.mxu0 0.0
      %619 = vmatprep.subr.mxu0 0.0
      %620 = vmatpush1.msra.mxu0 0.0
      %621 = vmatprep.subr.mxu0 0.0
      %622 = vmatpush1.msra.mxu0 0.0
      %623 = vmatprep.mubr.f32.mxu0 0.0
      %624 = vmatmul.mubr.f32.gmra.mrb[0].mxu0 %v459
      %v625 = vpop.f32.mrb[0].mxu0
      %v626 = vadd.f32 0.0, %v625
      %v627 = vpop.f32.mrb[0].mxu0
      %v628 = vadd.f32 0.0, %v627
      %629 = vmatprep.mubr.f32.mxu0 0.0
      %630 = vmatmul.mubr.f32.gmra.mrb[0].mxu0 %v462
      %v631 = vpop.f32.mrb[0].mxu0
      %v632 = vadd.f32 0.0, %v631
      %v633 = vpop.f32.mrb[0].mxu0
      %v634 = vadd.f32 0.0, %v633
      %635 = vmatprep.mubr.f32.mxu0 0.0
      %636 = vmatmul.mubr.f32.gmra.mrb[0].mxu0 %v465
      %v637 = vpop.f32.mrb[0].mxu0
      %v638 = vadd.f32 0.0, %v637
      %v639 = vpop.f32.mrb[0].mxu0
      %v640 = vadd.f32 0.0, %v639
      %641 = vmatprep.mubr.f32.mxu0 0.0
      %642 = vmatmul.mubr.f32.gmra.mrb[0].mxu0 %v468
      %v643 = vpop.f32.mrb[0].mxu0
      %v644 = vadd.f32 0.0, %v643
      %v645 = vpop.f32.mrb[0].mxu0
      %v646 = vadd.f32 0.0, %v645
      %647 = vdwg.mxu0
      %v649 = vsel %vm457, %v399, 0
      %v652 = vsel %vm457, %v400, 0
      %v655 = vsel %vm457, %v401, 0
      %v658 = vsel %vm457, %v402, 0
      %660 = vmatprep.subr.mxu0 %v391
      %661 = vmatpush1.msra.mxu0 %v395
      %662 = vmatprep.subr.mxu0 %v392
      %663 = vmatpush1.msra.mxu0 %v396
      %664 = vmatprep.subr.mxu0 %v393
      %665 = vmatpush1.msra.mxu0 %v397
      %666 = vmatprep.subr.mxu0 %v394
      %667 = vmatpush1.msra.mxu0 %v398
      %668 = vmatprep.subr.mxu0 0.0
      %669 = vmatpush1.msra.mxu0 0.0
      %670 = vmatprep.subr.mxu0 0.0
      %671 = vmatpush1.msra.mxu0 0.0
      %672 = vmatprep.subr.mxu0 0.0
      %673 = vmatpush1.msra.mxu0 0.0
      %674 = vmatprep.subr.mxu0 0.0
      %675 = vmatpush1.msra.mxu0 0.0
      %676 = vmatprep.subr.mxu0 0.0
      %677 = vmatpush1.msra.mxu0 0.0
      %678 = vmatprep.subr.mxu0 0.0
      %679 = vmatpush1.msra.mxu0 0.0
      %680 = vmatprep.subr.mxu0 0.0
      %681 = vmatpush1.msra.mxu0 0.0
      %682 = vmatprep.subr.mxu0 0.0
      %683 = vmatpush1.msra.mxu0 0.0
      %684 = vmatprep.subr.mxu0 0.0
      %685 = vmatpush1.msra.mxu0 0.0
      %686 = vmatprep.subr.mxu0 0.0
      %687 = vmatpush1.msra.mxu0 0.0
      %688 = vmatprep.subr.mxu0 0.0
      %689 = vmatpush1.msra.mxu0 0.0
      %690 = vmatprep.subr.mxu0 0.0
      %691 = vmatpush1.msra.mxu0 0.0
      %692 = vmatprep.subr.mxu0 0.0
      %693 = vmatpush1.msra.mxu0 0.0
      %694 = vmatprep.subr.mxu0 0.0
      %695 = vmatpush1.msra.mxu0 0.0
      %696 = vmatprep.subr.mxu0 0.0
      %697 = vmatpush1.msra.mxu0 0.0
      %698 = vmatprep.subr.mxu0 0.0
      %699 = vmatpush1.msra.mxu0 0.0
      %700 = vmatprep.subr.mxu0 0.0
      %701 = vmatpush1.msra.mxu0 0.0
      %702 = vmatprep.subr.mxu0 0.0
      %703 = vmatpush1.msra.mxu0 0.0
      %704 = vmatprep.subr.mxu0 0.0
      %705 = vmatpush1.msra.mxu0 0.0
      %706 = vmatprep.subr.mxu0 0.0
      %707 = vmatpush1.msra.mxu0 0.0
      %708 = vmatprep.subr.mxu0 0.0
      %709 = vmatpush1.msra.mxu0 0.0
      %710 = vmatprep.subr.mxu0 0.0
      %711 = vmatpush1.msra.mxu0 0.0
      %712 = vmatprep.subr.mxu0 0.0
      %713 = vmatpush1.msra.mxu0 0.0
      %714 = vmatprep.subr.mxu0 0.0
      %715 = vmatpush1.msra.mxu0 0.0
      %716 = vmatprep.subr.mxu0 0.0
      %717 = vmatpush1.msra.mxu0 0.0
      %718 = vmatprep.subr.mxu0 0.0
      %719 = vmatpush1.msra.mxu0 0.0
      %720 = vmatprep.subr.mxu0 0.0
      %721 = vmatpush1.msra.mxu0 0.0
      %722 = vmatprep.subr.mxu0 0.0
      %723 = vmatpush1.msra.mxu0 0.0
      %724 = vmatprep.mubr.f32.mxu0 0.0
      %725 = vmatmul.mubr.f32.gmra.mrb[0].mxu0 %v649
      %v726 = vpop.f32.mrb[0].mxu0
      %v727 = vadd.f32 %v537, %v726
      %v728 = vpop.f32.mrb[0].mxu0
      %v729 = vadd.f32 %v539, %v728
      %730 = vmatprep.mubr.f32.mxu0 0.0
      %731 = vmatmul.mubr.f32.gmra.mrb[0].mxu0 %v652
      %v732 = vpop.f32.mrb[0].mxu0
      %v733 = vadd.f32 %v543, %v732
      %v734 = vpop.f32.mrb[0].mxu0
      %v735 = vadd.f32 %v545, %v734
      %736 = vmatprep.mubr.f32.mxu0 0.0
      %737 = vmatmul.mubr.f32.gmra.mrb[0].mxu0 %v655
      %v738 = vpop.f32.mrb[0].mxu0
      %v739 = vadd.f32 %v549, %v738
      %v740 = vpop.f32.mrb[0].mxu0
      %v741 = vadd.f32 %v551, %v740
      %742 = vmatprep.mubr.f32.mxu0 0.0
      %743 = vmatmul.mubr.f32.gmra.mrb[0].mxu0 %v658
      %v744 = vpop.f32.mrb[0].mxu0
      %v745 = vadd.f32 %v555, %v744
      %v746 = vpop.f32.mrb[0].mxu0
      %v747 = vadd.f32 %v557, %v746
      %748 = vdwg.mxu0
      %749 = vmatprep.subr.mxu0 %v383
      %750 = vmatpush1.msra.mxu0 %v387
      %751 = vmatprep.subr.mxu0 %v384
      %752 = vmatpush1.msra.mxu0 %v388
      %753 = vmatprep.subr.mxu0 %v385
      %754 = vmatpush1.msra.mxu0 %v389
      %755 = vmatprep.subr.mxu0 %v386
      %756 = vmatpush1.msra.mxu0 %v390
      %757 = vmatprep.subr.mxu0 0.0
      %758 = vmatpush1.msra.mxu0 0.0
      %759 = vmatprep.subr.mxu0 0.0
      %760 = vmatpush1.msra.mxu0 0.0
      %761 = vmatprep.subr.mxu0 0.0
      %762 = vmatpush1.msra.mxu0 0.0
      %763 = vmatprep.subr.mxu0 0.0
      %764 = vmatpush1.msra.mxu0 0.0
      %765 = vmatprep.subr.mxu0 0.0
      %766 = vmatpush1.msra.mxu0 0.0
      %767 = vmatprep.subr.mxu0 0.0
      %768 = vmatpush1.msra.mxu0 0.0
      %769 = vmatprep.subr.mxu0 0.0
      %770 = vmatpush1.msra.mxu0 0.0
      %771 = vmatprep.subr.mxu0 0.0
      %772 = vmatpush1.msra.mxu0 0.0
      %773 = vmatprep.subr.mxu0 0.0
      %774 = vmatpush1.msra.mxu0 0.0
      %775 = vmatprep.subr.mxu0 0.0
      %776 = vmatpush1.msra.mxu0 0.0
      %777 = vmatprep.subr.mxu0 0.0
      %778 = vmatpush1.msra.mxu0 0.0
      %779 = vmatprep.subr.mxu0 0.0
      %780 = vmatpush1.msra.mxu0 0.0
      %781 = vmatprep.subr.mxu0 0.0
      %782 = vmatpush1.msra.mxu0 0.0
      %783 = vmatprep.subr.mxu0 0.0
      %784 = vmatpush1.msra.mxu0 0.0
      %785 = vmatprep.subr.mxu0 0.0
      %786 = vmatpush1.msra.mxu0 0.0
      %787 = vmatprep.subr.mxu0 0.0
      %788 = vmatpush1.msra.mxu0 0.0
      %789 = vmatprep.subr.mxu0 0.0
      %790 = vmatpush1.msra.mxu0 0.0
      %791 = vmatprep.subr.mxu0 0.0
      %792 = vmatpush1.msra.mxu0 0.0
      %793 = vmatprep.subr.mxu0 0.0
      %794 = vmatpush1.msra.mxu0 0.0
      %795 = vmatprep.subr.mxu0 0.0
      %796 = vmatpush1.msra.mxu0 0.0
      %797 = vmatprep.subr.mxu0 0.0
      %798 = vmatpush1.msra.mxu0 0.0
      %799 = vmatprep.subr.mxu0 0.0
      %800 = vmatpush1.msra.mxu0 0.0
      %801 = vmatprep.subr.mxu0 0.0
      %802 = vmatpush1.msra.mxu0 0.0
      %803 = vmatprep.subr.mxu0 0.0
      %804 = vmatpush1.msra.mxu0 0.0
      %805 = vmatprep.subr.mxu0 0.0
      %806 = vmatpush1.msra.mxu0 0.0
      %807 = vmatprep.subr.mxu0 0.0
      %808 = vmatpush1.msra.mxu0 0.0
      %809 = vmatprep.subr.mxu0 0.0
      %810 = vmatpush1.msra.mxu0 0.0
      %811 = vmatprep.subr.mxu0 0.0
      %812 = vmatpush1.msra.mxu0 0.0
      %813 = vmatprep.mubr.f32.mxu0 0.0
      %814 = vmatmul.mubr.f32.gmra.mrb[0].mxu0 %v649
      %v815 = vpop.f32.mrb[0].mxu0
      %v816 = vadd.f32 %v626, %v815
      %v817 = vpop.f32.mrb[0].mxu0
      %v818 = vadd.f32 %v628, %v817
      %819 = vmatprep.mubr.f32.mxu0 0.0
      %820 = vmatmul.mubr.f32.gmra.mrb[0].mxu0 %v652
      %v821 = vpop.f32.mrb[0].mxu0
      %v822 = vadd.f32 %v632, %v821
      %v823 = vpop.f32.mrb[0].mxu0
      %v824 = vadd.f32 %v634, %v823
      %825 = vmatprep.mubr.f32.mxu0 0.0
      %826 = vmatmul.mubr.f32.gmra.mrb[0].mxu0 %v655
      %v827 = vpop.f32.mrb[0].mxu0
      %v828 = vadd.f32 %v638, %v827
      %v829 = vpop.f32.mrb[0].mxu0
      %v830 = vadd.f32 %v640, %v829
      %831 = vmatprep.mubr.f32.mxu0 0.0
      %832 = vmatmul.mubr.f32.gmra.mrb[0].mxu0 %v658
      %v833 = vpop.f32.mrb[0].mxu0
      %v834 = vadd.f32 %v644, %v833
      %v835 = vpop.f32.mrb[0].mxu0
      %v836 = vadd.f32 %v646, %v835
      %837 = vdwg.mxu0
      %838 = vrot.lane.b32.xlu0 %v332, 19
      %v839 = vpop.permute.xlu0 %838
      %840 = vrot.lane.b32.xlu0 %v336, 19
      %v841 = vpop.permute.xlu0 %840
      %842 = vrot.lane.b32.xlu0 %v340, 19
      %v843 = vpop.permute.xlu0 %842
      %844 = vrot.lane.b32.xlu0 %v344, 19
      %v845 = vpop.permute.xlu0 %844
      %846 = vrot.lane.b32.xlu0 %v333, 19
      %v847 = vpop.permute.xlu0 %846
      %848 = vrot.lane.b32.xlu0 %v337, 19
      %v849 = vpop.permute.xlu0 %848
      %850 = vrot.lane.b32.xlu0 %v341, 19
      %v851 = vpop.permute.xlu0 %850
      %852 = vrot.lane.b32.xlu0 %v345, 19
      %v853 = vpop.permute.xlu0 %852
      %854 = vrot.lane.b32.xlu0 %v334, 19
      %v855 = vpop.permute.xlu0 %854
      %856 = vrot.lane.b32.xlu0 %v338, 19
      %v857 = vpop.permute.xlu0 %856
      %858 = vrot.lane.b32.xlu0 %v342, 19
      %v859 = vpop.permute.xlu0 %858
      %860 = vrot.lane.b32.xlu0 %v346, 19
      %v861 = vpop.permute.xlu0 %860
      %862 = vrot.lane.b32.xlu0 %v335, 19
      %v863 = vpop.permute.xlu0 %862
      %864 = vrot.lane.b32.xlu0 %v339, 19
      %v865 = vpop.permute.xlu0 %864
      %866 = vrot.lane.b32.xlu0 %v343, 19
      %v867 = vpop.permute.xlu0 %866
      %868 = vrot.lane.b32.xlu0 %v347, 19
      %v869 = vpop.permute.xlu0 %868
      %vm870 = vcmp.lt.s32.totalorder %v381, 19
      %v871 = vsel %vm870, %v855, %v863
      %v872 = vsel %vm870, %v857, %v865
      %v873 = vsel %vm870, %v859, %v867
      %v874 = vsel %vm870, %v861, %v869
      %v875 = vsel %vm870, %v847, %v855
      %v876 = vsel %vm870, %v849, %v857
      %v877 = vsel %vm870, %v851, %v859
      %v878 = vsel %vm870, %v853, %v861
      %v879 = vsel %vm870, %v839, %v847
      %v880 = vsel %vm870, %v841, %v849
      %v881 = vsel %vm870, %v843, %v851
      %v882 = vsel %vm870, %v845, %v853
      %v883 = vsel %vm870, %v863, %v839
      %v884 = vsel %vm870, %v865, %v841
      %v885 = vsel %vm870, %v867, %v843
      %v886 = vsel %vm870, %v869, %v845
      %s887 = scalar_lea.vmem %s1, 64
      %v888 = vld [vmem:[%s887] sm:$0xff]
      %v889 = vld [vmem:[%s887 + $0x8] sm:$0xff]
      %v890 = vld [vmem:[%s887 + $0x10] sm:$0xff]
      %v891 = vld [vmem:[%s887 + $0x18] sm:$0xff]
      %v893 = vsel %vm457, %v888, 0
      %v896 = vsel %vm457, %v889, 0
      %v899 = vsel %vm457, %v890, 0
      %v902 = vsel %vm457, %v891, 0
      %904 = vmatprep.subr.mxu0 %v879
      %905 = vmatpush1.msra.mxu0 %v883
      %906 = vmatprep.subr.mxu0 %v880
      %907 = vmatpush1.msra.mxu0 %v884
      %908 = vmatprep.subr.mxu0 %v881
      %909 = vmatpush1.msra.mxu0 %v885
      %910 = vmatprep.subr.mxu0 %v882
      %911 = vmatpush1.msra.mxu0 %v886
      %912 = vmatprep.subr.mxu0 0.0
      %913 = vmatpush1.msra.mxu0 0.0
      %914 = vmatprep.subr.mxu0 0.0
      %915 = vmatpush1.msra.mxu0 0.0
      %916 = vmatprep.subr.mxu0 0.0
      %917 = vmatpush1.msra.mxu0 0.0
      %918 = vmatprep.subr.mxu0 0.0
      %919 = vmatpush1.msra.mxu0 0.0
      %920 = vmatprep.subr.mxu0 0.0
      %921 = vmatpush1.msra.mxu0 0.0
      %922 = vmatprep.subr.mxu0 0.0
      %923 = vmatpush1.msra.mxu0 0.0
      %924 = vmatprep.subr.mxu0 0.0
      %925 = vmatpush1.msra.mxu0 0.0
      %926 = vmatprep.subr.mxu0 0.0
      %927 = vmatpush1.msra.mxu0 0.0
      %928 = vmatprep.subr.mxu0 0.0
      %929 = vmatpush1.msra.mxu0 0.0
      %930 = vmatprep.subr.mxu0 0.0
      %931 = vmatpush1.msra.mxu0 0.0
      %932 = vmatprep.subr.mxu0 0.0
      %933 = vmatpush1.msra.mxu0 0.0
      %934 = vmatprep.subr.mxu0 0.0
      %935 = vmatpush1.msra.mxu0 0.0
      %936 = vmatprep.subr.mxu0 0.0
      %937 = vmatpush1.msra.mxu0 0.0
      %938 = vmatprep.subr.mxu0 0.0
      %939 = vmatpush1.msra.mxu0 0.0
      %940 = vmatprep.subr.mxu0 0.0
      %941 = vmatpush1.msra.mxu0 0.0
      %942 = vmatprep.subr.mxu0 0.0
      %943 = vmatpush1.msra.mxu0 0.0
      %944 = vmatprep.subr.mxu0 0.0
      %945 = vmatpush1.msra.mxu0 0.0
      %946 = vmatprep.subr.mxu0 0.0
      %947 = vmatpush1.msra.mxu0 0.0
      %948 = vmatprep.subr.mxu0 0.0
      %949 = vmatpush1.msra.mxu0 0.0
      %950 = vmatprep.subr.mxu0 0.0
      %951 = vmatpush1.msra.mxu0 0.0
      %952 = vmatprep.subr.mxu0 0.0
      %953 = vmatpush1.msra.mxu0 0.0
      %954 = vmatprep.subr.mxu0 0.0
      %955 = vmatpush1.msra.mxu0 0.0
      %956 = vmatprep.subr.mxu0 0.0
      %957 = vmatpush1.msra.mxu0 0.0
      %958 = vmatprep.subr.mxu0 0.0
      %959 = vmatpush1.msra.mxu0 0.0
      %960 = vmatprep.subr.mxu0 0.0
      %961 = vmatpush1.msra.mxu0 0.0
      %962 = vmatprep.subr.mxu0 0.0
      %963 = vmatpush1.msra.mxu0 0.0
      %964 = vmatprep.subr.mxu0 0.0
      %965 = vmatpush1.msra.mxu0 0.0
      %966 = vmatprep.subr.mxu0 0.0
      %967 = vmatpush1.msra.mxu0 0.0
      %968 = vmatprep.mubr.f32.mxu0 0.0
      %969 = vmatmul.mubr.f32.gmra.mrb[0].mxu0 %v893
      %v970 = vpop.f32.mrb[0].mxu0
      %v971 = vadd.f32 0.0, %v970
      %v972 = vpop.f32.mrb[0].mxu0
      %v973 = vadd.f32 0.0, %v972
      %974 = vmatprep.mubr.f32.mxu0 0.0
      %975 = vmatmul.mubr.f32.gmra.mrb[0].mxu0 %v896
      %v976 = vpop.f32.mrb[0].mxu0
      %v977 = vadd.f32 0.0, %v976
      %v978 = vpop.f32.mrb[0].mxu0
      %v979 = vadd.f32 0.0, %v978
      %980 = vmatprep.mubr.f32.mxu0 0.0
      %981 = vmatmul.mubr.f32.gmra.mrb[0].mxu0 %v899
      %v982 = vpop.f32.mrb[0].mxu0
      %v983 = vadd.f32 0.0, %v982
      %v984 = vpop.f32.mrb[0].mxu0
      %v985 = vadd.f32 0.0, %v984
      %986 = vmatprep.mubr.f32.mxu0 0.0
      %987 = vmatmul.mubr.f32.gmra.mrb[0].mxu0 %v902
      %v988 = vpop.f32.mrb[0].mxu0
      %v989 = vadd.f32 0.0, %v988
      %v990 = vpop.f32.mrb[0].mxu0
      %v991 = vadd.f32 0.0, %v990
      %992 = vdwg.mxu0
      %993 = vmatprep.subr.mxu0 %v871
      %994 = vmatpush1.msra.mxu0 %v875
      %995 = vmatprep.subr.mxu0 %v872
      %996 = vmatpush1.msra.mxu0 %v876
      %997 = vmatprep.subr.mxu0 %v873
      %998 = vmatpush1.msra.mxu0 %v877
      %999 = vmatprep.subr.mxu0 %v874
      %1000 = vmatpush1.msra.mxu0 %v878
      %1001 = vmatprep.subr.mxu0 0.0
      %1002 = vmatpush1.msra.mxu0 0.0
      %1003 = vmatprep.subr.mxu0 0.0
      %1004 = vmatpush1.msra.mxu0 0.0
      %1005 = vmatprep.subr.mxu0 0.0
      %1006 = vmatpush1.msra.mxu0 0.0
      %1007 = vmatprep.subr.mxu0 0.0
      %1008 = vmatpush1.msra.mxu0 0.0
      %1009 = vmatprep.subr.mxu0 0.0
      %1010 = vmatpush1.msra.mxu0 0.0
      %1011 = vmatprep.subr.mxu0 0.0
      %1012 = vmatpush1.msra.mxu0 0.0
      %1013 = vmatprep.subr.mxu0 0.0
      %1014 = vmatpush1.msra.mxu0 0.0
      %1015 = vmatprep.subr.mxu0 0.0
      %1016 = vmatpush1.msra.mxu0 0.0
      %1017 = vmatprep.subr.mxu0 0.0
      %1018 = vmatpush1.msra.mxu0 0.0
      %1019 = vmatprep.subr.mxu0 0.0
      %1020 = vmatpush1.msra.mxu0 0.0
      %1021 = vmatprep.subr.mxu0 0.0
      %1022 = vmatpush1.msra.mxu0 0.0
      %1023 = vmatprep.subr.mxu0 0.0
      %1024 = vmatpush1.msra.mxu0 0.0
      %1025 = vmatprep.subr.mxu0 0.0
      %1026 = vmatpush1.msra.mxu0 0.0
      %1027 = vmatprep.subr.mxu0 0.0
      %1028 = vmatpush1.msra.mxu0 0.0
      %1029 = vmatprep.subr.mxu0 0.0
      %1030 = vmatpush1.msra.mxu0 0.0
      %1031 = vmatprep.subr.mxu0 0.0
      %1032 = vmatpush1.msra.mxu0 0.0
      %1033 = vmatprep.subr.mxu0 0.0
      %1034 = vmatpush1.msra.mxu0 0.0
      %1035 = vmatprep.subr.mxu0 0.0
      %1036 = vmatpush1.msra.mxu0 0.0
      %1037 = vmatprep.subr.mxu0 0.0
      %1038 = vmatpush1.msra.mxu0 0.0
      %1039 = vmatprep.subr.mxu0 0.0
      %1040 = vmatpush1.msra.mxu0 0.0
      %1041 = vmatprep.subr.mxu0 0.0
      %1042 = vmatpush1.msra.mxu0 0.0
      %1043 = vmatprep.subr.mxu0 0.0
      %1044 = vmatpush1.msra.mxu0 0.0
      %1045 = vmatprep.subr.mxu0 0.0
      %1046 = vmatpush1.msra.mxu0 0.0
      %1047 = vmatprep.subr.mxu0 0.0
      %1048 = vmatpush1.msra.mxu0 0.0
      %1049 = vmatprep.subr.mxu0 0.0
      %1050 = vmatpush1.msra.mxu0 0.0
      %1051 = vmatprep.subr.mxu0 0.0
      %1052 = vmatpush1.msra.mxu0 0.0
      %1053 = vmatprep.subr.mxu0 0.0
      %1054 = vmatpush1.msra.mxu0 0.0
      %1055 = vmatprep.subr.mxu0 0.0
      %1056 = vmatpush1.msra.mxu0 0.0
      %1057 = vmatprep.mubr.f32.mxu0 0.0
      %1058 = vmatmul.mubr.f32.gmra.mrb[0].mxu0 %v893
      %v1059 = vpop.f32.mrb[0].mxu0
      %v1060 = vadd.f32 0.0, %v1059
      %v1061 = vpop.f32.mrb[0].mxu0
      %v1062 = vadd.f32 0.0, %v1061
      %1063 = vmatprep.mubr.f32.mxu0 0.0
      %1064 = vmatmul.mubr.f32.gmra.mrb[0].mxu0 %v896
      %v1065 = vpop.f32.mrb[0].mxu0
      %v1066 = vadd.f32 0.0, %v1065
      %v1067 = vpop.f32.mrb[0].mxu0
      %v1068 = vadd.f32 0.0, %v1067
      %1069 = vmatprep.mubr.f32.mxu0 0.0
      %1070 = vmatmul.mubr.f32.gmra.mrb[0].mxu0 %v899
      %v1071 = vpop.f32.mrb[0].mxu0
      %v1072 = vadd.f32 0.0, %v1071
      %v1073 = vpop.f32.mrb[0].mxu0
      %v1074 = vadd.f32 0.0, %v1073
      %1075 = vmatprep.mubr.f32.mxu0 0.0
      %1076 = vmatmul.mubr.f32.gmra.mrb[0].mxu0 %v902
      %v1077 = vpop.f32.mrb[0].mxu0
      %v1078 = vadd.f32 0.0, %v1077
      %v1079 = vpop.f32.mrb[0].mxu0
      %v1080 = vadd.f32 0.0, %v1079
      %1081 = vdwg.mxu0
      %v1082 = vadd.f32 %v727, %v971
      %v1083 = vadd.f32 %v729, %v973
      %v1084 = vadd.f32 %v816, %v1060
      %v1085 = vadd.f32 %v818, %v1062
      %v1086 = vadd.f32 %v733, %v977
      %v1087 = vadd.f32 %v735, %v979
      %v1088 = vadd.f32 %v822, %v1066
      %v1089 = vadd.f32 %v824, %v1068
      %v1090 = vadd.f32 %v739, %v983
      %v1091 = vadd.f32 %v741, %v985
      %v1092 = vadd.f32 %v828, %v1072
      %v1093 = vadd.f32 %v830, %v1074
      %v1094 = vadd.f32 %v745, %v989
      %v1095 = vadd.f32 %v747, %v991
      %v1096 = vadd.f32 %v834, %v1078
      %v1097 = vadd.f32 %v836, %v1080
      %1098 = vrot.lane.b32.xlu0 %v332, 1
      %v1099 = vpop.permute.xlu0 %1098
      %1100 = vrot.lane.b32.xlu0 %v336, 1
      %v1101 = vpop.permute.xlu0 %1100
      %1102 = vrot.lane.b32.xlu0 %v340, 1
      %v1103 = vpop.permute.xlu0 %1102
      %1104 = vrot.lane.b32.xlu0 %v344, 1
      %v1105 = vpop.permute.xlu0 %1104
      %1106 = vrot.lane.b32.xlu0 %v333, 1
      %v1107 = vpop.permute.xlu0 %1106
      %1108 = vrot.lane.b32.xlu0 %v337, 1
      %v1109 = vpop.permute.xlu0 %1108
      %1110 = vrot.lane.b32.xlu0 %v341, 1
      %v1111 = vpop.permute.xlu0 %1110
      %1112 = vrot.lane.b32.xlu0 %v345, 1
      %v1113 = vpop.permute.xlu0 %1112
      %1114 = vrot.lane.b32.xlu0 %v334, 1
      %v1115 = vpop.permute.xlu0 %1114
      %1116 = vrot.lane.b32.xlu0 %v338, 1
      %v1117 = vpop.permute.xlu0 %1116
      %1118 = vrot.lane.b32.xlu0 %v342, 1
      %v1119 = vpop.permute.xlu0 %1118
      %1120 = vrot.lane.b32.xlu0 %v346, 1
      %v1121 = vpop.permute.xlu0 %1120
      %1122 = vrot.lane.b32.xlu0 %v335, 1
      %v1123 = vpop.permute.xlu0 %1122
      %1124 = vrot.lane.b32.xlu0 %v339, 1
      %v1125 = vpop.permute.xlu0 %1124
      %1126 = vrot.lane.b32.xlu0 %v343, 1
      %v1127 = vpop.permute.xlu0 %1126
      %1128 = vrot.lane.b32.xlu0 %v347, 1
      %v1129 = vpop.permute.xlu0 %1128
      %vm1130 = vcmp.lt.s32.totalorder %v381, 1
      %v1131 = vsel %vm1130, %v1115, %v1123
      %v1132 = vsel %vm1130, %v1117, %v1125
      %v1133 = vsel %vm1130, %v1119, %v1127
      %v1134 = vsel %vm1130, %v1121, %v1129
      %v1135 = vsel %vm1130, %v1107, %v1115
      %v1136 = vsel %vm1130, %v1109, %v1117
      %v1137 = vsel %vm1130, %v1111, %v1119
      %v1138 = vsel %vm1130, %v1113, %v1121
      %v1139 = vsel %vm1130, %v1099, %v1107
      %v1140 = vsel %vm1130, %v1101, %v1109
      %v1141 = vsel %vm1130, %v1103, %v1111
      %v1142 = vsel %vm1130, %v1105, %v1113
      %v1143 = vsel %vm1130, %v1123, %v1099
      %v1144 = vsel %vm1130, %v1125, %v1101
      %v1145 = vsel %vm1130, %v1127, %v1103
      %v1146 = vsel %vm1130, %v1129, %v1105
      %s1147 = scalar_lea.vmem %s1, 96
      %v1148 = vld [vmem:[%s1147] sm:$0xff]
      %v1149 = vld [vmem:[%s1147 + $0x8] sm:$0xff]
      %v1150 = vld [vmem:[%s1147 + $0x10] sm:$0xff]
      %v1151 = vld [vmem:[%s1147 + $0x18] sm:$0xff]
      %v1153 = vsel %vm457, %v1148, 0
      %v1156 = vsel %vm457, %v1149, 0
      %v1159 = vsel %vm457, %v1150, 0
      %v1162 = vsel %vm457, %v1151, 0
      %1164 = vmatprep.subr.mxu0 %v1139
      %1165 = vmatpush1.msra.mxu0 %v1143
      %1166 = vmatprep.subr.mxu0 %v1140
      %1167 = vmatpush1.msra.mxu0 %v1144
      %1168 = vmatprep.subr.mxu0 %v1141
      %1169 = vmatpush1.msra.mxu0 %v1145
      %1170 = vmatprep.subr.mxu0 %v1142
      %1171 = vmatpush1.msra.mxu0 %v1146
      %1172 = vmatprep.subr.mxu0 0.0
      %1173 = vmatpush1.msra.mxu0 0.0
      %1174 = vmatprep.subr.mxu0 0.0
      %1175 = vmatpush1.msra.mxu0 0.0
      %1176 = vmatprep.subr.mxu0 0.0
      %1177 = vmatpush1.msra.mxu0 0.0
      %1178 = vmatprep.subr.mxu0 0.0
      %1179 = vmatpush1.msra.mxu0 0.0
      %1180 = vmatprep.subr.mxu0 0.0
      %1181 = vmatpush1.msra.mxu0 0.0
      %1182 = vmatprep.subr.mxu0 0.0
      %1183 = vmatpush1.msra.mxu0 0.0
      %1184 = vmatprep.subr.mxu0 0.0
      %1185 = vmatpush1.msra.mxu0 0.0
      %1186 = vmatprep.subr.mxu0 0.0
      %1187 = vmatpush1.msra.mxu0 0.0
      %1188 = vmatprep.subr.mxu0 0.0
      %1189 = vmatpush1.msra.mxu0 0.0
      %1190 = vmatprep.subr.mxu0 0.0
      %1191 = vmatpush1.msra.mxu0 0.0
      %1192 = vmatprep.subr.mxu0 0.0
      %1193 = vmatpush1.msra.mxu0 0.0
      %1194 = vmatprep.subr.mxu0 0.0
      %1195 = vmatpush1.msra.mxu0 0.0
      %1196 = vmatprep.subr.mxu0 0.0
      %1197 = vmatpush1.msra.mxu0 0.0
      %1198 = vmatprep.subr.mxu0 0.0
      %1199 = vmatpush1.msra.mxu0 0.0
      %1200 = vmatprep.subr.mxu0 0.0
      %1201 = vmatpush1.msra.mxu0 0.0
      %1202 = vmatprep.subr.mxu0 0.0
      %1203 = vmatpush1.msra.mxu0 0.0
      %1204 = vmatprep.subr.mxu0 0.0
      %1205 = vmatpush1.msra.mxu0 0.0
      %1206 = vmatprep.subr.mxu0 0.0
      %1207 = vmatpush1.msra.mxu0 0.0
      %1208 = vmatprep.subr.mxu0 0.0
      %1209 = vmatpush1.msra.mxu0 0.0
      %1210 = vmatprep.subr.mxu0 0.0
      %1211 = vmatpush1.msra.mxu0 0.0
      %1212 = vmatprep.subr.mxu0 0.0
      %1213 = vmatpush1.msra.mxu0 0.0
      %1214 = vmatprep.subr.mxu0 0.0
      %1215 = vmatpush1.msra.mxu0 0.0
      %1216 = vmatprep.subr.mxu0 0.0
      %1217 = vmatpush1.msra.mxu0 0.0
      %1218 = vmatprep.subr.mxu0 0.0
      %1219 = vmatpush1.msra.mxu0 0.0
      %1220 = vmatprep.subr.mxu0 0.0
      %1221 = vmatpush1.msra.mxu0 0.0
      %1222 = vmatprep.subr.mxu0 0.0
      %1223 = vmatpush1.msra.mxu0 0.0
      %1224 = vmatprep.subr.mxu0 0.0
      %1225 = vmatpush1.msra.mxu0 0.0
      %1226 = vmatprep.subr.mxu0 0.0
      %1227 = vmatpush1.msra.mxu0 0.0
      %1228 = vmatprep.mubr.f32.mxu0 0.0
      %1229 = vmatmul.mubr.f32.gmra.mrb[0].mxu0 %v1153
      %v1230 = vpop.f32.mrb[0].mxu0
      %v1231 = vadd.f32 0.0, %v1230
      %v1232 = vpop.f32.mrb[0].mxu0
      %v1233 = vadd.f32 0.0, %v1232
      %1234 = vmatprep.mubr.f32.mxu0 0.0
      %1235 = vmatmul.mubr.f32.gmra.mrb[0].mxu0 %v1156
      %v1236 = vpop.f32.mrb[0].mxu0
      %v1237 = vadd.f32 0.0, %v1236
      %v1238 = vpop.f32.mrb[0].mxu0
      %v1239 = vadd.f32 0.0, %v1238
      %1240 = vmatprep.mubr.f32.mxu0 0.0
      %1241 = vmatmul.mubr.f32.gmra.mrb[0].mxu0 %v1159
      %v1242 = vpop.f32.mrb[0].mxu0
      %v1243 = vadd.f32 0.0, %v1242
      %v1244 = vpop.f32.mrb[0].mxu0
      %v1245 = vadd.f32 0.0, %v1244
      %1246 = vmatprep.mubr.f32.mxu0 0.0
      %1247 = vmatmul.mubr.f32.gmra.mrb[0].mxu0 %v1162
      %v1248 = vpop.f32.mrb[0].mxu0
      %v1249 = vadd.f32 0.0, %v1248
      %v1250 = vpop.f32.mrb[0].mxu0
      %v1251 = vadd.f32 0.0, %v1250
      %1252 = vdwg.mxu0
      %1253 = vmatprep.subr.mxu0 %v1131
      %1254 = vmatpush1.msra.mxu0 %v1135
      %1255 = vmatprep.subr.mxu0 %v1132
      %1256 = vmatpush1.msra.mxu0 %v1136
      %1257 = vmatprep.subr.mxu0 %v1133
      %1258 = vmatpush1.msra.mxu0 %v1137
      %1259 = vmatprep.subr.mxu0 %v1134
      %1260 = vmatpush1.msra.mxu0 %v1138
      %1261 = vmatprep.subr.mxu0 0.0
      %1262 = vmatpush1.msra.mxu0 0.0
      %1263 = vmatprep.subr.mxu0 0.0
      %1264 = vmatpush1.msra.mxu0 0.0
      %1265 = vmatprep.subr.mxu0 0.0
      %1266 = vmatpush1.msra.mxu0 0.0
      %1267 = vmatprep.subr.mxu0 0.0
      %1268 = vmatpush1.msra.mxu0 0.0
      %1269 = vmatprep.subr.mxu0 0.0
      %1270 = vmatpush1.msra.mxu0 0.0
      %1271 = vmatprep.subr.mxu0 0.0
      %1272 = vmatpush1.msra.mxu0 0.0
      %1273 = vmatprep.subr.mxu0 0.0
      %1274 = vmatpush1.msra.mxu0 0.0
      %1275 = vmatprep.subr.mxu0 0.0
      %1276 = vmatpush1.msra.mxu0 0.0
      %1277 = vmatprep.subr.mxu0 0.0
      %1278 = vmatpush1.msra.mxu0 0.0
      %1279 = vmatprep.subr.mxu0 0.0
      %1280 = vmatpush1.msra.mxu0 0.0
      %1281 = vmatprep.subr.mxu0 0.0
      %1282 = vmatpush1.msra.mxu0 0.0
      %1283 = vmatprep.subr.mxu0 0.0
      %1284 = vmatpush1.msra.mxu0 0.0
      %1285 = vmatprep.subr.mxu0 0.0
      %1286 = vmatpush1.msra.mxu0 0.0
      %1287 = vmatprep.subr.mxu0 0.0
      %1288 = vmatpush1.msra.mxu0 0.0
      %1289 = vmatprep.subr.mxu0 0.0
      %1290 = vmatpush1.msra.mxu0 0.0
      %1291 = vmatprep.subr.mxu0 0.0
      %1292 = vmatpush1.msra.mxu0 0.0
      %1293 = vmatprep.subr.mxu0 0.0
      %1294 = vmatpush1.msra.mxu0 0.0
      %1295 = vmatprep.subr.mxu0 0.0
      %1296 = vmatpush1.msra.mxu0 0.0
      %1297 = vmatprep.subr.mxu0 0.0
      %1298 = vmatpush1.msra.mxu0 0.0
      %1299 = vmatprep.subr.mxu0 0.0
      %1300 = vmatpush1.msra.mxu0 0.0
      %1301 = vmatprep.subr.mxu0 0.0
      %1302 = vmatpush1.msra.mxu0 0.0
      %1303 = vmatprep.subr.mxu0 0.0
      %1304 = vmatpush1.msra.mxu0 0.0
      %1305 = vmatprep.subr.mxu0 0.0
      %1306 = vmatpush1.msra.mxu0 0.0
      %1307 = vmatprep.subr.mxu0 0.0
      %1308 = vmatpush1.msra.mxu0 0.0
      %1309 = vmatprep.subr.mxu0 0.0
      %1310 = vmatpush1.msra.mxu0 0.0
      %1311 = vmatprep.subr.mxu0 0.0
      %1312 = vmatpush1.msra.mxu0 0.0
      %1313 = vmatprep.subr.mxu0 0.0
      %1314 = vmatpush1.msra.mxu0 0.0
      %1315 = vmatprep.subr.mxu0 0.0
      %1316 = vmatpush1.msra.mxu0 0.0
      %1317 = vmatprep.mubr.f32.mxu0 0.0
      %1318 = vmatmul.mubr.f32.gmra.mrb[0].mxu0 %v1153
      %v1319 = vpop.f32.mrb[0].mxu0
      %v1320 = vadd.f32 0.0, %v1319
      %v1321 = vpop.f32.mrb[0].mxu0
      %v1322 = vadd.f32 0.0, %v1321
      %1323 = vmatprep.mubr.f32.mxu0 0.0
      %1324 = vmatmul.mubr.f32.gmra.mrb[0].mxu0 %v1156
      %v1325 = vpop.f32.mrb[0].mxu0
      %v1326 = vadd.f32 0.0, %v1325
      %v1327 = vpop.f32.mrb[0].mxu0
      %v1328 = vadd.f32 0.0, %v1327
      %1329 = vmatprep.mubr.f32.mxu0 0.0
      %1330 = vmatmul.mubr.f32.gmra.mrb[0].mxu0 %v1159
      %v1331 = vpop.f32.mrb[0].mxu0
      %v1332 = vadd.f32 0.0, %v1331
      %v1333 = vpop.f32.mrb[0].mxu0
      %v1334 = vadd.f32 0.0, %v1333
      %1335 = vmatprep.mubr.f32.mxu0 0.0
      %1336 = vmatmul.mubr.f32.gmra.mrb[0].mxu0 %v1162
      %v1337 = vpop.f32.mrb[0].mxu0
      %v1338 = vadd.f32 0.0, %v1337
      %v1339 = vpop.f32.mrb[0].mxu0
      %v1340 = vadd.f32 0.0, %v1339
      %1341 = vdwg.mxu0
      %v1342 = vadd.f32 %v1082, %v1231
      %v1343 = vadd.f32 %v1083, %v1233
      %v1344 = vadd.f32 %v1084, %v1320
      %v1345 = vadd.f32 %v1085, %v1322
      %v1346 = vadd.f32 %v1086, %v1237
      %v1347 = vadd.f32 %v1087, %v1239
      %v1348 = vadd.f32 %v1088, %v1326
      %v1349 = vadd.f32 %v1089, %v1328
      %v1350 = vadd.f32 %v1090, %v1243
      %v1351 = vadd.f32 %v1091, %v1245
      %v1352 = vadd.f32 %v1092, %v1332
      %v1353 = vadd.f32 %v1093, %v1334
      %v1354 = vadd.f32 %v1094, %v1249
      %v1355 = vadd.f32 %v1095, %v1251
      %v1356 = vadd.f32 %v1096, %v1338
      %v1357 = vadd.f32 %v1097, %v1340
      %s1358 = scalar_lea.vmem %s1, 128
      %v1359 = vld [vmem:[%s1358] sm:$0xff]
      %v1360 = vld [vmem:[%s1358 + $0x8] sm:$0xff]
      %v1361 = vld [vmem:[%s1358 + $0x10] sm:$0xff]
      %v1362 = vld [vmem:[%s1358 + $0x18] sm:$0xff]
      %v1364 = vsel %vm457, %v1359, 0
      %v1367 = vsel %vm457, %v1360, 0
      %v1370 = vsel %vm457, %v1361, 0
      %v1373 = vsel %vm457, %v1362, 0
      %1375 = vmatprep.subr.mxu0 %v333
      %1376 = vmatpush1.msra.mxu0 %v332
      %1377 = vmatprep.subr.mxu0 %v337
      %1378 = vmatpush1.msra.mxu0 %v336
      %1379 = vmatprep.subr.mxu0 %v341
      %1380 = vmatpush1.msra.mxu0 %v340
      %1381 = vmatprep.subr.mxu0 %v345
      %1382 = vmatpush1.msra.mxu0 %v344
      %1383 = vmatprep.subr.mxu0 0.0
      %1384 = vmatpush1.msra.mxu0 0.0
      %1385 = vmatprep.subr.mxu0 0.0
      %1386 = vmatpush1.msra.mxu0 0.0
      %1387 = vmatprep.subr.mxu0 0.0
      %1388 = vmatpush1.msra.mxu0 0.0
      %1389 = vmatprep.subr.mxu0 0.0
      %1390 = vmatpush1.msra.mxu0 0.0
      %1391 = vmatprep.subr.mxu0 0.0
      %1392 = vmatpush1.msra.mxu0 0.0
      %1393 = vmatprep.subr.mxu0 0.0
      %1394 = vmatpush1.msra.mxu0 0.0
      %1395 = vmatprep.subr.mxu0 0.0
      %1396 = vmatpush1.msra.mxu0 0.0
      %1397 = vmatprep.subr.mxu0 0.0
      %1398 = vmatpush1.msra.mxu0 0.0
      %1399 = vmatprep.subr.mxu0 0.0
      %1400 = vmatpush1.msra.mxu0 0.0
      %1401 = vmatprep.subr.mxu0 0.0
      %1402 = vmatpush1.msra.mxu0 0.0
      %1403 = vmatprep.subr.mxu0 0.0
      %1404 = vmatpush1.msra.mxu0 0.0
      %1405 = vmatprep.subr.mxu0 0.0
      %1406 = vmatpush1.msra.mxu0 0.0
      %1407 = vmatprep.subr.mxu0 0.0
      %1408 = vmatpush1.msra.mxu0 0.0
      %1409 = vmatprep.subr.mxu0 0.0
      %1410 = vmatpush1.msra.mxu0 0.0
      %1411 = vmatprep.subr.mxu0 0.0
      %1412 = vmatpush1.msra.mxu0 0.0
      %1413 = vmatprep.subr.mxu0 0.0
      %1414 = vmatpush1.msra.mxu0 0.0
      %1415 = vmatprep.subr.mxu0 0.0
      %1416 = vmatpush1.msra.mxu0 0.0
      %1417 = vmatprep.subr.mxu0 0.0
      %1418 = vmatpush1.msra.mxu0 0.0
      %1419 = vmatprep.subr.mxu0 0.0
      %1420 = vmatpush1.msra.mxu0 0.0
      %1421 = vmatprep.subr.mxu0 0.0
      %1422 = vmatpush1.msra.mxu0 0.0
      %1423 = vmatprep.subr.mxu0 0.0
      %1424 = vmatpush1.msra.mxu0 0.0
      %1425 = vmatprep.subr.mxu0 0.0
      %1426 = vmatpush1.msra.mxu0 0.0
      %1427 = vmatprep.subr.mxu0 0.0
      %1428 = vmatpush1.msra.mxu0 0.0
      %1429 = vmatprep.subr.mxu0 0.0
      %1430 = vmatpush1.msra.mxu0 0.0
      %1431 = vmatprep.subr.mxu0 0.0
      %1432 = vmatpush1.msra.mxu0 0.0
      %1433 = vmatprep.subr.mxu0 0.0
      %1434 = vmatpush1.msra.mxu0 0.0
      %1435 = vmatprep.subr.mxu0 0.0
      %1436 = vmatpush1.msra.mxu0 0.0
      %1437 = vmatprep.subr.mxu0 0.0
      %1438 = vmatpush1.msra.mxu0 0.0
      %1439 = vmatprep.mubr.f32.mxu0 0.0
      %1440 = vmatmul.mubr.f32.gmra.mrb[0].mxu0 %v1364
      %v1441 = vpop.f32.mrb[0].mxu0
      %v1442 = vadd.f32 0.0, %v1441
      %v1443 = vpop.f32.mrb[0].mxu0
      %v1444 = vadd.f32 0.0, %v1443
      %1445 = vmatprep.mubr.f32.mxu0 0.0
      %1446 = vmatmul.mubr.f32.gmra.mrb[0].mxu0 %v1367
      %v1447 = vpop.f32.mrb[0].mxu0
      %v1448 = vadd.f32 0.0, %v1447
      %v1449 = vpop.f32.mrb[0].mxu0
      %v1450 = vadd.f32 0.0, %v1449
      %1451 = vmatprep.mubr.f32.mxu0 0.0
      %1452 = vmatmul.mubr.f32.gmra.mrb[0].mxu0 %v1370
      %v1453 = vpop.f32.mrb[0].mxu0
      %v1454 = vadd.f32 0.0, %v1453
      %v1455 = vpop.f32.mrb[0].mxu0
      %v1456 = vadd.f32 0.0, %v1455
      %1457 = vmatprep.mubr.f32.mxu0 0.0
      %1458 = vmatmul.mubr.f32.gmra.mrb[0].mxu0 %v1373
      %v1459 = vpop.f32.mrb[0].mxu0
      %v1460 = vadd.f32 0.0, %v1459
      %v1461 = vpop.f32.mrb[0].mxu0
      %v1462 = vadd.f32 0.0, %v1461
      %1463 = vdwg.mxu0
      %1464 = vmatprep.subr.mxu0 %v335
      %1465 = vmatpush1.msra.mxu0 %v334
      %1466 = vmatprep.subr.mxu0 %v339
      %1467 = vmatpush1.msra.mxu0 %v338
      %1468 = vmatprep.subr.mxu0 %v343
      %1469 = vmatpush1.msra.mxu0 %v342
      %1470 = vmatprep.subr.mxu0 %v347
      %1471 = vmatpush1.msra.mxu0 %v346
      %1472 = vmatprep.subr.mxu0 0.0
      %1473 = vmatpush1.msra.mxu0 0.0
      %1474 = vmatprep.subr.mxu0 0.0
      %1475 = vmatpush1.msra.mxu0 0.0
      %1476 = vmatprep.subr.mxu0 0.0
      %1477 = vmatpush1.msra.mxu0 0.0
      %1478 = vmatprep.subr.mxu0 0.0
      %1479 = vmatpush1.msra.mxu0 0.0
      %1480 = vmatprep.subr.mxu0 0.0
      %1481 = vmatpush1.msra.mxu0 0.0
      %1482 = vmatprep.subr.mxu0 0.0
      %1483 = vmatpush1.msra.mxu0 0.0
      %1484 = vmatprep.subr.mxu0 0.0
      %1485 = vmatpush1.msra.mxu0 0.0
      %1486 = vmatprep.subr.mxu0 0.0
      %1487 = vmatpush1.msra.mxu0 0.0
      %1488 = vmatprep.subr.mxu0 0.0
      %1489 = vmatpush1.msra.mxu0 0.0
      %1490 = vmatprep.subr.mxu0 0.0
      %1491 = vmatpush1.msra.mxu0 0.0
      %1492 = vmatprep.subr.mxu0 0.0
      %1493 = vmatpush1.msra.mxu0 0.0
      %1494 = vmatprep.subr.mxu0 0.0
      %1495 = vmatpush1.msra.mxu0 0.0
      %1496 = vmatprep.subr.mxu0 0.0
      %1497 = vmatpush1.msra.mxu0 0.0
      %1498 = vmatprep.subr.mxu0 0.0
      %1499 = vmatpush1.msra.mxu0 0.0
      %1500 = vmatprep.subr.mxu0 0.0
      %1501 = vmatpush1.msra.mxu0 0.0
      %1502 = vmatprep.subr.mxu0 0.0
      %1503 = vmatpush1.msra.mxu0 0.0
      %1504 = vmatprep.subr.mxu0 0.0
      %1505 = vmatpush1.msra.mxu0 0.0
      %1506 = vmatprep.subr.mxu0 0.0
      %1507 = vmatpush1.msra.mxu0 0.0
      %1508 = vmatprep.subr.mxu0 0.0
      %1509 = vmatpush1.msra.mxu0 0.0
      %1510 = vmatprep.subr.mxu0 0.0
      %1511 = vmatpush1.msra.mxu0 0.0
      %1512 = vmatprep.subr.mxu0 0.0
      %1513 = vmatpush1.msra.mxu0 0.0
      %1514 = vmatprep.subr.mxu0 0.0
      %1515 = vmatpush1.msra.mxu0 0.0
      %1516 = vmatprep.subr.mxu0 0.0
      %1517 = vmatpush1.msra.mxu0 0.0
      %1518 = vmatprep.subr.mxu0 0.0
      %1519 = vmatpush1.msra.mxu0 0.0
      %1520 = vmatprep.subr.mxu0 0.0
      %1521 = vmatpush1.msra.mxu0 0.0
      %1522 = vmatprep.subr.mxu0 0.0
      %1523 = vmatpush1.msra.mxu0 0.0
      %1524 = vmatprep.subr.mxu0 0.0
      %1525 = vmatpush1.msra.mxu0 0.0
      %1526 = vmatprep.subr.mxu0 0.0
      %1527 = vmatpush1.msra.mxu0 0.0
      %1528 = vmatprep.mubr.f32.mxu0 0.0
      %1529 = vmatmul.mubr.f32.gmra.mrb[0].mxu0 %v1364
      %v1530 = vpop.f32.mrb[0].mxu0
      %v1531 = vadd.f32 0.0, %v1530
      %v1532 = vpop.f32.mrb[0].mxu0
      %v1533 = vadd.f32 0.0, %v1532
      %1534 = vmatprep.mubr.f32.mxu0 0.0
      %1535 = vmatmul.mubr.f32.gmra.mrb[0].mxu0 %v1367
      %v1536 = vpop.f32.mrb[0].mxu0
      %v1537 = vadd.f32 0.0, %v1536
      %v1538 = vpop.f32.mrb[0].mxu0
      %v1539 = vadd.f32 0.0, %v1538
      %1540 = vmatprep.mubr.f32.mxu0 0.0
      %1541 = vmatmul.mubr.f32.gmra.mrb[0].mxu0 %v1370
      %v1542 = vpop.f32.mrb[0].mxu0
      %v1543 = vadd.f32 0.0, %v1542
      %v1544 = vpop.f32.mrb[0].mxu0
      %v1545 = vadd.f32 0.0, %v1544
      %1546 = vmatprep.mubr.f32.mxu0 0.0
      %1547 = vmatmul.mubr.f32.gmra.mrb[0].mxu0 %v1373
      %v1548 = vpop.f32.mrb[0].mxu0
      %v1549 = vadd.f32 0.0, %v1548
      %v1550 = vpop.f32.mrb[0].mxu0
      %v1551 = vadd.f32 0.0, %v1550
      %1552 = vdwg.mxu0
      %v1553 = vadd.f32 %v1342, %v1442
      %v1554 = vadd.f32 %v1343, %v1444
      %v1555 = vadd.f32 %v1344, %v1531
      %v1556 = vadd.f32 %v1345, %v1533
      %v1557 = vadd.f32 %v1346, %v1448
      %v1558 = vadd.f32 %v1347, %v1450
      %v1559 = vadd.f32 %v1348, %v1537
      %v1560 = vadd.f32 %v1349, %v1539
      %v1561 = vadd.f32 %v1350, %v1454
      %v1562 = vadd.f32 %v1351, %v1456
      %v1563 = vadd.f32 %v1352, %v1543
      %v1564 = vadd.f32 %v1353, %v1545
      %v1565 = vadd.f32 %v1354, %v1460
      %v1566 = vadd.f32 %v1355, %v1462
      %v1567 = vadd.f32 %v1356, %v1549
      %v1568 = vadd.f32 %v1357, %v1551
      %1569 = vrot.lane.b32.xlu0 %v332, 127
      %v1570 = vpop.permute.xlu0 %1569
      %1571 = vrot.lane.b32.xlu0 %v336, 127
      %v1572 = vpop.permute.xlu0 %1571
      %1573 = vrot.lane.b32.xlu0 %v340, 127
      %v1574 = vpop.permute.xlu0 %1573
      %1575 = vrot.lane.b32.xlu0 %v344, 127
      %v1576 = vpop.permute.xlu0 %1575
      %1577 = vrot.lane.b32.xlu0 %v333, 127
      %v1578 = vpop.permute.xlu0 %1577
      %1579 = vrot.lane.b32.xlu0 %v337, 127
      %v1580 = vpop.permute.xlu0 %1579
      %1581 = vrot.lane.b32.xlu0 %v341, 127
      %v1582 = vpop.permute.xlu0 %1581
      %1583 = vrot.lane.b32.xlu0 %v345, 127
      %v1584 = vpop.permute.xlu0 %1583
      %1585 = vrot.lane.b32.xlu0 %v334, 127
      %v1586 = vpop.permute.xlu0 %1585
      %1587 = vrot.lane.b32.xlu0 %v338, 127
      %v1588 = vpop.permute.xlu0 %1587
      %1589 = vrot.lane.b32.xlu0 %v342, 127
      %v1590 = vpop.permute.xlu0 %1589
      %1591 = vrot.lane.b32.xlu0 %v346, 127
      %v1592 = vpop.permute.xlu0 %1591
      %1593 = vrot.lane.b32.xlu0 %v335, 127
      %v1594 = vpop.permute.xlu0 %1593
      %1595 = vrot.lane.b32.xlu0 %v339, 127
      %v1596 = vpop.permute.xlu0 %1595
      %1597 = vrot.lane.b32.xlu0 %v343, 127
      %v1598 = vpop.permute.xlu0 %1597
      %1599 = vrot.lane.b32.xlu0 %v347, 127
      %v1600 = vpop.permute.xlu0 %1599
      %vm1601 = vcmp.lt.s32.totalorder %v381, 127
      %v1602 = vsel %vm1601, %v1586, %v1594
      %v1603 = vsel %vm1601, %v1588, %v1596
      %v1604 = vsel %vm1601, %v1590, %v1598
      %v1605 = vsel %vm1601, %v1592, %v1600
      %v1606 = vsel %vm1601, %v1578, %v1586
      %v1607 = vsel %vm1601, %v1580, %v1588
      %v1608 = vsel %vm1601, %v1582, %v1590
      %v1609 = vsel %vm1601, %v1584, %v1592
      %v1610 = vsel %vm1601, %v1570, %v1578
      %v1611 = vsel %vm1601, %v1572, %v1580
      %v1612 = vsel %vm1601, %v1574, %v1582
      %v1613 = vsel %vm1601, %v1576, %v1584
      %v1614 = vsel %vm1601, %v1594, %v1570
      %v1615 = vsel %vm1601, %v1596, %v1572
      %v1616 = vsel %vm1601, %v1598, %v1574
      %v1617 = vsel %vm1601, %v1600, %v1576
      %s1618 = scalar_lea.vmem %s1, 160
      %v1619 = vld [vmem:[%s1618] sm:$0xff]
      %v1620 = vld [vmem:[%s1618 + $0x8] sm:$0xff]
      %v1621 = vld [vmem:[%s1618 + $0x10] sm:$0xff]
      %v1622 = vld [vmem:[%s1618 + $0x18] sm:$0xff]
      %v1624 = vsel %vm457, %v1619, 0
      %v1627 = vsel %vm457, %v1620, 0
      %v1630 = vsel %vm457, %v1621, 0
      %v1633 = vsel %vm457, %v1622, 0
      %1635 = vmatprep.subr.mxu0 %v1606
      %1636 = vmatpush1.msra.mxu0 %v1610
      %1637 = vmatprep.subr.mxu0 %v1607
      %1638 = vmatpush1.msra.mxu0 %v1611
      %1639 = vmatprep.subr.mxu0 %v1608
      %1640 = vmatpush1.msra.mxu0 %v1612
      %1641 = vmatprep.subr.mxu0 %v1609
      %1642 = vmatpush1.msra.mxu0 %v1613
      %1643 = vmatprep.subr.mxu0 0.0
      %1644 = vmatpush1.msra.mxu0 0.0
      %1645 = vmatprep.subr.mxu0 0.0
      %1646 = vmatpush1.msra.mxu0 0.0
      %1647 = vmatprep.subr.mxu0 0.0
      %1648 = vmatpush1.msra.mxu0 0.0
      %1649 = vmatprep.subr.mxu0 0.0
      %1650 = vmatpush1.msra.mxu0 0.0
      %1651 = vmatprep.subr.mxu0 0.0
      %1652 = vmatpush1.msra.mxu0 0.0
      %1653 = vmatprep.subr.mxu0 0.0
      %1654 = vmatpush1.msra.mxu0 0.0
      %1655 = vmatprep.subr.mxu0 0.0
      %1656 = vmatpush1.msra.mxu0 0.0
      %1657 = vmatprep.subr.mxu0 0.0
      %1658 = vmatpush1.msra.mxu0 0.0
      %1659 = vmatprep.subr.mxu0 0.0
      %1660 = vmatpush1.msra.mxu0 0.0
      %1661 = vmatprep.subr.mxu0 0.0
      %1662 = vmatpush1.msra.mxu0 0.0
      %1663 = vmatprep.subr.mxu0 0.0
      %1664 = vmatpush1.msra.mxu0 0.0
      %1665 = vmatprep.subr.mxu0 0.0
      %1666 = vmatpush1.msra.mxu0 0.0
      %1667 = vmatprep.subr.mxu0 0.0
      %1668 = vmatpush1.msra.mxu0 0.0
      %1669 = vmatprep.subr.mxu0 0.0
      %1670 = vmatpush1.msra.mxu0 0.0
      %1671 = vmatprep.subr.mxu0 0.0
      %1672 = vmatpush1.msra.mxu0 0.0
      %1673 = vmatprep.subr.mxu0 0.0
      %1674 = vmatpush1.msra.mxu0 0.0
      %1675 = vmatprep.subr.mxu0 0.0
      %1676 = vmatpush1.msra.mxu0 0.0
      %1677 = vmatprep.subr.mxu0 0.0
      %1678 = vmatpush1.msra.mxu0 0.0
      %1679 = vmatprep.subr.mxu0 0.0
      %1680 = vmatpush1.msra.mxu0 0.0
      %1681 = vmatprep.subr.mxu0 0.0
      %1682 = vmatpush1.msra.mxu0 0.0
      %1683 = vmatprep.subr.mxu0 0.0
      %1684 = vmatpush1.msra.mxu0 0.0
      %1685 = vmatprep.subr.mxu0 0.0
      %1686 = vmatpush1.msra.mxu0 0.0
      %1687 = vmatprep.subr.mxu0 0.0
      %1688 = vmatpush1.msra.mxu0 0.0
      %1689 = vmatprep.subr.mxu0 0.0
      %1690 = vmatpush1.msra.mxu0 0.0
      %1691 = vmatprep.subr.mxu0 0.0
      %1692 = vmatpush1.msra.mxu0 0.0
      %1693 = vmatprep.subr.mxu0 0.0
      %1694 = vmatpush1.msra.mxu0 0.0
      %1695 = vmatprep.subr.mxu0 0.0
      %1696 = vmatpush1.msra.mxu0 0.0
      %1697 = vmatprep.subr.mxu0 0.0
      %1698 = vmatpush1.msra.mxu0 0.0
      %1699 = vmatprep.mubr.f32.mxu0 0.0
      %1700 = vmatmul.mubr.f32.gmra.mrb[0].mxu0 %v1624
      %v1701 = vpop.f32.mrb[0].mxu0
      %v1702 = vadd.f32 0.0, %v1701
      %v1703 = vpop.f32.mrb[0].mxu0
      %v1704 = vadd.f32 0.0, %v1703
      %1705 = vmatprep.mubr.f32.mxu0 0.0
      %1706 = vmatmul.mubr.f32.gmra.mrb[0].mxu0 %v1627
      %v1707 = vpop.f32.mrb[0].mxu0
      %v1708 = vadd.f32 0.0, %v1707
      %v1709 = vpop.f32.mrb[0].mxu0
      %v1710 = vadd.f32 0.0, %v1709
      %1711 = vmatprep.mubr.f32.mxu0 0.0
      %1712 = vmatmul.mubr.f32.gmra.mrb[0].mxu0 %v1630
      %v1713 = vpop.f32.mrb[0].mxu0
      %v1714 = vadd.f32 0.0, %v1713
      %v1715 = vpop.f32.mrb[0].mxu0
      %v1716 = vadd.f32 0.0, %v1715
      %1717 = vmatprep.mubr.f32.mxu0 0.0
      %1718 = vmatmul.mubr.f32.gmra.mrb[0].mxu0 %v1633
      %v1719 = vpop.f32.mrb[0].mxu0
      %v1720 = vadd.f32 0.0, %v1719
      %v1721 = vpop.f32.mrb[0].mxu0
      %v1722 = vadd.f32 0.0, %v1721
      %1723 = vdwg.mxu0
      %1724 = vmatprep.subr.mxu0 %v1614
      %1725 = vmatpush1.msra.mxu0 %v1602
      %1726 = vmatprep.subr.mxu0 %v1615
      %1727 = vmatpush1.msra.mxu0 %v1603
      %1728 = vmatprep.subr.mxu0 %v1616
      %1729 = vmatpush1.msra.mxu0 %v1604
      %1730 = vmatprep.subr.mxu0 %v1617
      %1731 = vmatpush1.msra.mxu0 %v1605
      %1732 = vmatprep.subr.mxu0 0.0
      %1733 = vmatpush1.msra.mxu0 0.0
      %1734 = vmatprep.subr.mxu0 0.0
      %1735 = vmatpush1.msra.mxu0 0.0
      %1736 = vmatprep.subr.mxu0 0.0
      %1737 = vmatpush1.msra.mxu0 0.0
      %1738 = vmatprep.subr.mxu0 0.0
      %1739 = vmatpush1.msra.mxu0 0.0
      %1740 = vmatprep.subr.mxu0 0.0
      %1741 = vmatpush1.msra.mxu0 0.0
      %1742 = vmatprep.subr.mxu0 0.0
      %1743 = vmatpush1.msra.mxu0 0.0
      %1744 = vmatprep.subr.mxu0 0.0
      %1745 = vmatpush1.msra.mxu0 0.0
      %1746 = vmatprep.subr.mxu0 0.0
      %1747 = vmatpush1.msra.mxu0 0.0
      %1748 = vmatprep.subr.mxu0 0.0
      %1749 = vmatpush1.msra.mxu0 0.0
      %1750 = vmatprep.subr.mxu0 0.0
      %1751 = vmatpush1.msra.mxu0 0.0
      %1752 = vmatprep.subr.mxu0 0.0
      %1753 = vmatpush1.msra.mxu0 0.0
      %1754 = vmatprep.subr.mxu0 0.0
      %1755 = vmatpush1.msra.mxu0 0.0
      %1756 = vmatprep.subr.mxu0 0.0
      %1757 = vmatpush1.msra.mxu0 0.0
      %1758 = vmatprep.subr.mxu0 0.0
      %1759 = vmatpush1.msra.mxu0 0.0
      %1760 = vmatprep.subr.mxu0 0.0
      %1761 = vmatpush1.msra.mxu0 0.0
      %1762 = vmatprep.subr.mxu0 0.0
      %1763 = vmatpush1.msra.mxu0 0.0
      %1764 = vmatprep.subr.mxu0 0.0
      %1765 = vmatpush1.msra.mxu0 0.0
      %1766 = vmatprep.subr.mxu0 0.0
      %1767 = vmatpush1.msra.mxu0 0.0
      %1768 = vmatprep.subr.mxu0 0.0
      %1769 = vmatpush1.msra.mxu0 0.0
      %1770 = vmatprep.subr.mxu0 0.0
      %1771 = vmatpush1.msra.mxu0 0.0
      %1772 = vmatprep.subr.mxu0 0.0
      %1773 = vmatpush1.msra.mxu0 0.0
      %1774 = vmatprep.subr.mxu0 0.0
      %1775 = vmatpush1.msra.mxu0 0.0
      %1776 = vmatprep.subr.mxu0 0.0
      %1777 = vmatpush1.msra.mxu0 0.0
      %1778 = vmatprep.subr.mxu0 0.0
      %1779 = vmatpush1.msra.mxu0 0.0
      %1780 = vmatprep.subr.mxu0 0.0
      %1781 = vmatpush1.msra.mxu0 0.0
      %1782 = vmatprep.subr.mxu0 0.0
      %1783 = vmatpush1.msra.mxu0 0.0
      %1784 = vmatprep.subr.mxu0 0.0
      %1785 = vmatpush1.msra.mxu0 0.0
      %1786 = vmatprep.subr.mxu0 0.0
      %1787 = vmatpush1.msra.mxu0 0.0
      %1788 = vmatprep.mubr.f32.mxu0 0.0
      %1789 = vmatmul.mubr.f32.gmra.mrb[0].mxu0 %v1624
      %v1790 = vpop.f32.mrb[0].mxu0
      %v1791 = vadd.f32 0.0, %v1790
      %v1792 = vpop.f32.mrb[0].mxu0
      %v1793 = vadd.f32 0.0, %v1792
      %1794 = vmatprep.mubr.f32.mxu0 0.0
      %1795 = vmatmul.mubr.f32.gmra.mrb[0].mxu0 %v1627
      %v1796 = vpop.f32.mrb[0].mxu0
      %v1797 = vadd.f32 0.0, %v1796
      %v1798 = vpop.f32.mrb[0].mxu0
      %v1799 = vadd.f32 0.0, %v1798
      %1800 = vmatprep.mubr.f32.mxu0 0.0
      %1801 = vmatmul.mubr.f32.gmra.mrb[0].mxu0 %v1630
      %v1802 = vpop.f32.mrb[0].mxu0
      %v1803 = vadd.f32 0.0, %v1802
      %v1804 = vpop.f32.mrb[0].mxu0
      %v1805 = vadd.f32 0.0, %v1804
      %1806 = vmatprep.mubr.f32.mxu0 0.0
      %1807 = vmatmul.mubr.f32.gmra.mrb[0].mxu0 %v1633
      %v1808 = vpop.f32.mrb[0].mxu0
      %v1809 = vadd.f32 0.0, %v1808
      %v1810 = vpop.f32.mrb[0].mxu0
      %v1811 = vadd.f32 0.0, %v1810
      %1812 = vdwg.mxu0
      %v1813 = vadd.f32 %v1553, %v1702
      %v1814 = vadd.f32 %v1554, %v1704
      %v1815 = vadd.f32 %v1555, %v1791
      %v1816 = vadd.f32 %v1556, %v1793
      %v1817 = vadd.f32 %v1557, %v1708
      %v1818 = vadd.f32 %v1558, %v1710
      %v1819 = vadd.f32 %v1559, %v1797
      %v1820 = vadd.f32 %v1560, %v1799
      %v1821 = vadd.f32 %v1561, %v1714
      %v1822 = vadd.f32 %v1562, %v1716
      %v1823 = vadd.f32 %v1563, %v1803
      %v1824 = vadd.f32 %v1564, %v1805
      %v1825 = vadd.f32 %v1565, %v1720
      %v1826 = vadd.f32 %v1566, %v1722
      %v1827 = vadd.f32 %v1567, %v1809
      %v1828 = vadd.f32 %v1568, %v1811
      %1829 = vrot.lane.b32.xlu0 %v332, 109
      %v1830 = vpop.permute.xlu0 %1829
      %1831 = vrot.lane.b32.xlu0 %v336, 109
      %v1832 = vpop.permute.xlu0 %1831
      %1833 = vrot.lane.b32.xlu0 %v340, 109
      %v1834 = vpop.permute.xlu0 %1833
      %1835 = vrot.lane.b32.xlu0 %v344, 109
      %v1836 = vpop.permute.xlu0 %1835
      %1837 = vrot.lane.b32.xlu0 %v333, 109
      %v1838 = vpop.permute.xlu0 %1837
      %1839 = vrot.lane.b32.xlu0 %v337, 109
      %v1840 = vpop.permute.xlu0 %1839
      %1841 = vrot.lane.b32.xlu0 %v341, 109
      %v1842 = vpop.permute.xlu0 %1841
      %1843 = vrot.lane.b32.xlu0 %v345, 109
      %v1844 = vpop.permute.xlu0 %1843
      %1845 = vrot.lane.b32.xlu0 %v334, 109
      %v1846 = vpop.permute.xlu0 %1845
      %1847 = vrot.lane.b32.xlu0 %v338, 109
      %v1848 = vpop.permute.xlu0 %1847
      %1849 = vrot.lane.b32.xlu0 %v342, 109
      %v1850 = vpop.permute.xlu0 %1849
      %1851 = vrot.lane.b32.xlu0 %v346, 109
      %v1852 = vpop.permute.xlu0 %1851
      %1853 = vrot.lane.b32.xlu0 %v335, 109
      %v1854 = vpop.permute.xlu0 %1853
      %1855 = vrot.lane.b32.xlu0 %v339, 109
      %v1856 = vpop.permute.xlu0 %1855
      %1857 = vrot.lane.b32.xlu0 %v343, 109
      %v1858 = vpop.permute.xlu0 %1857
      %1859 = vrot.lane.b32.xlu0 %v347, 109
      %v1860 = vpop.permute.xlu0 %1859
      %vm1861 = vcmp.lt.s32.totalorder %v381, 109
      %v1862 = vsel %vm1861, %v1846, %v1854
      %v1863 = vsel %vm1861, %v1848, %v1856
      %v1864 = vsel %vm1861, %v1850, %v1858
      %v1865 = vsel %vm1861, %v1852, %v1860
      %v1866 = vsel %vm1861, %v1838, %v1846
      %v1867 = vsel %vm1861, %v1840, %v1848
      %v1868 = vsel %vm1861, %v1842, %v1850
      %v1869 = vsel %vm1861, %v1844, %v1852
      %v1870 = vsel %vm1861, %v1830, %v1838
      %v1871 = vsel %vm1861, %v1832, %v1840
      %v1872 = vsel %vm1861, %v1834, %v1842
      %v1873 = vsel %vm1861, %v1836, %v1844
      %v1874 = vsel %vm1861, %v1854, %v1830
      %v1875 = vsel %vm1861, %v1856, %v1832
      %v1876 = vsel %vm1861, %v1858, %v1834
      %v1877 = vsel %vm1861, %v1860, %v1836
      %s1878 = scalar_lea.vmem %s1, 192
      %v1879 = vld [vmem:[%s1878] sm:$0xff]
      %v1880 = vld [vmem:[%s1878 + $0x8] sm:$0xff]
      %v1881 = vld [vmem:[%s1878 + $0x10] sm:$0xff]
      %v1882 = vld [vmem:[%s1878 + $0x18] sm:$0xff]
      %v1884 = vsel %vm457, %v1879, 0
      %v1887 = vsel %vm457, %v1880, 0
      %v1890 = vsel %vm457, %v1881, 0
      %v1893 = vsel %vm457, %v1882, 0
      %1895 = vmatprep.subr.mxu0 %v1866
      %1896 = vmatpush1.msra.mxu0 %v1870
      %1897 = vmatprep.subr.mxu0 %v1867
      %1898 = vmatpush1.msra.mxu0 %v1871
      %1899 = vmatprep.subr.mxu0 %v1868
      %1900 = vmatpush1.msra.mxu0 %v1872
      %1901 = vmatprep.subr.mxu0 %v1869
      %1902 = vmatpush1.msra.mxu0 %v1873
      %1903 = vmatprep.subr.mxu0 0.0
      %1904 = vmatpush1.msra.mxu0 0.0
      %1905 = vmatprep.subr.mxu0 0.0
      %1906 = vmatpush1.msra.mxu0 0.0
      %1907 = vmatprep.subr.mxu0 0.0
      %1908 = vmatpush1.msra.mxu0 0.0
      %1909 = vmatprep.subr.mxu0 0.0
      %1910 = vmatpush1.msra.mxu0 0.0
      %1911 = vmatprep.subr.mxu0 0.0
      %1912 = vmatpush1.msra.mxu0 0.0
      %1913 = vmatprep.subr.mxu0 0.0
      %1914 = vmatpush1.msra.mxu0 0.0
      %1915 = vmatprep.subr.mxu0 0.0
      %1916 = vmatpush1.msra.mxu0 0.0
      %1917 = vmatprep.subr.mxu0 0.0
      %1918 = vmatpush1.msra.mxu0 0.0
      %1919 = vmatprep.subr.mxu0 0.0
      %1920 = vmatpush1.msra.mxu0 0.0
      %1921 = vmatprep.subr.mxu0 0.0
      %1922 = vmatpush1.msra.mxu0 0.0
      %1923 = vmatprep.subr.mxu0 0.0
      %1924 = vmatpush1.msra.mxu0 0.0
      %1925 = vmatprep.subr.mxu0 0.0
      %1926 = vmatpush1.msra.mxu0 0.0
      %1927 = vmatprep.subr.mxu0 0.0
      %1928 = vmatpush1.msra.mxu0 0.0
      %1929 = vmatprep.subr.mxu0 0.0
      %1930 = vmatpush1.msra.mxu0 0.0
      %1931 = vmatprep.subr.mxu0 0.0
      %1932 = vmatpush1.msra.mxu0 0.0
      %1933 = vmatprep.subr.mxu0 0.0
      %1934 = vmatpush1.msra.mxu0 0.0
      %1935 = vmatprep.subr.mxu0 0.0
      %1936 = vmatpush1.msra.mxu0 0.0
      %1937 = vmatprep.subr.mxu0 0.0
      %1938 = vmatpush1.msra.mxu0 0.0
      %1939 = vmatprep.subr.mxu0 0.0
      %1940 = vmatpush1.msra.mxu0 0.0
      %1941 = vmatprep.subr.mxu0 0.0
      %1942 = vmatpush1.msra.mxu0 0.0
      %1943 = vmatprep.subr.mxu0 0.0
      %1944 = vmatpush1.msra.mxu0 0.0
      %1945 = vmatprep.subr.mxu0 0.0
      %1946 = vmatpush1.msra.mxu0 0.0
      %1947 = vmatprep.subr.mxu0 0.0
      %1948 = vmatpush1.msra.mxu0 0.0
      %1949 = vmatprep.subr.mxu0 0.0
      %1950 = vmatpush1.msra.mxu0 0.0
      %1951 = vmatprep.subr.mxu0 0.0
      %1952 = vmatpush1.msra.mxu0 0.0
      %1953 = vmatprep.subr.mxu0 0.0
      %1954 = vmatpush1.msra.mxu0 0.0
      %1955 = vmatprep.subr.mxu0 0.0
      %1956 = vmatpush1.msra.mxu0 0.0
      %1957 = vmatprep.subr.mxu0 0.0
      %1958 = vmatpush1.msra.mxu0 0.0
      %1959 = vmatprep.mubr.f32.mxu0 0.0
      %1960 = vmatmul.mubr.f32.gmra.mrb[0].mxu0 %v1884
      %v1961 = vpop.f32.mrb[0].mxu0
      %v1962 = vadd.f32 0.0, %v1961
      %v1963 = vpop.f32.mrb[0].mxu0
      %v1964 = vadd.f32 0.0, %v1963
      %1965 = vmatprep.mubr.f32.mxu0 0.0
      %1966 = vmatmul.mubr.f32.gmra.mrb[0].mxu0 %v1887
      %v1967 = vpop.f32.mrb[0].mxu0
      %v1968 = vadd.f32 0.0, %v1967
      %v1969 = vpop.f32.mrb[0].mxu0
      %v1970 = vadd.f32 0.0, %v1969
      %1971 = vmatprep.mubr.f32.mxu0 0.0
      %1972 = vmatmul.mubr.f32.gmra.mrb[0].mxu0 %v1890
      %v1973 = vpop.f32.mrb[0].mxu0
      %v1974 = vadd.f32 0.0, %v1973
      %v1975 = vpop.f32.mrb[0].mxu0
      %v1976 = vadd.f32 0.0, %v1975
      %1977 = vmatprep.mubr.f32.mxu0 0.0
      %1978 = vmatmul.mubr.f32.gmra.mrb[0].mxu0 %v1893
      %v1979 = vpop.f32.mrb[0].mxu0
      %v1980 = vadd.f32 0.0, %v1979
      %v1981 = vpop.f32.mrb[0].mxu0
      %v1982 = vadd.f32 0.0, %v1981
      %1983 = vdwg.mxu0
      %1984 = vmatprep.subr.mxu0 %v1874
      %1985 = vmatpush1.msra.mxu0 %v1862
      %1986 = vmatprep.subr.mxu0 %v1875
      %1987 = vmatpush1.msra.mxu0 %v1863
      %1988 = vmatprep.subr.mxu0 %v1876
      %1989 = vmatpush1.msra.mxu0 %v1864
      %1990 = vmatprep.subr.mxu0 %v1877
      %1991 = vmatpush1.msra.mxu0 %v1865
      %1992 = vmatprep.subr.mxu0 0.0
      %1993 = vmatpush1.msra.mxu0 0.0
      %1994 = vmatprep.subr.mxu0 0.0
      %1995 = vmatpush1.msra.mxu0 0.0
      %1996 = vmatprep.subr.mxu0 0.0
      %1997 = vmatpush1.msra.mxu0 0.0
      %1998 = vmatprep.subr.mxu0 0.0
      %1999 = vmatpush1.msra.mxu0 0.0
      %2000 = vmatprep.subr.mxu0 0.0
      %2001 = vmatpush1.msra.mxu0 0.0
      %2002 = vmatprep.subr.mxu0 0.0
      %2003 = vmatpush1.msra.mxu0 0.0
      %2004 = vmatprep.subr.mxu0 0.0
      %2005 = vmatpush1.msra.mxu0 0.0
      %2006 = vmatprep.subr.mxu0 0.0
      %2007 = vmatpush1.msra.mxu0 0.0
      %2008 = vmatprep.subr.mxu0 0.0
      %2009 = vmatpush1.msra.mxu0 0.0
      %2010 = vmatprep.subr.mxu0 0.0
      %2011 = vmatpush1.msra.mxu0 0.0
      %2012 = vmatprep.subr.mxu0 0.0
      %2013 = vmatpush1.msra.mxu0 0.0
      %2014 = vmatprep.subr.mxu0 0.0
      %2015 = vmatpush1.msra.mxu0 0.0
      %2016 = vmatprep.subr.mxu0 0.0
      %2017 = vmatpush1.msra.mxu0 0.0
      %2018 = vmatprep.subr.mxu0 0.0
      %2019 = vmatpush1.msra.mxu0 0.0
      %2020 = vmatprep.subr.mxu0 0.0
      %2021 = vmatpush1.msra.mxu0 0.0
      %2022 = vmatprep.subr.mxu0 0.0
      %2023 = vmatpush1.msra.mxu0 0.0
      %2024 = vmatprep.subr.mxu0 0.0
      %2025 = vmatpush1.msra.mxu0 0.0
      %2026 = vmatprep.subr.mxu0 0.0
      %2027 = vmatpush1.msra.mxu0 0.0
      %2028 = vmatprep.subr.mxu0 0.0
      %2029 = vmatpush1.msra.mxu0 0.0
      %2030 = vmatprep.subr.mxu0 0.0
      %2031 = vmatpush1.msra.mxu0 0.0
      %2032 = vmatprep.subr.mxu0 0.0
      %2033 = vmatpush1.msra.mxu0 0.0
      %2034 = vmatprep.subr.mxu0 0.0
      %2035 = vmatpush1.msra.mxu0 0.0
      %2036 = vmatprep.subr.mxu0 0.0
      %2037 = vmatpush1.msra.mxu0 0.0
      %2038 = vmatprep.subr.mxu0 0.0
      %2039 = vmatpush1.msra.mxu0 0.0
      %2040 = vmatprep.subr.mxu0 0.0
      %2041 = vmatpush1.msra.mxu0 0.0
      %2042 = vmatprep.subr.mxu0 0.0
      %2043 = vmatpush1.msra.mxu0 0.0
      %2044 = vmatprep.subr.mxu0 0.0
      %2045 = vmatpush1.msra.mxu0 0.0
      %2046 = vmatprep.subr.mxu0 0.0
      %2047 = vmatpush1.msra.mxu0 0.0
      %2048 = vmatprep.mubr.f32.mxu0 0.0
      %2049 = vmatmul.mubr.f32.gmra.mrb[0].mxu0 %v1884
      %v2050 = vpop.f32.mrb[0].mxu0
      %v2051 = vadd.f32 0.0, %v2050
      %v2052 = vpop.f32.mrb[0].mxu0
      %v2053 = vadd.f32 0.0, %v2052
      %2054 = vmatprep.mubr.f32.mxu0 0.0
      %2055 = vmatmul.mubr.f32.gmra.mrb[0].mxu0 %v1887
      %v2056 = vpop.f32.mrb[0].mxu0
      %v2057 = vadd.f32 0.0, %v2056
      %v2058 = vpop.f32.mrb[0].mxu0
      %v2059 = vadd.f32 0.0, %v2058
      %2060 = vmatprep.mubr.f32.mxu0 0.0
      %2061 = vmatmul.mubr.f32.gmra.mrb[0].mxu0 %v1890
      %v2062 = vpop.f32.mrb[0].mxu0
      %v2063 = vadd.f32 0.0, %v2062
      %v2064 = vpop.f32.mrb[0].mxu0
      %v2065 = vadd.f32 0.0, %v2064
      %2066 = vmatprep.mubr.f32.mxu0 0.0
      %2067 = vmatmul.mubr.f32.gmra.mrb[0].mxu0 %v1893
      %v2068 = vpop.f32.mrb[0].mxu0
      %v2069 = vadd.f32 0.0, %v2068
      %v2070 = vpop.f32.mrb[0].mxu0
      %v2071 = vadd.f32 0.0, %v2070
      %2072 = vdwg.mxu0
      %v2073 = vadd.f32 %v1813, %v1962
      %v2074 = vadd.f32 %v1814, %v1964
      %v2075 = vadd.f32 %v1815, %v2051
      %v2076 = vadd.f32 %v1816, %v2053
      %v2077 = vadd.f32 %v1817, %v1968
      %v2078 = vadd.f32 %v1818, %v1970
      %v2079 = vadd.f32 %v1819, %v2057
      %v2080 = vadd.f32 %v1820, %v2059
      %v2081 = vadd.f32 %v1821, %v1974
      %v2082 = vadd.f32 %v1822, %v1976
      %v2083 = vadd.f32 %v1823, %v2063
      %v2084 = vadd.f32 %v1824, %v2065
      %v2085 = vadd.f32 %v1825, %v1980
      %v2086 = vadd.f32 %v1826, %v1982
      %v2087 = vadd.f32 %v1827, %v2069
      %v2088 = vadd.f32 %v1828, %v2071
      %2089 = vrot.lane.b32.xlu0 %v332, 108
      %v2090 = vpop.permute.xlu0 %2089
      %2091 = vrot.lane.b32.xlu0 %v336, 108
      %v2092 = vpop.permute.xlu0 %2091
      %2093 = vrot.lane.b32.xlu0 %v340, 108
      %v2094 = vpop.permute.xlu0 %2093
      %2095 = vrot.lane.b32.xlu0 %v344, 108
      %v2096 = vpop.permute.xlu0 %2095
      %2097 = vrot.lane.b32.xlu0 %v333, 108
      %v2098 = vpop.permute.xlu0 %2097
      %2099 = vrot.lane.b32.xlu0 %v337, 108
      %v2100 = vpop.permute.xlu0 %2099
      %2101 = vrot.lane.b32.xlu0 %v341, 108
      %v2102 = vpop.permute.xlu0 %2101
      %2103 = vrot.lane.b32.xlu0 %v345, 108
      %v2104 = vpop.permute.xlu0 %2103
      %2105 = vrot.lane.b32.xlu0 %v334, 108
      %v2106 = vpop.permute.xlu0 %2105
      %2107 = vrot.lane.b32.xlu0 %v338, 108
      %v2108 = vpop.permute.xlu0 %2107
      %2109 = vrot.lane.b32.xlu0 %v342, 108
      %v2110 = vpop.permute.xlu0 %2109
      %2111 = vrot.lane.b32.xlu0 %v346, 108
      %v2112 = vpop.permute.xlu0 %2111
      %2113 = vrot.lane.b32.xlu0 %v335, 108
      %v2114 = vpop.permute.xlu0 %2113
      %2115 = vrot.lane.b32.xlu0 %v339, 108
      %v2116 = vpop.permute.xlu0 %2115
      %2117 = vrot.lane.b32.xlu0 %v343, 108
      %v2118 = vpop.permute.xlu0 %2117
      %2119 = vrot.lane.b32.xlu0 %v347, 108
      %v2120 = vpop.permute.xlu0 %2119
      %vm2121 = vcmp.lt.s32.totalorder %v381, 108
      %v2122 = vsel %vm2121, %v2106, %v2114
      %v2123 = vsel %vm2121, %v2108, %v2116
      %v2124 = vsel %vm2121, %v2110, %v2118
      %v2125 = vsel %vm2121, %v2112, %v2120
      %v2126 = vsel %vm2121, %v2098, %v2106
      %v2127 = vsel %vm2121, %v2100, %v2108
      %v2128 = vsel %vm2121, %v2102, %v2110
      %v2129 = vsel %vm2121, %v2104, %v2112
      %v2130 = vsel %vm2121, %v2090, %v2098
      %v2131 = vsel %vm2121, %v2092, %v2100
      %v2132 = vsel %vm2121, %v2094, %v2102
      %v2133 = vsel %vm2121, %v2096, %v2104
      %v2134 = vsel %vm2121, %v2114, %v2090
      %v2135 = vsel %vm2121, %v2116, %v2092
      %v2136 = vsel %vm2121, %v2118, %v2094
      %v2137 = vsel %vm2121, %v2120, %v2096
      %s2138 = scalar_lea.vmem %s1, 224
      %v2139 = vld [vmem:[%s2138] sm:$0xff]
      %v2140 = vld [vmem:[%s2138 + $0x8] sm:$0xff]
      %v2141 = vld [vmem:[%s2138 + $0x10] sm:$0xff]
      %v2142 = vld [vmem:[%s2138 + $0x18] sm:$0xff]
      %v2144 = vsel %vm457, %v2139, 0
      %v2147 = vsel %vm457, %v2140, 0
      %v2150 = vsel %vm457, %v2141, 0
      %v2153 = vsel %vm457, %v2142, 0
      %2155 = vmatprep.subr.mxu0 %v2126
      %2156 = vmatpush1.msra.mxu0 %v2130
      %2157 = vmatprep.subr.mxu0 %v2127
      %2158 = vmatpush1.msra.mxu0 %v2131
      %2159 = vmatprep.subr.mxu0 %v2128
      %2160 = vmatpush1.msra.mxu0 %v2132
      %2161 = vmatprep.subr.mxu0 %v2129
      %2162 = vmatpush1.msra.mxu0 %v2133
      %2163 = vmatprep.subr.mxu0 0.0
      %2164 = vmatpush1.msra.mxu0 0.0
      %2165 = vmatprep.subr.mxu0 0.0
      %2166 = vmatpush1.msra.mxu0 0.0
      %2167 = vmatprep.subr.mxu0 0.0
      %2168 = vmatpush1.msra.mxu0 0.0
      %2169 = vmatprep.subr.mxu0 0.0
      %2170 = vmatpush1.msra.mxu0 0.0
      %2171 = vmatprep.subr.mxu0 0.0
      %2172 = vmatpush1.msra.mxu0 0.0
      %2173 = vmatprep.subr.mxu0 0.0
      %2174 = vmatpush1.msra.mxu0 0.0
      %2175 = vmatprep.subr.mxu0 0.0
      %2176 = vmatpush1.msra.mxu0 0.0
      %2177 = vmatprep.subr.mxu0 0.0
      %2178 = vmatpush1.msra.mxu0 0.0
      %2179 = vmatprep.subr.mxu0 0.0
      %2180 = vmatpush1.msra.mxu0 0.0
      %2181 = vmatprep.subr.mxu0 0.0
      %2182 = vmatpush1.msra.mxu0 0.0
      %2183 = vmatprep.subr.mxu0 0.0
      %2184 = vmatpush1.msra.mxu0 0.0
      %2185 = vmatprep.subr.mxu0 0.0
      %2186 = vmatpush1.msra.mxu0 0.0
      %2187 = vmatprep.subr.mxu0 0.0
      %2188 = vmatpush1.msra.mxu0 0.0
      %2189 = vmatprep.subr.mxu0 0.0
      %2190 = vmatpush1.msra.mxu0 0.0
      %2191 = vmatprep.subr.mxu0 0.0
      %2192 = vmatpush1.msra.mxu0 0.0
      %2193 = vmatprep.subr.mxu0 0.0
      %2194 = vmatpush1.msra.mxu0 0.0
      %2195 = vmatprep.subr.mxu0 0.0
      %2196 = vmatpush1.msra.mxu0 0.0
      %2197 = vmatprep.subr.mxu0 0.0
      %2198 = vmatpush1.msra.mxu0 0.0
      %2199 = vmatprep.subr.mxu0 0.0
      %2200 = vmatpush1.msra.mxu0 0.0
      %2201 = vmatprep.subr.mxu0 0.0
      %2202 = vmatpush1.msra.mxu0 0.0
      %2203 = vmatprep.subr.mxu0 0.0
      %2204 = vmatpush1.msra.mxu0 0.0
      %2205 = vmatprep.subr.mxu0 0.0
      %2206 = vmatpush1.msra.mxu0 0.0
      %2207 = vmatprep.subr.mxu0 0.0
      %2208 = vmatpush1.msra.mxu0 0.0
      %2209 = vmatprep.subr.mxu0 0.0
      %2210 = vmatpush1.msra.mxu0 0.0
      %2211 = vmatprep.subr.mxu0 0.0
      %2212 = vmatpush1.msra.mxu0 0.0
      %2213 = vmatprep.subr.mxu0 0.0
      %2214 = vmatpush1.msra.mxu0 0.0
      %2215 = vmatprep.subr.mxu0 0.0
      %2216 = vmatpush1.msra.mxu0 0.0
      %2217 = vmatprep.subr.mxu0 0.0
      %2218 = vmatpush1.msra.mxu0 0.0
      %2219 = vmatprep.mubr.f32.mxu0 0.0
      %2220 = vmatmul.mubr.f32.gmra.mrb[0].mxu0 %v2144
      %v2221 = vpop.f32.mrb[0].mxu0
      %v2222 = vadd.f32 0.0, %v2221
      %v2223 = vpop.f32.mrb[0].mxu0
      %v2224 = vadd.f32 0.0, %v2223
      %2225 = vmatprep.mubr.f32.mxu0 0.0
      %2226 = vmatmul.mubr.f32.gmra.mrb[0].mxu0 %v2147
      %v2227 = vpop.f32.mrb[0].mxu0
      %v2228 = vadd.f32 0.0, %v2227
      %v2229 = vpop.f32.mrb[0].mxu0
      %v2230 = vadd.f32 0.0, %v2229
      %2231 = vmatprep.mubr.f32.mxu0 0.0
      %2232 = vmatmul.mubr.f32.gmra.mrb[0].mxu0 %v2150
      %v2233 = vpop.f32.mrb[0].mxu0
      %v2234 = vadd.f32 0.0, %v2233
      %v2235 = vpop.f32.mrb[0].mxu0
      %v2236 = vadd.f32 0.0, %v2235
      %2237 = vmatprep.mubr.f32.mxu0 0.0
      %2238 = vmatmul.mubr.f32.gmra.mrb[0].mxu0 %v2153
      %v2239 = vpop.f32.mrb[0].mxu0
      %v2240 = vadd.f32 0.0, %v2239
      %v2241 = vpop.f32.mrb[0].mxu0
      %v2242 = vadd.f32 0.0, %v2241
      %2243 = vdwg.mxu0
      %2244 = vmatprep.subr.mxu0 %v2134
      %2245 = vmatpush1.msra.mxu0 %v2122
      %2246 = vmatprep.subr.mxu0 %v2135
      %2247 = vmatpush1.msra.mxu0 %v2123
      %2248 = vmatprep.subr.mxu0 %v2136
      %2249 = vmatpush1.msra.mxu0 %v2124
      %2250 = vmatprep.subr.mxu0 %v2137
      %2251 = vmatpush1.msra.mxu0 %v2125
      %2252 = vmatprep.subr.mxu0 0.0
      %2253 = vmatpush1.msra.mxu0 0.0
      %2254 = vmatprep.subr.mxu0 0.0
      %2255 = vmatpush1.msra.mxu0 0.0
      %2256 = vmatprep.subr.mxu0 0.0
      %2257 = vmatpush1.msra.mxu0 0.0
      %2258 = vmatprep.subr.mxu0 0.0
      %2259 = vmatpush1.msra.mxu0 0.0
      %2260 = vmatprep.subr.mxu0 0.0
      %2261 = vmatpush1.msra.mxu0 0.0
      %2262 = vmatprep.subr.mxu0 0.0
      %2263 = vmatpush1.msra.mxu0 0.0
      %2264 = vmatprep.subr.mxu0 0.0
      %2265 = vmatpush1.msra.mxu0 0.0
      %2266 = vmatprep.subr.mxu0 0.0
      %2267 = vmatpush1.msra.mxu0 0.0
      %2268 = vmatprep.subr.mxu0 0.0
      %2269 = vmatpush1.msra.mxu0 0.0
      %2270 = vmatprep.subr.mxu0 0.0
      %2271 = vmatpush1.msra.mxu0 0.0
      %2272 = vmatprep.subr.mxu0 0.0
      %2273 = vmatpush1.msra.mxu0 0.0
      %2274 = vmatprep.subr.mxu0 0.0
      %2275 = vmatpush1.msra.mxu0 0.0
      %2276 = vmatprep.subr.mxu0 0.0
      %2277 = vmatpush1.msra.mxu0 0.0
      %2278 = vmatprep.subr.mxu0 0.0
      %2279 = vmatpush1.msra.mxu0 0.0
      %2280 = vmatprep.subr.mxu0 0.0
      %2281 = vmatpush1.msra.mxu0 0.0
      %2282 = vmatprep.subr.mxu0 0.0
      %2283 = vmatpush1.msra.mxu0 0.0
      %2284 = vmatprep.subr.mxu0 0.0
      %2285 = vmatpush1.msra.mxu0 0.0
      %2286 = vmatprep.subr.mxu0 0.0
      %2287 = vmatpush1.msra.mxu0 0.0
      %2288 = vmatprep.subr.mxu0 0.0
      %2289 = vmatpush1.msra.mxu0 0.0
      %2290 = vmatprep.subr.mxu0 0.0
      %2291 = vmatpush1.msra.mxu0 0.0
      %2292 = vmatprep.subr.mxu0 0.0
      %2293 = vmatpush1.msra.mxu0 0.0
      %2294 = vmatprep.subr.mxu0 0.0
      %2295 = vmatpush1.msra.mxu0 0.0
      %2296 = vmatprep.subr.mxu0 0.0
      %2297 = vmatpush1.msra.mxu0 0.0
      %2298 = vmatprep.subr.mxu0 0.0
      %2299 = vmatpush1.msra.mxu0 0.0
      %2300 = vmatprep.subr.mxu0 0.0
      %2301 = vmatpush1.msra.mxu0 0.0
      %2302 = vmatprep.subr.mxu0 0.0
      %2303 = vmatpush1.msra.mxu0 0.0
      %2304 = vmatprep.subr.mxu0 0.0
      %2305 = vmatpush1.msra.mxu0 0.0
      %2306 = vmatprep.subr.mxu0 0.0
      %2307 = vmatpush1.msra.mxu0 0.0
      %2308 = vmatprep.mubr.f32.mxu0 0.0
      %2309 = vmatmul.mubr.f32.gmra.mrb[0].mxu0 %v2144
      %v2310 = vpop.f32.mrb[0].mxu0
      %v2311 = vadd.f32 0.0, %v2310
      %v2312 = vpop.f32.mrb[0].mxu0
      %v2313 = vadd.f32 0.0, %v2312
      %2314 = vmatprep.mubr.f32.mxu0 0.0
      %2315 = vmatmul.mubr.f32.gmra.mrb[0].mxu0 %v2147
      %v2316 = vpop.f32.mrb[0].mxu0
      %v2317 = vadd.f32 0.0, %v2316
      %v2318 = vpop.f32.mrb[0].mxu0
      %v2319 = vadd.f32 0.0, %v2318
      %2320 = vmatprep.mubr.f32.mxu0 0.0
      %2321 = vmatmul.mubr.f32.gmra.mrb[0].mxu0 %v2150
      %v2322 = vpop.f32.mrb[0].mxu0
      %v2323 = vadd.f32 0.0, %v2322
      %v2324 = vpop.f32.mrb[0].mxu0
      %v2325 = vadd.f32 0.0, %v2324
      %2326 = vmatprep.mubr.f32.mxu0 0.0
      %2327 = vmatmul.mubr.f32.gmra.mrb[0].mxu0 %v2153
      %v2328 = vpop.f32.mrb[0].mxu0
      %v2329 = vadd.f32 0.0, %v2328
      %v2330 = vpop.f32.mrb[0].mxu0
      %v2331 = vadd.f32 0.0, %v2330
      %2332 = vdwg.mxu0
      %v2333 = vadd.f32 %v2073, %v2222
      %v2334 = vadd.f32 %v2074, %v2224
      %v2335 = vadd.f32 %v2075, %v2311
      %v2336 = vadd.f32 %v2076, %v2313
      %v2337 = vadd.f32 %v2077, %v2228
      %v2338 = vadd.f32 %v2078, %v2230
      %v2339 = vadd.f32 %v2079, %v2317
      %v2340 = vadd.f32 %v2080, %v2319
      %v2341 = vadd.f32 %v2081, %v2234
      %v2342 = vadd.f32 %v2082, %v2236
      %v2343 = vadd.f32 %v2083, %v2323
      %v2344 = vadd.f32 %v2084, %v2325
      %v2345 = vadd.f32 %v2085, %v2240
      %v2346 = vadd.f32 %v2086, %v2242
      %v2347 = vadd.f32 %v2087, %v2329
      %v2348 = vadd.f32 %v2088, %v2331
      %2349 = vrot.lane.b32.xlu0 %v332, 107
      %v2350 = vpop.permute.xlu0 %2349
      %2351 = vrot.lane.b32.xlu0 %v336, 107
      %v2352 = vpop.permute.xlu0 %2351
      %2353 = vrot.lane.b32.xlu0 %v340, 107
      %v2354 = vpop.permute.xlu0 %2353
      %2355 = vrot.lane.b32.xlu0 %v344, 107
      %v2356 = vpop.permute.xlu0 %2355
      %2357 = vrot.lane.b32.xlu0 %v333, 107
      %v2358 = vpop.permute.xlu0 %2357
      %2359 = vrot.lane.b32.xlu0 %v337, 107
      %v2360 = vpop.permute.xlu0 %2359
      %2361 = vrot.lane.b32.xlu0 %v341, 107
      %v2362 = vpop.permute.xlu0 %2361
      %2363 = vrot.lane.b32.xlu0 %v345, 107
      %v2364 = vpop.permute.xlu0 %2363
      %2365 = vrot.lane.b32.xlu0 %v334, 107
      %v2366 = vpop.permute.xlu0 %2365
      %2367 = vrot.lane.b32.xlu0 %v338, 107
      %v2368 = vpop.permute.xlu0 %2367
      %2369 = vrot.lane.b32.xlu0 %v342, 107
      %v2370 = vpop.permute.xlu0 %2369
      %2371 = vrot.lane.b32.xlu0 %v346, 107
      %v2372 = vpop.permute.xlu0 %2371
      %2373 = vrot.lane.b32.xlu0 %v335, 107
      %v2374 = vpop.permute.xlu0 %2373
      %2375 = vrot.lane.b32.xlu0 %v339, 107
      %v2376 = vpop.permute.xlu0 %2375
      %2377 = vrot.lane.b32.xlu0 %v343, 107
      %v2378 = vpop.permute.xlu0 %2377
      %2379 = vrot.lane.b32.xlu0 %v347, 107
      %v2380 = vpop.permute.xlu0 %2379
      %vm2381 = vcmp.lt.s32.totalorder %v381, 107
      %v2382 = vsel %vm2381, %v2366, %v2374
      %v2383 = vsel %vm2381, %v2368, %v2376
      %v2384 = vsel %vm2381, %v2370, %v2378
      %v2385 = vsel %vm2381, %v2372, %v2380
      %v2386 = vsel %vm2381, %v2358, %v2366
      %v2387 = vsel %vm2381, %v2360, %v2368
      %v2388 = vsel %vm2381, %v2362, %v2370
      %v2389 = vsel %vm2381, %v2364, %v2372
      %v2390 = vsel %vm2381, %v2350, %v2358
      %v2391 = vsel %vm2381, %v2352, %v2360
      %v2392 = vsel %vm2381, %v2354, %v2362
      %v2393 = vsel %vm2381, %v2356, %v2364
      %v2394 = vsel %vm2381, %v2374, %v2350
      %v2395 = vsel %vm2381, %v2376, %v2352
      %v2396 = vsel %vm2381, %v2378, %v2354
      %v2397 = vsel %vm2381, %v2380, %v2356
      %s2398 = scalar_lea.vmem %s1, 256
      %v2399 = vld [vmem:[%s2398] sm:$0xff]
      %v2400 = vld [vmem:[%s2398 + $0x8] sm:$0xff]
      %v2401 = vld [vmem:[%s2398 + $0x10] sm:$0xff]
      %v2402 = vld [vmem:[%s2398 + $0x18] sm:$0xff]
      %v2404 = vsel %vm457, %v2399, 0
      %v2407 = vsel %vm457, %v2400, 0
      %v2410 = vsel %vm457, %v2401, 0
      %v2413 = vsel %vm457, %v2402, 0
      %2415 = vmatprep.subr.mxu0 %v2386
      %2416 = vmatpush1.msra.mxu0 %v2390
      %2417 = vmatprep.subr.mxu0 %v2387
      %2418 = vmatpush1.msra.mxu0 %v2391
      %2419 = vmatprep.subr.mxu0 %v2388
      %2420 = vmatpush1.msra.mxu0 %v2392
      %2421 = vmatprep.subr.mxu0 %v2389
      %2422 = vmatpush1.msra.mxu0 %v2393
      %2423 = vmatprep.subr.mxu0 0.0
      %2424 = vmatpush1.msra.mxu0 0.0
      %2425 = vmatprep.subr.mxu0 0.0
      %2426 = vmatpush1.msra.mxu0 0.0
      %2427 = vmatprep.subr.mxu0 0.0
      %2428 = vmatpush1.msra.mxu0 0.0
      %2429 = vmatprep.subr.mxu0 0.0
      %2430 = vmatpush1.msra.mxu0 0.0
      %2431 = vmatprep.subr.mxu0 0.0
      %2432 = vmatpush1.msra.mxu0 0.0
      %2433 = vmatprep.subr.mxu0 0.0
      %2434 = vmatpush1.msra.mxu0 0.0
      %2435 = vmatprep.subr.mxu0 0.0
      %2436 = vmatpush1.msra.mxu0 0.0
      %2437 = vmatprep.subr.mxu0 0.0
      %2438 = vmatpush1.msra.mxu0 0.0
      %2439 = vmatprep.subr.mxu0 0.0
      %2440 = vmatpush1.msra.mxu0 0.0
      %2441 = vmatprep.subr.mxu0 0.0
      %2442 = vmatpush1.msra.mxu0 0.0
      %2443 = vmatprep.subr.mxu0 0.0
      %2444 = vmatpush1.msra.mxu0 0.0
      %2445 = vmatprep.subr.mxu0 0.0
      %2446 = vmatpush1.msra.mxu0 0.0
      %2447 = vmatprep.subr.mxu0 0.0
      %2448 = vmatpush1.msra.mxu0 0.0
      %2449 = vmatprep.subr.mxu0 0.0
      %2450 = vmatpush1.msra.mxu0 0.0
      %2451 = vmatprep.subr.mxu0 0.0
      %2452 = vmatpush1.msra.mxu0 0.0
      %2453 = vmatprep.subr.mxu0 0.0
      %2454 = vmatpush1.msra.mxu0 0.0
      %2455 = vmatprep.subr.mxu0 0.0
      %2456 = vmatpush1.msra.mxu0 0.0
      %2457 = vmatprep.subr.mxu0 0.0
      %2458 = vmatpush1.msra.mxu0 0.0
      %2459 = vmatprep.subr.mxu0 0.0
      %2460 = vmatpush1.msra.mxu0 0.0
      %2461 = vmatprep.subr.mxu0 0.0
      %2462 = vmatpush1.msra.mxu0 0.0
      %2463 = vmatprep.subr.mxu0 0.0
      %2464 = vmatpush1.msra.mxu0 0.0
      %2465 = vmatprep.subr.mxu0 0.0
      %2466 = vmatpush1.msra.mxu0 0.0
      %2467 = vmatprep.subr.mxu0 0.0
      %2468 = vmatpush1.msra.mxu0 0.0
      %2469 = vmatprep.subr.mxu0 0.0
      %2470 = vmatpush1.msra.mxu0 0.0
      %2471 = vmatprep.subr.mxu0 0.0
      %2472 = vmatpush1.msra.mxu0 0.0
      %2473 = vmatprep.subr.mxu0 0.0
      %2474 = vmatpush1.msra.mxu0 0.0
      %2475 = vmatprep.subr.mxu0 0.0
      %2476 = vmatpush1.msra.mxu0 0.0
      %2477 = vmatprep.subr.mxu0 0.0
      %2478 = vmatpush1.msra.mxu0 0.0
      %2479 = vmatprep.mubr.f32.mxu0 0.0
      %2480 = vmatmul.mubr.f32.gmra.mrb[0].mxu0 %v2404
      %v2481 = vpop.f32.mrb[0].mxu0
      %v2482 = vadd.f32 0.0, %v2481
      %v2483 = vpop.f32.mrb[0].mxu0
      %v2484 = vadd.f32 0.0, %v2483
      %2485 = vmatprep.mubr.f32.mxu0 0.0
      %2486 = vmatmul.mubr.f32.gmra.mrb[0].mxu0 %v2407
      %v2487 = vpop.f32.mrb[0].mxu0
      %v2488 = vadd.f32 0.0, %v2487
      %v2489 = vpop.f32.mrb[0].mxu0
      %v2490 = vadd.f32 0.0, %v2489
      %2491 = vmatprep.mubr.f32.mxu0 0.0
      %2492 = vmatmul.mubr.f32.gmra.mrb[0].mxu0 %v2410
      %v2493 = vpop.f32.mrb[0].mxu0
      %v2494 = vadd.f32 0.0, %v2493
      %v2495 = vpop.f32.mrb[0].mxu0
      %v2496 = vadd.f32 0.0, %v2495
      %2497 = vmatprep.mubr.f32.mxu0 0.0
      %2498 = vmatmul.mubr.f32.gmra.mrb[0].mxu0 %v2413
      %v2499 = vpop.f32.mrb[0].mxu0
      %v2500 = vadd.f32 0.0, %v2499
      %v2501 = vpop.f32.mrb[0].mxu0
      %v2502 = vadd.f32 0.0, %v2501
      %2503 = vdwg.mxu0
      %2504 = vmatprep.subr.mxu0 %v2394
      %2505 = vmatpush1.msra.mxu0 %v2382
      %2506 = vmatprep.subr.mxu0 %v2395
      %2507 = vmatpush1.msra.mxu0 %v2383
      %2508 = vmatprep.subr.mxu0 %v2396
      %2509 = vmatpush1.msra.mxu0 %v2384
      %2510 = vmatprep.subr.mxu0 %v2397
      %2511 = vmatpush1.msra.mxu0 %v2385
      %2512 = vmatprep.subr.mxu0 0.0
      %2513 = vmatpush1.msra.mxu0 0.0
      %2514 = vmatprep.subr.mxu0 0.0
      %2515 = vmatpush1.msra.mxu0 0.0
      %2516 = vmatprep.subr.mxu0 0.0
      %2517 = vmatpush1.msra.mxu0 0.0
      %2518 = vmatprep.subr.mxu0 0.0
      %2519 = vmatpush1.msra.mxu0 0.0
      %2520 = vmatprep.subr.mxu0 0.0
      %2521 = vmatpush1.msra.mxu0 0.0
      %2522 = vmatprep.subr.mxu0 0.0
      %2523 = vmatpush1.msra.mxu0 0.0
      %2524 = vmatprep.subr.mxu0 0.0
      %2525 = vmatpush1.msra.mxu0 0.0
      %2526 = vmatprep.subr.mxu0 0.0
      %2527 = vmatpush1.msra.mxu0 0.0
      %2528 = vmatprep.subr.mxu0 0.0
      %2529 = vmatpush1.msra.mxu0 0.0
      %2530 = vmatprep.subr.mxu0 0.0
      %2531 = vmatpush1.msra.mxu0 0.0
      %2532 = vmatprep.subr.mxu0 0.0
      %2533 = vmatpush1.msra.mxu0 0.0
      %2534 = vmatprep.subr.mxu0 0.0
      %2535 = vmatpush1.msra.mxu0 0.0
      %2536 = vmatprep.subr.mxu0 0.0
      %2537 = vmatpush1.msra.mxu0 0.0
      %2538 = vmatprep.subr.mxu0 0.0
      %2539 = vmatpush1.msra.mxu0 0.0
      %2540 = vmatprep.subr.mxu0 0.0
      %2541 = vmatpush1.msra.mxu0 0.0
      %2542 = vmatprep.subr.mxu0 0.0
      %2543 = vmatpush1.msra.mxu0 0.0
      %2544 = vmatprep.subr.mxu0 0.0
      %2545 = vmatpush1.msra.mxu0 0.0
      %2546 = vmatprep.subr.mxu0 0.0
      %2547 = vmatpush1.msra.mxu0 0.0
      %2548 = vmatprep.subr.mxu0 0.0
      %2549 = vmatpush1.msra.mxu0 0.0
      %2550 = vmatprep.subr.mxu0 0.0
      %2551 = vmatpush1.msra.mxu0 0.0
      %2552 = vmatprep.subr.mxu0 0.0
      %2553 = vmatpush1.msra.mxu0 0.0
      %2554 = vmatprep.subr.mxu0 0.0
      %2555 = vmatpush1.msra.mxu0 0.0
      %2556 = vmatprep.subr.mxu0 0.0
      %2557 = vmatpush1.msra.mxu0 0.0
      %2558 = vmatprep.subr.mxu0 0.0
      %2559 = vmatpush1.msra.mxu0 0.0
      %2560 = vmatprep.subr.mxu0 0.0
      %2561 = vmatpush1.msra.mxu0 0.0
      %2562 = vmatprep.subr.mxu0 0.0
      %2563 = vmatpush1.msra.mxu0 0.0
      %2564 = vmatprep.subr.mxu0 0.0
      %2565 = vmatpush1.msra.mxu0 0.0
      %2566 = vmatprep.subr.mxu0 0.0
      %2567 = vmatpush1.msra.mxu0 0.0
      %2568 = vmatprep.mubr.f32.mxu0 0.0
      %2569 = vmatmul.mubr.f32.gmra.mrb[0].mxu0 %v2404
      %v2570 = vpop.f32.mrb[0].mxu0
      %v2571 = vadd.f32 0.0, %v2570
      %v2572 = vpop.f32.mrb[0].mxu0
      %v2573 = vadd.f32 0.0, %v2572
      %2574 = vmatprep.mubr.f32.mxu0 0.0
      %2575 = vmatmul.mubr.f32.gmra.mrb[0].mxu0 %v2407
      %v2576 = vpop.f32.mrb[0].mxu0
      %v2577 = vadd.f32 0.0, %v2576
      %v2578 = vpop.f32.mrb[0].mxu0
      %v2579 = vadd.f32 0.0, %v2578
      %2580 = vmatprep.mubr.f32.mxu0 0.0
      %2581 = vmatmul.mubr.f32.gmra.mrb[0].mxu0 %v2410
      %v2582 = vpop.f32.mrb[0].mxu0
      %v2583 = vadd.f32 0.0, %v2582
      %v2584 = vpop.f32.mrb[0].mxu0
      %v2585 = vadd.f32 0.0, %v2584
      %2586 = vmatprep.mubr.f32.mxu0 0.0
      %2587 = vmatmul.mubr.f32.gmra.mrb[0].mxu0 %v2413
      %v2588 = vpop.f32.mrb[0].mxu0
      %v2589 = vadd.f32 0.0, %v2588
      %v2590 = vpop.f32.mrb[0].mxu0
      %v2591 = vadd.f32 0.0, %v2590
      %2592 = vdwg.mxu0
      %v2593 = vadd.f32 %v2333, %v2482
      %v2594 = vadd.f32 %v2334, %v2484
      %v2595 = vadd.f32 %v2335, %v2571
      %v2596 = vadd.f32 %v2336, %v2573
      %v2597 = vadd.f32 %v2337, %v2488
      %v2598 = vadd.f32 %v2338, %v2490
      %v2599 = vadd.f32 %v2339, %v2577
      %v2600 = vadd.f32 %v2340, %v2579
      %v2601 = vadd.f32 %v2341, %v2494
      %v2602 = vadd.f32 %v2342, %v2496
      %v2603 = vadd.f32 %v2343, %v2583
      %v2604 = vadd.f32 %v2344, %v2585
      %v2605 = vadd.f32 %v2345, %v2500
      %v2606 = vadd.f32 %v2346, %v2502
      %v2607 = vadd.f32 %v2347, %v2589
      %v2608 = vadd.f32 %v2348, %v2591
      %v2609 = vld [vmem:[%s2] sm:$0xff]
      %v2610 = vld [vmem:[%s2 + $0x8] sm:$0xff]
      %v2611 = vld [vmem:[%s2 + $0x10] sm:$0xff]
      %v2612 = vld [vmem:[%s2 + $0x18] sm:$0xff]
      %2614 = vset.pattern.permute.xlu0 0
      %2615 = vperm.xlu0 %2614, %v2609
      %v2616 = vpop.permute.xlu0 %2615
      %2619 = vset.pattern.permute.xlu0 0
      %2620 = vperm.xlu0 %2619, %v2610
      %v2621 = vpop.permute.xlu0 %2620
      %2624 = vset.pattern.permute.xlu0 0
      %2625 = vperm.xlu0 %2624, %v2611
      %v2626 = vpop.permute.xlu0 %2625
      %2629 = vset.pattern.permute.xlu0 0
      %2630 = vperm.xlu0 %2629, %v2612
      %v2631 = vpop.permute.xlu0 %2630
      %v2633 = vadd.f32 %v2593, %v2616
      %v2634 = vadd.f32 %v2594, %v2616
      %v2635 = vadd.f32 %v2595, %v2616
      %v2636 = vadd.f32 %v2596, %v2616
      %v2637 = vadd.f32 %v2597, %v2621
      %v2638 = vadd.f32 %v2598, %v2621
      %v2639 = vadd.f32 %v2599, %v2621
      %v2640 = vadd.f32 %v2600, %v2621
      %v2641 = vadd.f32 %v2601, %v2626
      %v2642 = vadd.f32 %v2602, %v2626
      %v2643 = vadd.f32 %v2603, %v2626
      %v2644 = vadd.f32 %v2604, %v2626
      %v2645 = vadd.f32 %v2605, %v2631
      %v2646 = vadd.f32 %v2606, %v2631
      %v2647 = vadd.f32 %v2607, %v2631
      %v2648 = vadd.f32 %v2608, %v2631
      %v2649 = vmax.f32 %v2633, 0.0
      %v2650 = vmax.f32 %v2634, 0.0
      %v2651 = vmax.f32 %v2635, 0.0
      %v2652 = vmax.f32 %v2636, 0.0
      %v2653 = vmax.f32 %v2637, 0.0
      %v2654 = vmax.f32 %v2638, 0.0
      %v2655 = vmax.f32 %v2639, 0.0
      %v2656 = vmax.f32 %v2640, 0.0
      %v2657 = vmax.f32 %v2641, 0.0
      %v2658 = vmax.f32 %v2642, 0.0
      %v2659 = vmax.f32 %v2643, 0.0
      %v2660 = vmax.f32 %v2644, 0.0
      %v2661 = vmax.f32 %v2645, 0.0
      %v2662 = vmax.f32 %v2646, 0.0
      %v2663 = vmax.f32 %v2647, 0.0
      %v2664 = vmax.f32 %v2648, 0.0
      %v2665 = vld [vmem:[%s3] sm:$0xf]
      %v2667 = vlaneseq
      %v2668 = vshrl.u32 %v2667, 7
      %v2669 = vsub.s32 0, %v2668
      %v2670 = vrot.slane %v2665, %v2669
      %v2671 = vlaneseq
      %v2672 = vshrl.u32 %v2671, 7
      %v2673 = vsub.s32 1, %v2672
      %v2674 = vrot.slane %v2665, %v2673
      %v2675 = vlaneseq
      %v2676 = vshrl.u32 %v2675, 7
      %v2677 = vsub.s32 2, %v2676
      %v2678 = vrot.slane %v2665, %v2677
      %v2679 = vlaneseq
      %v2680 = vshrl.u32 %v2679, 7
      %v2681 = vsub.s32 3, %v2680
      %v2682 = vrot.slane %v2665, %v2681
      %v2687 = vmul.f32 %v2649, %v2670
      %v2688 = vmul.f32 %v2650, %v2674
      %v2689 = vmul.f32 %v2651, %v2678
      %v2690 = vmul.f32 %v2652, %v2682
      %v2691 = vmul.f32 %v2653, %v2670
      %v2692 = vmul.f32 %v2654, %v2674
      %v2693 = vmul.f32 %v2655, %v2678
      %v2694 = vmul.f32 %v2656, %v2682
      %v2695 = vmul.f32 %v2657, %v2670
      %v2696 = vmul.f32 %v2658, %v2674
      %v2697 = vmul.f32 %v2659, %v2678
      %v2698 = vmul.f32 %v2660, %v2682
      %v2699 = vmul.f32 %v2661, %v2670
      %v2700 = vmul.f32 %v2662, %v2674
      %v2701 = vmul.f32 %v2663, %v2678
      %v2702 = vmul.f32 %v2664, %v2682
      %2703 = vrot.lane.b32.xlu0 %v2687, 21
      %v2704 = vpop.permute.xlu0 %2703
      %2705 = vrot.lane.b32.xlu0 %v2691, 21
      %v2706 = vpop.permute.xlu0 %2705
      %2707 = vrot.lane.b32.xlu0 %v2695, 21
      %v2708 = vpop.permute.xlu0 %2707
      %2709 = vrot.lane.b32.xlu0 %v2699, 21
      %v2710 = vpop.permute.xlu0 %2709
      %2711 = vrot.lane.b32.xlu0 %v2688, 21
      %v2712 = vpop.permute.xlu0 %2711
      %2713 = vrot.lane.b32.xlu0 %v2692, 21
      %v2714 = vpop.permute.xlu0 %2713
      %2715 = vrot.lane.b32.xlu0 %v2696, 21
      %v2716 = vpop.permute.xlu0 %2715
      %2717 = vrot.lane.b32.xlu0 %v2700, 21
      %v2718 = vpop.permute.xlu0 %2717
      %2719 = vrot.lane.b32.xlu0 %v2689, 21
      %v2720 = vpop.permute.xlu0 %2719
      %2721 = vrot.lane.b32.xlu0 %v2693, 21
      %v2722 = vpop.permute.xlu0 %2721
      %2723 = vrot.lane.b32.xlu0 %v2697, 21
      %v2724 = vpop.permute.xlu0 %2723
      %2725 = vrot.lane.b32.xlu0 %v2701, 21
      %v2726 = vpop.permute.xlu0 %2725
      %2727 = vrot.lane.b32.xlu0 %v2690, 21
      %v2728 = vpop.permute.xlu0 %2727
      %2729 = vrot.lane.b32.xlu0 %v2694, 21
      %v2730 = vpop.permute.xlu0 %2729
      %2731 = vrot.lane.b32.xlu0 %v2698, 21
      %v2732 = vpop.permute.xlu0 %2731
      %2733 = vrot.lane.b32.xlu0 %v2702, 21
      %v2734 = vpop.permute.xlu0 %2733
      %v2735 = vsel %vm382, %v2720, %v2728
      %v2736 = vsel %vm382, %v2722, %v2730
      %v2737 = vsel %vm382, %v2724, %v2732
      %v2738 = vsel %vm382, %v2726, %v2734
      %v2739 = vsel %vm382, %v2712, %v2720
      %v2740 = vsel %vm382, %v2714, %v2722
      %v2741 = vsel %vm382, %v2716, %v2724
      %v2742 = vsel %vm382, %v2718, %v2726
      %v2743 = vsel %vm382, %v2704, %v2712
      %v2744 = vsel %vm382, %v2706, %v2714
      %v2745 = vsel %vm382, %v2708, %v2716
      %v2746 = vsel %vm382, %v2710, %v2718
      %v2747 = vsel %vm382, %v2728, %v2704
      %v2748 = vsel %vm382, %v2730, %v2706
      %v2749 = vsel %vm382, %v2732, %v2708
      %v2750 = vsel %vm382, %v2734, %v2710
      %v2751 = vld [vmem:[%s4] sm:$0xff]
      %v2752 = vld [vmem:[%s4 + $0x8] sm:$0xff]
      %v2753 = vld [vmem:[%s4 + $0x10] sm:$0xff]
      %v2754 = vld [vmem:[%s4 + $0x18] sm:$0xff]
      %2755 = vrot.lane.b32.xlu0 %v2687, 20
      %v2756 = vpop.permute.xlu0 %2755
      %2757 = vrot.lane.b32.xlu0 %v2691, 20
      %v2758 = vpop.permute.xlu0 %2757
      %2759 = vrot.lane.b32.xlu0 %v2695, 20
      %v2760 = vpop.permute.xlu0 %2759
      %2761 = vrot.lane.b32.xlu0 %v2699, 20
      %v2762 = vpop.permute.xlu0 %2761
      %2763 = vrot.lane.b32.xlu0 %v2688, 20
      %v2764 = vpop.permute.xlu0 %2763
      %2765 = vrot.lane.b32.xlu0 %v2692, 20
      %v2766 = vpop.permute.xlu0 %2765
      %2767 = vrot.lane.b32.xlu0 %v2696, 20
      %v2768 = vpop.permute.xlu0 %2767
      %2769 = vrot.lane.b32.xlu0 %v2700, 20
      %v2770 = vpop.permute.xlu0 %2769
      %2771 = vrot.lane.b32.xlu0 %v2689, 20
      %v2772 = vpop.permute.xlu0 %2771
      %2773 = vrot.lane.b32.xlu0 %v2693, 20
      %v2774 = vpop.permute.xlu0 %2773
      %2775 = vrot.lane.b32.xlu0 %v2697, 20
      %v2776 = vpop.permute.xlu0 %2775
      %2777 = vrot.lane.b32.xlu0 %v2701, 20
      %v2778 = vpop.permute.xlu0 %2777
      %2779 = vrot.lane.b32.xlu0 %v2690, 20
      %v2780 = vpop.permute.xlu0 %2779
      %2781 = vrot.lane.b32.xlu0 %v2694, 20
      %v2782 = vpop.permute.xlu0 %2781
      %2783 = vrot.lane.b32.xlu0 %v2698, 20
      %v2784 = vpop.permute.xlu0 %2783
      %2785 = vrot.lane.b32.xlu0 %v2702, 20
      %v2786 = vpop.permute.xlu0 %2785
      %v2787 = vsel %vm435, %v2772, %v2780
      %v2788 = vsel %vm435, %v2774, %v2782
      %v2789 = vsel %vm435, %v2776, %v2784
      %v2790 = vsel %vm435, %v2778, %v2786
      %v2791 = vsel %vm435, %v2764, %v2772
      %v2792 = vsel %vm435, %v2766, %v2774
      %v2793 = vsel %vm435, %v2768, %v2776
      %v2794 = vsel %vm435, %v2770, %v2778
      %v2795 = vsel %vm435, %v2756, %v2764
      %v2796 = vsel %vm435, %v2758, %v2766
      %v2797 = vsel %vm435, %v2760, %v2768
      %v2798 = vsel %vm435, %v2762, %v2770
      %v2799 = vsel %vm435, %v2780, %v2756
      %v2800 = vsel %vm435, %v2782, %v2758
      %v2801 = vsel %vm435, %v2784, %v2760
      %v2802 = vsel %vm435, %v2786, %v2762
      %s2803 = scalar_lea.vmem %s4, 32
      %v2804 = vld [vmem:[%s2803] sm:$0xff]
      %v2805 = vld [vmem:[%s2803 + $0x8] sm:$0xff]
      %v2806 = vld [vmem:[%s2803 + $0x10] sm:$0xff]
      %v2807 = vld [vmem:[%s2803 + $0x18] sm:$0xff]
      %v2809 = vsel %vm457, %v2804, 0
      %v2812 = vsel %vm457, %v2805, 0
      %v2815 = vsel %vm457, %v2806, 0
      %v2818 = vsel %vm457, %v2807, 0
      %2820 = vmatprep.subr.mxu0 %v2795
      %2821 = vmatpush1.msra.mxu0 %v2799
      %2822 = vmatprep.subr.mxu0 %v2796
      %2823 = vmatpush1.msra.mxu0 %v2800
      %2824 = vmatprep.subr.mxu0 %v2797
      %2825 = vmatpush1.msra.mxu0 %v2801
      %2826 = vmatprep.subr.mxu0 %v2798
      %2827 = vmatpush1.msra.mxu0 %v2802
      %2828 = vmatprep.subr.mxu0 0.0
      %2829 = vmatpush1.msra.mxu0 0.0
      %2830 = vmatprep.subr.mxu0 0.0
      %2831 = vmatpush1.msra.mxu0 0.0
      %2832 = vmatprep.subr.mxu0 0.0
      %2833 = vmatpush1.msra.mxu0 0.0
      %2834 = vmatprep.subr.mxu0 0.0
      %2835 = vmatpush1.msra.mxu0 0.0
      %2836 = vmatprep.subr.mxu0 0.0
      %2837 = vmatpush1.msra.mxu0 0.0
      %2838 = vmatprep.subr.mxu0 0.0
      %2839 = vmatpush1.msra.mxu0 0.0
      %2840 = vmatprep.subr.mxu0 0.0
      %2841 = vmatpush1.msra.mxu0 0.0
      %2842 = vmatprep.subr.mxu0 0.0
      %2843 = vmatpush1.msra.mxu0 0.0
      %2844 = vmatprep.subr.mxu0 0.0
      %2845 = vmatpush1.msra.mxu0 0.0
      %2846 = vmatprep.subr.mxu0 0.0
      %2847 = vmatpush1.msra.mxu0 0.0
      %2848 = vmatprep.subr.mxu0 0.0
      %2849 = vmatpush1.msra.mxu0 0.0
      %2850 = vmatprep.subr.mxu0 0.0
      %2851 = vmatpush1.msra.mxu0 0.0
      %2852 = vmatprep.subr.mxu0 0.0
      %2853 = vmatpush1.msra.mxu0 0.0
      %2854 = vmatprep.subr.mxu0 0.0
      %2855 = vmatpush1.msra.mxu0 0.0
      %2856 = vmatprep.subr.mxu0 0.0
      %2857 = vmatpush1.msra.mxu0 0.0
      %2858 = vmatprep.subr.mxu0 0.0
      %2859 = vmatpush1.msra.mxu0 0.0
      %2860 = vmatprep.subr.mxu0 0.0
      %2861 = vmatpush1.msra.mxu0 0.0
      %2862 = vmatprep.subr.mxu0 0.0
      %2863 = vmatpush1.msra.mxu0 0.0
      %2864 = vmatprep.subr.mxu0 0.0
      %2865 = vmatpush1.msra.mxu0 0.0
      %2866 = vmatprep.subr.mxu0 0.0
      %2867 = vmatpush1.msra.mxu0 0.0
      %2868 = vmatprep.subr.mxu0 0.0
      %2869 = vmatpush1.msra.mxu0 0.0
      %2870 = vmatprep.subr.mxu0 0.0
      %2871 = vmatpush1.msra.mxu0 0.0
      %2872 = vmatprep.subr.mxu0 0.0
      %2873 = vmatpush1.msra.mxu0 0.0
      %2874 = vmatprep.subr.mxu0 0.0
      %2875 = vmatpush1.msra.mxu0 0.0
      %2876 = vmatprep.subr.mxu0 0.0
      %2877 = vmatpush1.msra.mxu0 0.0
      %2878 = vmatprep.subr.mxu0 0.0
      %2879 = vmatpush1.msra.mxu0 0.0
      %2880 = vmatprep.subr.mxu0 0.0
      %2881 = vmatpush1.msra.mxu0 0.0
      %2882 = vmatprep.subr.mxu0 0.0
      %2883 = vmatpush1.msra.mxu0 0.0
      %2884 = vmatprep.mubr.f32.mxu0 0.0
      %2885 = vmatmul.mubr.f32.gmra.mrb[0].mxu0 %v2809
      %v2886 = vpop.f32.mrb[0].mxu0
      %v2887 = vadd.f32 0.0, %v2886
      %v2888 = vpop.f32.mrb[0].mxu0
      %v2889 = vadd.f32 0.0, %v2888
      %2890 = vmatprep.mubr.f32.mxu0 0.0
      %2891 = vmatmul.mubr.f32.gmra.mrb[0].mxu0 %v2812
      %v2892 = vpop.f32.mrb[0].mxu0
      %v2893 = vadd.f32 0.0, %v2892
      %v2894 = vpop.f32.mrb[0].mxu0
      %v2895 = vadd.f32 0.0, %v2894
      %2896 = vmatprep.mubr.f32.mxu0 0.0
      %2897 = vmatmul.mubr.f32.gmra.mrb[0].mxu0 %v2815
      %v2898 = vpop.f32.mrb[0].mxu0
      %v2899 = vadd.f32 0.0, %v2898
      %v2900 = vpop.f32.mrb[0].mxu0
      %v2901 = vadd.f32 0.0, %v2900
      %2902 = vmatprep.mubr.f32.mxu0 0.0
      %2903 = vmatmul.mubr.f32.gmra.mrb[0].mxu0 %v2818
      %v2904 = vpop.f32.mrb[0].mxu0
      %v2905 = vadd.f32 0.0, %v2904
      %v2906 = vpop.f32.mrb[0].mxu0
      %v2907 = vadd.f32 0.0, %v2906
      %2908 = vdwg.mxu0
      %2909 = vmatprep.subr.mxu0 %v2787
      %2910 = vmatpush1.msra.mxu0 %v2791
      %2911 = vmatprep.subr.mxu0 %v2788
      %2912 = vmatpush1.msra.mxu0 %v2792
      %2913 = vmatprep.subr.mxu0 %v2789
      %2914 = vmatpush1.msra.mxu0 %v2793
      %2915 = vmatprep.subr.mxu0 %v2790
      %2916 = vmatpush1.msra.mxu0 %v2794
      %2917 = vmatprep.subr.mxu0 0.0
      %2918 = vmatpush1.msra.mxu0 0.0
      %2919 = vmatprep.subr.mxu0 0.0
      %2920 = vmatpush1.msra.mxu0 0.0
      %2921 = vmatprep.subr.mxu0 0.0
      %2922 = vmatpush1.msra.mxu0 0.0
      %2923 = vmatprep.subr.mxu0 0.0
      %2924 = vmatpush1.msra.mxu0 0.0
      %2925 = vmatprep.subr.mxu0 0.0
      %2926 = vmatpush1.msra.mxu0 0.0
      %2927 = vmatprep.subr.mxu0 0.0
      %2928 = vmatpush1.msra.mxu0 0.0
      %2929 = vmatprep.subr.mxu0 0.0
      %2930 = vmatpush1.msra.mxu0 0.0
      %2931 = vmatprep.subr.mxu0 0.0
      %2932 = vmatpush1.msra.mxu0 0.0
      %2933 = vmatprep.subr.mxu0 0.0
      %2934 = vmatpush1.msra.mxu0 0.0
      %2935 = vmatprep.subr.mxu0 0.0
      %2936 = vmatpush1.msra.mxu0 0.0
      %2937 = vmatprep.subr.mxu0 0.0
      %2938 = vmatpush1.msra.mxu0 0.0
      %2939 = vmatprep.subr.mxu0 0.0
      %2940 = vmatpush1.msra.mxu0 0.0
      %2941 = vmatprep.subr.mxu0 0.0
      %2942 = vmatpush1.msra.mxu0 0.0
      %2943 = vmatprep.subr.mxu0 0.0
      %2944 = vmatpush1.msra.mxu0 0.0
      %2945 = vmatprep.subr.mxu0 0.0
      %2946 = vmatpush1.msra.mxu0 0.0
      %2947 = vmatprep.subr.mxu0 0.0
      %2948 = vmatpush1.msra.mxu0 0.0
      %2949 = vmatprep.subr.mxu0 0.0
      %2950 = vmatpush1.msra.mxu0 0.0
      %2951 = vmatprep.subr.mxu0 0.0
      %2952 = vmatpush1.msra.mxu0 0.0
      %2953 = vmatprep.subr.mxu0 0.0
      %2954 = vmatpush1.msra.mxu0 0.0
      %2955 = vmatprep.subr.mxu0 0.0
      %2956 = vmatpush1.msra.mxu0 0.0
      %2957 = vmatprep.subr.mxu0 0.0
      %2958 = vmatpush1.msra.mxu0 0.0
      %2959 = vmatprep.subr.mxu0 0.0
      %2960 = vmatpush1.msra.mxu0 0.0
      %2961 = vmatprep.subr.mxu0 0.0
      %2962 = vmatpush1.msra.mxu0 0.0
      %2963 = vmatprep.subr.mxu0 0.0
      %2964 = vmatpush1.msra.mxu0 0.0
      %2965 = vmatprep.subr.mxu0 0.0
      %2966 = vmatpush1.msra.mxu0 0.0
      %2967 = vmatprep.subr.mxu0 0.0
      %2968 = vmatpush1.msra.mxu0 0.0
      %2969 = vmatprep.subr.mxu0 0.0
      %2970 = vmatpush1.msra.mxu0 0.0
      %2971 = vmatprep.subr.mxu0 0.0
      %2972 = vmatpush1.msra.mxu0 0.0
      %2973 = vmatprep.mubr.f32.mxu0 0.0
      %2974 = vmatmul.mubr.f32.gmra.mrb[0].mxu0 %v2809
      %v2975 = vpop.f32.mrb[0].mxu0
      %v2976 = vadd.f32 0.0, %v2975
      %v2977 = vpop.f32.mrb[0].mxu0
      %v2978 = vadd.f32 0.0, %v2977
      %2979 = vmatprep.mubr.f32.mxu0 0.0
      %2980 = vmatmul.mubr.f32.gmra.mrb[0].mxu0 %v2812
      %v2981 = vpop.f32.mrb[0].mxu0
      %v2982 = vadd.f32 0.0, %v2981
      %v2983 = vpop.f32.mrb[0].mxu0
      %v2984 = vadd.f32 0.0, %v2983
      %2985 = vmatprep.mubr.f32.mxu0 0.0
      %2986 = vmatmul.mubr.f32.gmra.mrb[0].mxu0 %v2815
      %v2987 = vpop.f32.mrb[0].mxu0
      %v2988 = vadd.f32 0.0, %v2987
      %v2989 = vpop.f32.mrb[0].mxu0
      %v2990 = vadd.f32 0.0, %v2989
      %2991 = vmatprep.mubr.f32.mxu0 0.0
      %2992 = vmatmul.mubr.f32.gmra.mrb[0].mxu0 %v2818
      %v2993 = vpop.f32.mrb[0].mxu0
      %v2994 = vadd.f32 0.0, %v2993
      %v2995 = vpop.f32.mrb[0].mxu0
      %v2996 = vadd.f32 0.0, %v2995
      %2997 = vdwg.mxu0
      %v2999 = vsel %vm457, %v2751, 0
      %v3002 = vsel %vm457, %v2752, 0
      %v3005 = vsel %vm457, %v2753, 0
      %v3008 = vsel %vm457, %v2754, 0
      %3010 = vmatprep.subr.mxu0 %v2743
      %3011 = vmatpush1.msra.mxu0 %v2747
      %3012 = vmatprep.subr.mxu0 %v2744
      %3013 = vmatpush1.msra.mxu0 %v2748
      %3014 = vmatprep.subr.mxu0 %v2745
      %3015 = vmatpush1.msra.mxu0 %v2749
      %3016 = vmatprep.subr.mxu0 %v2746
      %3017 = vmatpush1.msra.mxu0 %v2750
      %3018 = vmatprep.subr.mxu0 0.0
      %3019 = vmatpush1.msra.mxu0 0.0
      %3020 = vmatprep.subr.mxu0 0.0
      %3021 = vmatpush1.msra.mxu0 0.0
      %3022 = vmatprep.subr.mxu0 0.0
      %3023 = vmatpush1.msra.mxu0 0.0
      %3024 = vmatprep.subr.mxu0 0.0
      %3025 = vmatpush1.msra.mxu0 0.0
      %3026 = vmatprep.subr.mxu0 0.0
      %3027 = vmatpush1.msra.mxu0 0.0
      %3028 = vmatprep.subr.mxu0 0.0
      %3029 = vmatpush1.msra.mxu0 0.0
      %3030 = vmatprep.subr.mxu0 0.0
      %3031 = vmatpush1.msra.mxu0 0.0
      %3032 = vmatprep.subr.mxu0 0.0
      %3033 = vmatpush1.msra.mxu0 0.0
      %3034 = vmatprep.subr.mxu0 0.0
      %3035 = vmatpush1.msra.mxu0 0.0
      %3036 = vmatprep.subr.mxu0 0.0
      %3037 = vmatpush1.msra.mxu0 0.0
      %3038 = vmatprep.subr.mxu0 0.0
      %3039 = vmatpush1.msra.mxu0 0.0
      %3040 = vmatprep.subr.mxu0 0.0
      %3041 = vmatpush1.msra.mxu0 0.0
      %3042 = vmatprep.subr.mxu0 0.0
      %3043 = vmatpush1.msra.mxu0 0.0
      %3044 = vmatprep.subr.mxu0 0.0
      %3045 = vmatpush1.msra.mxu0 0.0
      %3046 = vmatprep.subr.mxu0 0.0
      %3047 = vmatpush1.msra.mxu0 0.0
      %3048 = vmatprep.subr.mxu0 0.0
      %3049 = vmatpush1.msra.mxu0 0.0
      %3050 = vmatprep.subr.mxu0 0.0
      %3051 = vmatpush1.msra.mxu0 0.0
      %3052 = vmatprep.subr.mxu0 0.0
      %3053 = vmatpush1.msra.mxu0 0.0
      %3054 = vmatprep.subr.mxu0 0.0
      %3055 = vmatpush1.msra.mxu0 0.0
      %3056 = vmatprep.subr.mxu0 0.0
      %3057 = vmatpush1.msra.mxu0 0.0
      %3058 = vmatprep.subr.mxu0 0.0
      %3059 = vmatpush1.msra.mxu0 0.0
      %3060 = vmatprep.subr.mxu0 0.0
      %3061 = vmatpush1.msra.mxu0 0.0
      %3062 = vmatprep.subr.mxu0 0.0
      %3063 = vmatpush1.msra.mxu0 0.0
      %3064 = vmatprep.subr.mxu0 0.0
      %3065 = vmatpush1.msra.mxu0 0.0
      %3066 = vmatprep.subr.mxu0 0.0
      %3067 = vmatpush1.msra.mxu0 0.0
      %3068 = vmatprep.subr.mxu0 0.0
      %3069 = vmatpush1.msra.mxu0 0.0
      %3070 = vmatprep.subr.mxu0 0.0
      %3071 = vmatpush1.msra.mxu0 0.0
      %3072 = vmatprep.subr.mxu0 0.0
      %3073 = vmatpush1.msra.mxu0 0.0
      %3074 = vmatprep.mubr.f32.mxu0 0.0
      %3075 = vmatmul.mubr.f32.gmra.mrb[0].mxu0 %v2999
      %v3076 = vpop.f32.mrb[0].mxu0
      %v3077 = vadd.f32 %v2887, %v3076
      %v3078 = vpop.f32.mrb[0].mxu0
      %v3079 = vadd.f32 %v2889, %v3078
      %3080 = vmatprep.mubr.f32.mxu0 0.0
      %3081 = vmatmul.mubr.f32.gmra.mrb[0].mxu0 %v3002
      %v3082 = vpop.f32.mrb[0].mxu0
      %v3083 = vadd.f32 %v2893, %v3082
      %v3084 = vpop.f32.mrb[0].mxu0
      %v3085 = vadd.f32 %v2895, %v3084
      %3086 = vmatprep.mubr.f32.mxu0 0.0
      %3087 = vmatmul.mubr.f32.gmra.mrb[0].mxu0 %v3005
      %v3088 = vpop.f32.mrb[0].mxu0
      %v3089 = vadd.f32 %v2899, %v3088
      %v3090 = vpop.f32.mrb[0].mxu0
      %v3091 = vadd.f32 %v2901, %v3090
      %3092 = vmatprep.mubr.f32.mxu0 0.0
      %3093 = vmatmul.mubr.f32.gmra.mrb[0].mxu0 %v3008
      %v3094 = vpop.f32.mrb[0].mxu0
      %v3095 = vadd.f32 %v2905, %v3094
      %v3096 = vpop.f32.mrb[0].mxu0
      %v3097 = vadd.f32 %v2907, %v3096
      %3098 = vdwg.mxu0
      %3099 = vmatprep.subr.mxu0 %v2735
      %3100 = vmatpush1.msra.mxu0 %v2739
      %3101 = vmatprep.subr.mxu0 %v2736
      %3102 = vmatpush1.msra.mxu0 %v2740
      %3103 = vmatprep.subr.mxu0 %v2737
      %3104 = vmatpush1.msra.mxu0 %v2741
      %3105 = vmatprep.subr.mxu0 %v2738
      %3106 = vmatpush1.msra.mxu0 %v2742
      %3107 = vmatprep.subr.mxu0 0.0
      %3108 = vmatpush1.msra.mxu0 0.0
      %3109 = vmatprep.subr.mxu0 0.0
      %3110 = vmatpush1.msra.mxu0 0.0
      %3111 = vmatprep.subr.mxu0 0.0
      %3112 = vmatpush1.msra.mxu0 0.0
      %3113 = vmatprep.subr.mxu0 0.0
      %3114 = vmatpush1.msra.mxu0 0.0
      %3115 = vmatprep.subr.mxu0 0.0
      %3116 = vmatpush1.msra.mxu0 0.0
      %3117 = vmatprep.subr.mxu0 0.0
      %3118 = vmatpush1.msra.mxu0 0.0
      %3119 = vmatprep.subr.mxu0 0.0
      %3120 = vmatpush1.msra.mxu0 0.0
      %3121 = vmatprep.subr.mxu0 0.0
      %3122 = vmatpush1.msra.mxu0 0.0
      %3123 = vmatprep.subr.mxu0 0.0
      %3124 = vmatpush1.msra.mxu0 0.0
      %3125 = vmatprep.subr.mxu0 0.0
      %3126 = vmatpush1.msra.mxu0 0.0
      %3127 = vmatprep.subr.mxu0 0.0
      %3128 = vmatpush1.msra.mxu0 0.0
      %3129 = vmatprep.subr.mxu0 0.0
      %3130 = vmatpush1.msra.mxu0 0.0
      %3131 = vmatprep.subr.mxu0 0.0
      %3132 = vmatpush1.msra.mxu0 0.0
      %3133 = vmatprep.subr.mxu0 0.0
      %3134 = vmatpush1.msra.mxu0 0.0
      %3135 = vmatprep.subr.mxu0 0.0
      %3136 = vmatpush1.msra.mxu0 0.0
      %3137 = vmatprep.subr.mxu0 0.0
      %3138 = vmatpush1.msra.mxu0 0.0
      %3139 = vmatprep.subr.mxu0 0.0
      %3140 = vmatpush1.msra.mxu0 0.0
      %3141 = vmatprep.subr.mxu0 0.0
      %3142 = vmatpush1.msra.mxu0 0.0
      %3143 = vmatprep.subr.mxu0 0.0
      %3144 = vmatpush1.msra.mxu0 0.0
      %3145 = vmatprep.subr.mxu0 0.0
      %3146 = vmatpush1.msra.mxu0 0.0
      %3147 = vmatprep.subr.mxu0 0.0
      %3148 = vmatpush1.msra.mxu0 0.0
      %3149 = vmatprep.subr.mxu0 0.0
      %3150 = vmatpush1.msra.mxu0 0.0
      %3151 = vmatprep.subr.mxu0 0.0
      %3152 = vmatpush1.msra.mxu0 0.0
      %3153 = vmatprep.subr.mxu0 0.0
      %3154 = vmatpush1.msra.mxu0 0.0
      %3155 = vmatprep.subr.mxu0 0.0
      %3156 = vmatpush1.msra.mxu0 0.0
      %3157 = vmatprep.subr.mxu0 0.0
      %3158 = vmatpush1.msra.mxu0 0.0
      %3159 = vmatprep.subr.mxu0 0.0
      %3160 = vmatpush1.msra.mxu0 0.0
      %3161 = vmatprep.subr.mxu0 0.0
      %3162 = vmatpush1.msra.mxu0 0.0
      %3163 = vmatprep.mubr.f32.mxu0 0.0
      %3164 = vmatmul.mubr.f32.gmra.mrb[0].mxu0 %v2999
      %v3165 = vpop.f32.mrb[0].mxu0
      %v3166 = vadd.f32 %v2976, %v3165
      %v3167 = vpop.f32.mrb[0].mxu0
      %v3168 = vadd.f32 %v2978, %v3167
      %3169 = vmatprep.mubr.f32.mxu0 0.0
      %3170 = vmatmul.mubr.f32.gmra.mrb[0].mxu0 %v3002
      %v3171 = vpop.f32.mrb[0].mxu0
      %v3172 = vadd.f32 %v2982, %v3171
      %v3173 = vpop.f32.mrb[0].mxu0
      %v3174 = vadd.f32 %v2984, %v3173
      %3175 = vmatprep.mubr.f32.mxu0 0.0
      %3176 = vmatmul.mubr.f32.gmra.mrb[0].mxu0 %v3005
      %v3177 = vpop.f32.mrb[0].mxu0
      %v3178 = vadd.f32 %v2988, %v3177
      %v3179 = vpop.f32.mrb[0].mxu0
      %v3180 = vadd.f32 %v2990, %v3179
      %3181 = vmatprep.mubr.f32.mxu0 0.0
      %3182 = vmatmul.mubr.f32.gmra.mrb[0].mxu0 %v3008
      %v3183 = vpop.f32.mrb[0].mxu0
      %v3184 = vadd.f32 %v2994, %v3183
      %v3185 = vpop.f32.mrb[0].mxu0
      %v3186 = vadd.f32 %v2996, %v3185
      %3187 = vdwg.mxu0
      %3188 = vrot.lane.b32.xlu0 %v2687, 19
      %v3189 = vpop.permute.xlu0 %3188
      %3190 = vrot.lane.b32.xlu0 %v2691, 19
      %v3191 = vpop.permute.xlu0 %3190
      %3192 = vrot.lane.b32.xlu0 %v2695, 19
      %v3193 = vpop.permute.xlu0 %3192
      %3194 = vrot.lane.b32.xlu0 %v2699, 19
      %v3195 = vpop.permute.xlu0 %3194
      %3196 = vrot.lane.b32.xlu0 %v2688, 19
      %v3197 = vpop.permute.xlu0 %3196
      %3198 = vrot.lane.b32.xlu0 %v2692, 19
      %v3199 = vpop.permute.xlu0 %3198
      %3200 = vrot.lane.b32.xlu0 %v2696, 19
      %v3201 = vpop.permute.xlu0 %3200
      %3202 = vrot.lane.b32.xlu0 %v2700, 19
      %v3203 = vpop.permute.xlu0 %3202
      %3204 = vrot.lane.b32.xlu0 %v2689, 19
      %v3205 = vpop.permute.xlu0 %3204
      %3206 = vrot.lane.b32.xlu0 %v2693, 19
      %v3207 = vpop.permute.xlu0 %3206
      %3208 = vrot.lane.b32.xlu0 %v2697, 19
      %v3209 = vpop.permute.xlu0 %3208
      %3210 = vrot.lane.b32.xlu0 %v2701, 19
      %v3211 = vpop.permute.xlu0 %3210
      %3212 = vrot.lane.b32.xlu0 %v2690, 19
      %v3213 = vpop.permute.xlu0 %3212
      %3214 = vrot.lane.b32.xlu0 %v2694, 19
      %v3215 = vpop.permute.xlu0 %3214
      %3216 = vrot.lane.b32.xlu0 %v2698, 19
      %v3217 = vpop.permute.xlu0 %3216
      %3218 = vrot.lane.b32.xlu0 %v2702, 19
      %v3219 = vpop.permute.xlu0 %3218
      %v3220 = vsel %vm870, %v3205, %v3213
      %v3221 = vsel %vm870, %v3207, %v3215
      %v3222 = vsel %vm870, %v3209, %v3217
      %v3223 = vsel %vm870, %v3211, %v3219
      %v3224 = vsel %vm870, %v3197, %v3205
      %v3225 = vsel %vm870, %v3199, %v3207
      %v3226 = vsel %vm870, %v3201, %v3209
      %v3227 = vsel %vm870, %v3203, %v3211
      %v3228 = vsel %vm870, %v3189, %v3197
      %v3229 = vsel %vm870, %v3191, %v3199
      %v3230 = vsel %vm870, %v3193, %v3201
      %v3231 = vsel %vm870, %v3195, %v3203
      %v3232 = vsel %vm870, %v3213, %v3189
      %v3233 = vsel %vm870, %v3215, %v3191
      %v3234 = vsel %vm870, %v3217, %v3193
      %v3235 = vsel %vm870, %v3219, %v3195
      %s3236 = scalar_lea.vmem %s4, 64
      %v3237 = vld [vmem:[%s3236] sm:$0xff]
      %v3238 = vld [vmem:[%s3236 + $0x8] sm:$0xff]
      %v3239 = vld [vmem:[%s3236 + $0x10] sm:$0xff]
      %v3240 = vld [vmem:[%s3236 + $0x18] sm:$0xff]
      %v3242 = vsel %vm457, %v3237, 0
      %v3245 = vsel %vm457, %v3238, 0
      %v3248 = vsel %vm457, %v3239, 0
      %v3251 = vsel %vm457, %v3240, 0
      %3253 = vmatprep.subr.mxu0 %v3228
      %3254 = vmatpush1.msra.mxu0 %v3232
      %3255 = vmatprep.subr.mxu0 %v3229
      %3256 = vmatpush1.msra.mxu0 %v3233
      %3257 = vmatprep.subr.mxu0 %v3230
      %3258 = vmatpush1.msra.mxu0 %v3234
      %3259 = vmatprep.subr.mxu0 %v3231
      %3260 = vmatpush1.msra.mxu0 %v3235
      %3261 = vmatprep.subr.mxu0 0.0
      %3262 = vmatpush1.msra.mxu0 0.0
      %3263 = vmatprep.subr.mxu0 0.0
      %3264 = vmatpush1.msra.mxu0 0.0
      %3265 = vmatprep.subr.mxu0 0.0
      %3266 = vmatpush1.msra.mxu0 0.0
      %3267 = vmatprep.subr.mxu0 0.0
      %3268 = vmatpush1.msra.mxu0 0.0
      %3269 = vmatprep.subr.mxu0 0.0
      %3270 = vmatpush1.msra.mxu0 0.0
      %3271 = vmatprep.subr.mxu0 0.0
      %3272 = vmatpush1.msra.mxu0 0.0
      %3273 = vmatprep.subr.mxu0 0.0
      %3274 = vmatpush1.msra.mxu0 0.0
      %3275 = vmatprep.subr.mxu0 0.0
      %3276 = vmatpush1.msra.mxu0 0.0
      %3277 = vmatprep.subr.mxu0 0.0
      %3278 = vmatpush1.msra.mxu0 0.0
      %3279 = vmatprep.subr.mxu0 0.0
      %3280 = vmatpush1.msra.mxu0 0.0
      %3281 = vmatprep.subr.mxu0 0.0
      %3282 = vmatpush1.msra.mxu0 0.0
      %3283 = vmatprep.subr.mxu0 0.0
      %3284 = vmatpush1.msra.mxu0 0.0
      %3285 = vmatprep.subr.mxu0 0.0
      %3286 = vmatpush1.msra.mxu0 0.0
      %3287 = vmatprep.subr.mxu0 0.0
      %3288 = vmatpush1.msra.mxu0 0.0
      %3289 = vmatprep.subr.mxu0 0.0
      %3290 = vmatpush1.msra.mxu0 0.0
      %3291 = vmatprep.subr.mxu0 0.0
      %3292 = vmatpush1.msra.mxu0 0.0
      %3293 = vmatprep.subr.mxu0 0.0
      %3294 = vmatpush1.msra.mxu0 0.0
      %3295 = vmatprep.subr.mxu0 0.0
      %3296 = vmatpush1.msra.mxu0 0.0
      %3297 = vmatprep.subr.mxu0 0.0
      %3298 = vmatpush1.msra.mxu0 0.0
      %3299 = vmatprep.subr.mxu0 0.0
      %3300 = vmatpush1.msra.mxu0 0.0
      %3301 = vmatprep.subr.mxu0 0.0
      %3302 = vmatpush1.msra.mxu0 0.0
      %3303 = vmatprep.subr.mxu0 0.0
      %3304 = vmatpush1.msra.mxu0 0.0
      %3305 = vmatprep.subr.mxu0 0.0
      %3306 = vmatpush1.msra.mxu0 0.0
      %3307 = vmatprep.subr.mxu0 0.0
      %3308 = vmatpush1.msra.mxu0 0.0
      %3309 = vmatprep.subr.mxu0 0.0
      %3310 = vmatpush1.msra.mxu0 0.0
      %3311 = vmatprep.subr.mxu0 0.0
      %3312 = vmatpush1.msra.mxu0 0.0
      %3313 = vmatprep.subr.mxu0 0.0
      %3314 = vmatpush1.msra.mxu0 0.0
      %3315 = vmatprep.subr.mxu0 0.0
      %3316 = vmatpush1.msra.mxu0 0.0
      %3317 = vmatprep.mubr.f32.mxu0 0.0
      %3318 = vmatmul.mubr.f32.gmra.mrb[0].mxu0 %v3242
      %v3319 = vpop.f32.mrb[0].mxu0
      %v3320 = vadd.f32 0.0, %v3319
      %v3321 = vpop.f32.mrb[0].mxu0
      %v3322 = vadd.f32 0.0, %v3321
      %3323 = vmatprep.mubr.f32.mxu0 0.0
      %3324 = vmatmul.mubr.f32.gmra.mrb[0].mxu0 %v3245
      %v3325 = vpop.f32.mrb[0].mxu0
      %v3326 = vadd.f32 0.0, %v3325
      %v3327 = vpop.f32.mrb[0].mxu0
      %v3328 = vadd.f32 0.0, %v3327
      %3329 = vmatprep.mubr.f32.mxu0 0.0
      %3330 = vmatmul.mubr.f32.gmra.mrb[0].mxu0 %v3248
      %v3331 = vpop.f32.mrb[0].mxu0
      %v3332 = vadd.f32 0.0, %v3331
      %v3333 = vpop.f32.mrb[0].mxu0
      %v3334 = vadd.f32 0.0, %v3333
      %3335 = vmatprep.mubr.f32.mxu0 0.0
      %3336 = vmatmul.mubr.f32.gmra.mrb[0].mxu0 %v3251
      %v3337 = vpop.f32.mrb[0].mxu0
      %v3338 = vadd.f32 0.0, %v3337
      %v3339 = vpop.f32.mrb[0].mxu0
      %v3340 = vadd.f32 0.0, %v3339
      %3341 = vdwg.mxu0
      %3342 = vmatprep.subr.mxu0 %v3220
      %3343 = vmatpush1.msra.mxu0 %v3224
      %3344 = vmatprep.subr.mxu0 %v3221
      %3345 = vmatpush1.msra.mxu0 %v3225
      %3346 = vmatprep.subr.mxu0 %v3222
      %3347 = vmatpush1.msra.mxu0 %v3226
      %3348 = vmatprep.subr.mxu0 %v3223
      %3349 = vmatpush1.msra.mxu0 %v3227
      %3350 = vmatprep.subr.mxu0 0.0
      %3351 = vmatpush1.msra.mxu0 0.0
      %3352 = vmatprep.subr.mxu0 0.0
      %3353 = vmatpush1.msra.mxu0 0.0
      %3354 = vmatprep.subr.mxu0 0.0
      %3355 = vmatpush1.msra.mxu0 0.0
      %3356 = vmatprep.subr.mxu0 0.0
      %3357 = vmatpush1.msra.mxu0 0.0
      %3358 = vmatprep.subr.mxu0 0.0
      %3359 = vmatpush1.msra.mxu0 0.0
      %3360 = vmatprep.subr.mxu0 0.0
      %3361 = vmatpush1.msra.mxu0 0.0
      %3362 = vmatprep.subr.mxu0 0.0
      %3363 = vmatpush1.msra.mxu0 0.0
      %3364 = vmatprep.subr.mxu0 0.0
      %3365 = vmatpush1.msra.mxu0 0.0
      %3366 = vmatprep.subr.mxu0 0.0
      %3367 = vmatpush1.msra.mxu0 0.0
      %3368 = vmatprep.subr.mxu0 0.0
      %3369 = vmatpush1.msra.mxu0 0.0
      %3370 = vmatprep.subr.mxu0 0.0
      %3371 = vmatpush1.msra.mxu0 0.0
      %3372 = vmatprep.subr.mxu0 0.0
      %3373 = vmatpush1.msra.mxu0 0.0
      %3374 = vmatprep.subr.mxu0 0.0
      %3375 = vmatpush1.msra.mxu0 0.0
      %3376 = vmatprep.subr.mxu0 0.0
      %3377 = vmatpush1.msra.mxu0 0.0
      %3378 = vmatprep.subr.mxu0 0.0
      %3379 = vmatpush1.msra.mxu0 0.0
      %3380 = vmatprep.subr.mxu0 0.0
      %3381 = vmatpush1.msra.mxu0 0.0
      %3382 = vmatprep.subr.mxu0 0.0
      %3383 = vmatpush1.msra.mxu0 0.0
      %3384 = vmatprep.subr.mxu0 0.0
      %3385 = vmatpush1.msra.mxu0 0.0
      %3386 = vmatprep.subr.mxu0 0.0
      %3387 = vmatpush1.msra.mxu0 0.0
      %3388 = vmatprep.subr.mxu0 0.0
      %3389 = vmatpush1.msra.mxu0 0.0
      %3390 = vmatprep.subr.mxu0 0.0
      %3391 = vmatpush1.msra.mxu0 0.0
      %3392 = vmatprep.subr.mxu0 0.0
      %3393 = vmatpush1.msra.mxu0 0.0
      %3394 = vmatprep.subr.mxu0 0.0
      %3395 = vmatpush1.msra.mxu0 0.0
      %3396 = vmatprep.subr.mxu0 0.0
      %3397 = vmatpush1.msra.mxu0 0.0
      %3398 = vmatprep.subr.mxu0 0.0
      %3399 = vmatpush1.msra.mxu0 0.0
      %3400 = vmatprep.subr.mxu0 0.0
      %3401 = vmatpush1.msra.mxu0 0.0
      %3402 = vmatprep.subr.mxu0 0.0
      %3403 = vmatpush1.msra.mxu0 0.0
      %3404 = vmatprep.subr.mxu0 0.0
      %3405 = vmatpush1.msra.mxu0 0.0
      %3406 = vmatprep.mubr.f32.mxu0 0.0
      %3407 = vmatmul.mubr.f32.gmra.mrb[0].mxu0 %v3242
      %v3408 = vpop.f32.mrb[0].mxu0
      %v3409 = vadd.f32 0.0, %v3408
      %v3410 = vpop.f32.mrb[0].mxu0
      %v3411 = vadd.f32 0.0, %v3410
      %3412 = vmatprep.mubr.f32.mxu0 0.0
      %3413 = vmatmul.mubr.f32.gmra.mrb[0].mxu0 %v3245
      %v3414 = vpop.f32.mrb[0].mxu0
      %v3415 = vadd.f32 0.0, %v3414
      %v3416 = vpop.f32.mrb[0].mxu0
      %v3417 = vadd.f32 0.0, %v3416
      %3418 = vmatprep.mubr.f32.mxu0 0.0
      %3419 = vmatmul.mubr.f32.gmra.mrb[0].mxu0 %v3248
      %v3420 = vpop.f32.mrb[0].mxu0
      %v3421 = vadd.f32 0.0, %v3420
      %v3422 = vpop.f32.mrb[0].mxu0
      %v3423 = vadd.f32 0.0, %v3422
      %3424 = vmatprep.mubr.f32.mxu0 0.0
      %3425 = vmatmul.mubr.f32.gmra.mrb[0].mxu0 %v3251
      %v3426 = vpop.f32.mrb[0].mxu0
      %v3427 = vadd.f32 0.0, %v3426
      %v3428 = vpop.f32.mrb[0].mxu0
      %v3429 = vadd.f32 0.0, %v3428
      %3430 = vdwg.mxu0
      %v3431 = vadd.f32 %v3077, %v3320
      %v3432 = vadd.f32 %v3079, %v3322
      %v3433 = vadd.f32 %v3166, %v3409
      %v3434 = vadd.f32 %v3168, %v3411
      %v3435 = vadd.f32 %v3083, %v3326
      %v3436 = vadd.f32 %v3085, %v3328
      %v3437 = vadd.f32 %v3172, %v3415
      %v3438 = vadd.f32 %v3174, %v3417
      %v3439 = vadd.f32 %v3089, %v3332
      %v3440 = vadd.f32 %v3091, %v3334
      %v3441 = vadd.f32 %v3178, %v3421
      %v3442 = vadd.f32 %v3180, %v3423
      %v3443 = vadd.f32 %v3095, %v3338
      %v3444 = vadd.f32 %v3097, %v3340
      %v3445 = vadd.f32 %v3184, %v3427
      %v3446 = vadd.f32 %v3186, %v3429
      %3447 = vrot.lane.b32.xlu0 %v2687, 1
      %v3448 = vpop.permute.xlu0 %3447
      %3449 = vrot.lane.b32.xlu0 %v2691, 1
      %v3450 = vpop.permute.xlu0 %3449
      %3451 = vrot.lane.b32.xlu0 %v2695, 1
      %v3452 = vpop.permute.xlu0 %3451
      %3453 = vrot.lane.b32.xlu0 %v2699, 1
      %v3454 = vpop.permute.xlu0 %3453
      %3455 = vrot.lane.b32.xlu0 %v2688, 1
      %v3456 = vpop.permute.xlu0 %3455
      %3457 = vrot.lane.b32.xlu0 %v2692, 1
      %v3458 = vpop.permute.xlu0 %3457
      %3459 = vrot.lane.b32.xlu0 %v2696, 1
      %v3460 = vpop.permute.xlu0 %3459
      %3461 = vrot.lane.b32.xlu0 %v2700, 1
      %v3462 = vpop.permute.xlu0 %3461
      %3463 = vrot.lane.b32.xlu0 %v2689, 1
      %v3464 = vpop.permute.xlu0 %3463
      %3465 = vrot.lane.b32.xlu0 %v2693, 1
      %v3466 = vpop.permute.xlu0 %3465
      %3467 = vrot.lane.b32.xlu0 %v2697, 1
      %v3468 = vpop.permute.xlu0 %3467
      %3469 = vrot.lane.b32.xlu0 %v2701, 1
      %v3470 = vpop.permute.xlu0 %3469
      %3471 = vrot.lane.b32.xlu0 %v2690, 1
      %v3472 = vpop.permute.xlu0 %3471
      %3473 = vrot.lane.b32.xlu0 %v2694, 1
      %v3474 = vpop.permute.xlu0 %3473
      %3475 = vrot.lane.b32.xlu0 %v2698, 1
      %v3476 = vpop.permute.xlu0 %3475
      %3477 = vrot.lane.b32.xlu0 %v2702, 1
      %v3478 = vpop.permute.xlu0 %3477
      %v3479 = vsel %vm1130, %v3464, %v3472
      %v3480 = vsel %vm1130, %v3466, %v3474
      %v3481 = vsel %vm1130, %v3468, %v3476
      %v3482 = vsel %vm1130, %v3470, %v3478
      %v3483 = vsel %vm1130, %v3456, %v3464
      %v3484 = vsel %vm1130, %v3458, %v3466
      %v3485 = vsel %vm1130, %v3460, %v3468
      %v3486 = vsel %vm1130, %v3462, %v3470
      %v3487 = vsel %vm1130, %v3448, %v3456
      %v3488 = vsel %vm1130, %v3450, %v3458
      %v3489 = vsel %vm1130, %v3452, %v3460
      %v3490 = vsel %vm1130, %v3454, %v3462
      %v3491 = vsel %vm1130, %v3472, %v3448
      %v3492 = vsel %vm1130, %v3474, %v3450
      %v3493 = vsel %vm1130, %v3476, %v3452
      %v3494 = vsel %vm1130, %v3478, %v3454
      %s3495 = scalar_lea.vmem %s4, 96
      %v3496 = vld [vmem:[%s3495] sm:$0xff]
      %v3497 = vld [vmem:[%s3495 + $0x8] sm:$0xff]
      %v3498 = vld [vmem:[%s3495 + $0x10] sm:$0xff]
      %v3499 = vld [vmem:[%s3495 + $0x18] sm:$0xff]
      %v3501 = vsel %vm457, %v3496, 0
      %v3504 = vsel %vm457, %v3497, 0
      %v3507 = vsel %vm457, %v3498, 0
      %v3510 = vsel %vm457, %v3499, 0
      %3512 = vmatprep.subr.mxu0 %v3487
      %3513 = vmatpush1.msra.mxu0 %v3491
      %3514 = vmatprep.subr.mxu0 %v3488
      %3515 = vmatpush1.msra.mxu0 %v3492
      %3516 = vmatprep.subr.mxu0 %v3489
      %3517 = vmatpush1.msra.mxu0 %v3493
      %3518 = vmatprep.subr.mxu0 %v3490
      %3519 = vmatpush1.msra.mxu0 %v3494
      %3520 = vmatprep.subr.mxu0 0.0
      %3521 = vmatpush1.msra.mxu0 0.0
      %3522 = vmatprep.subr.mxu0 0.0
      %3523 = vmatpush1.msra.mxu0 0.0
      %3524 = vmatprep.subr.mxu0 0.0
      %3525 = vmatpush1.msra.mxu0 0.0
      %3526 = vmatprep.subr.mxu0 0.0
      %3527 = vmatpush1.msra.mxu0 0.0
      %3528 = vmatprep.subr.mxu0 0.0
      %3529 = vmatpush1.msra.mxu0 0.0
      %3530 = vmatprep.subr.mxu0 0.0
      %3531 = vmatpush1.msra.mxu0 0.0
      %3532 = vmatprep.subr.mxu0 0.0
      %3533 = vmatpush1.msra.mxu0 0.0
      %3534 = vmatprep.subr.mxu0 0.0
      %3535 = vmatpush1.msra.mxu0 0.0
      %3536 = vmatprep.subr.mxu0 0.0
      %3537 = vmatpush1.msra.mxu0 0.0
      %3538 = vmatprep.subr.mxu0 0.0
      %3539 = vmatpush1.msra.mxu0 0.0
      %3540 = vmatprep.subr.mxu0 0.0
      %3541 = vmatpush1.msra.mxu0 0.0
      %3542 = vmatprep.subr.mxu0 0.0
      %3543 = vmatpush1.msra.mxu0 0.0
      %3544 = vmatprep.subr.mxu0 0.0
      %3545 = vmatpush1.msra.mxu0 0.0
      %3546 = vmatprep.subr.mxu0 0.0
      %3547 = vmatpush1.msra.mxu0 0.0
      %3548 = vmatprep.subr.mxu0 0.0
      %3549 = vmatpush1.msra.mxu0 0.0
      %3550 = vmatprep.subr.mxu0 0.0
      %3551 = vmatpush1.msra.mxu0 0.0
      %3552 = vmatprep.subr.mxu0 0.0
      %3553 = vmatpush1.msra.mxu0 0.0
      %3554 = vmatprep.subr.mxu0 0.0
      %3555 = vmatpush1.msra.mxu0 0.0
      %3556 = vmatprep.subr.mxu0 0.0
      %3557 = vmatpush1.msra.mxu0 0.0
      %3558 = vmatprep.subr.mxu0 0.0
      %3559 = vmatpush1.msra.mxu0 0.0
      %3560 = vmatprep.subr.mxu0 0.0
      %3561 = vmatpush1.msra.mxu0 0.0
      %3562 = vmatprep.subr.mxu0 0.0
      %3563 = vmatpush1.msra.mxu0 0.0
      %3564 = vmatprep.subr.mxu0 0.0
      %3565 = vmatpush1.msra.mxu0 0.0
      %3566 = vmatprep.subr.mxu0 0.0
      %3567 = vmatpush1.msra.mxu0 0.0
      %3568 = vmatprep.subr.mxu0 0.0
      %3569 = vmatpush1.msra.mxu0 0.0
      %3570 = vmatprep.subr.mxu0 0.0
      %3571 = vmatpush1.msra.mxu0 0.0
      %3572 = vmatprep.subr.mxu0 0.0
      %3573 = vmatpush1.msra.mxu0 0.0
      %3574 = vmatprep.subr.mxu0 0.0
      %3575 = vmatpush1.msra.mxu0 0.0
      %3576 = vmatprep.mubr.f32.mxu0 0.0
      %3577 = vmatmul.mubr.f32.gmra.mrb[0].mxu0 %v3501
      %v3578 = vpop.f32.mrb[0].mxu0
      %v3579 = vadd.f32 0.0, %v3578
      %v3580 = vpop.f32.mrb[0].mxu0
      %v3581 = vadd.f32 0.0, %v3580
      %3582 = vmatprep.mubr.f32.mxu0 0.0
      %3583 = vmatmul.mubr.f32.gmra.mrb[0].mxu0 %v3504
      %v3584 = vpop.f32.mrb[0].mxu0
      %v3585 = vadd.f32 0.0, %v3584
      %v3586 = vpop.f32.mrb[0].mxu0
      %v3587 = vadd.f32 0.0, %v3586
      %3588 = vmatprep.mubr.f32.mxu0 0.0
      %3589 = vmatmul.mubr.f32.gmra.mrb[0].mxu0 %v3507
      %v3590 = vpop.f32.mrb[0].mxu0
      %v3591 = vadd.f32 0.0, %v3590
      %v3592 = vpop.f32.mrb[0].mxu0
      %v3593 = vadd.f32 0.0, %v3592
      %3594 = vmatprep.mubr.f32.mxu0 0.0
      %3595 = vmatmul.mubr.f32.gmra.mrb[0].mxu0 %v3510
      %v3596 = vpop.f32.mrb[0].mxu0
      %v3597 = vadd.f32 0.0, %v3596
      %v3598 = vpop.f32.mrb[0].mxu0
      %v3599 = vadd.f32 0.0, %v3598
      %3600 = vdwg.mxu0
      %3601 = vmatprep.subr.mxu0 %v3479
      %3602 = vmatpush1.msra.mxu0 %v3483
      %3603 = vmatprep.subr.mxu0 %v3480
      %3604 = vmatpush1.msra.mxu0 %v3484
      %3605 = vmatprep.subr.mxu0 %v3481
      %3606 = vmatpush1.msra.mxu0 %v3485
      %3607 = vmatprep.subr.mxu0 %v3482
      %3608 = vmatpush1.msra.mxu0 %v3486
      %3609 = vmatprep.subr.mxu0 0.0
      %3610 = vmatpush1.msra.mxu0 0.0
      %3611 = vmatprep.subr.mxu0 0.0
      %3612 = vmatpush1.msra.mxu0 0.0
      %3613 = vmatprep.subr.mxu0 0.0
      %3614 = vmatpush1.msra.mxu0 0.0
      %3615 = vmatprep.subr.mxu0 0.0
      %3616 = vmatpush1.msra.mxu0 0.0
      %3617 = vmatprep.subr.mxu0 0.0
      %3618 = vmatpush1.msra.mxu0 0.0
      %3619 = vmatprep.subr.mxu0 0.0
      %3620 = vmatpush1.msra.mxu0 0.0
      %3621 = vmatprep.subr.mxu0 0.0
      %3622 = vmatpush1.msra.mxu0 0.0
      %3623 = vmatprep.subr.mxu0 0.0
      %3624 = vmatpush1.msra.mxu0 0.0
      %3625 = vmatprep.subr.mxu0 0.0
      %3626 = vmatpush1.msra.mxu0 0.0
      %3627 = vmatprep.subr.mxu0 0.0
      %3628 = vmatpush1.msra.mxu0 0.0
      %3629 = vmatprep.subr.mxu0 0.0
      %3630 = vmatpush1.msra.mxu0 0.0
      %3631 = vmatprep.subr.mxu0 0.0
      %3632 = vmatpush1.msra.mxu0 0.0
      %3633 = vmatprep.subr.mxu0 0.0
      %3634 = vmatpush1.msra.mxu0 0.0
      %3635 = vmatprep.subr.mxu0 0.0
      %3636 = vmatpush1.msra.mxu0 0.0
      %3637 = vmatprep.subr.mxu0 0.0
      %3638 = vmatpush1.msra.mxu0 0.0
      %3639 = vmatprep.subr.mxu0 0.0
      %3640 = vmatpush1.msra.mxu0 0.0
      %3641 = vmatprep.subr.mxu0 0.0
      %3642 = vmatpush1.msra.mxu0 0.0
      %3643 = vmatprep.subr.mxu0 0.0
      %3644 = vmatpush1.msra.mxu0 0.0
      %3645 = vmatprep.subr.mxu0 0.0
      %3646 = vmatpush1.msra.mxu0 0.0
      %3647 = vmatprep.subr.mxu0 0.0
      %3648 = vmatpush1.msra.mxu0 0.0
      %3649 = vmatprep.subr.mxu0 0.0
      %3650 = vmatpush1.msra.mxu0 0.0
      %3651 = vmatprep.subr.mxu0 0.0
      %3652 = vmatpush1.msra.mxu0 0.0
      %3653 = vmatprep.subr.mxu0 0.0
      %3654 = vmatpush1.msra.mxu0 0.0
      %3655 = vmatprep.subr.mxu0 0.0
      %3656 = vmatpush1.msra.mxu0 0.0
      %3657 = vmatprep.subr.mxu0 0.0
      %3658 = vmatpush1.msra.mxu0 0.0
      %3659 = vmatprep.subr.mxu0 0.0
      %3660 = vmatpush1.msra.mxu0 0.0
      %3661 = vmatprep.subr.mxu0 0.0
      %3662 = vmatpush1.msra.mxu0 0.0
      %3663 = vmatprep.subr.mxu0 0.0
      %3664 = vmatpush1.msra.mxu0 0.0
      %3665 = vmatprep.mubr.f32.mxu0 0.0
      %3666 = vmatmul.mubr.f32.gmra.mrb[0].mxu0 %v3501
      %v3667 = vpop.f32.mrb[0].mxu0
      %v3668 = vadd.f32 0.0, %v3667
      %v3669 = vpop.f32.mrb[0].mxu0
      %v3670 = vadd.f32 0.0, %v3669
      %3671 = vmatprep.mubr.f32.mxu0 0.0
      %3672 = vmatmul.mubr.f32.gmra.mrb[0].mxu0 %v3504
      %v3673 = vpop.f32.mrb[0].mxu0
      %v3674 = vadd.f32 0.0, %v3673
      %v3675 = vpop.f32.mrb[0].mxu0
      %v3676 = vadd.f32 0.0, %v3675
      %3677 = vmatprep.mubr.f32.mxu0 0.0
      %3678 = vmatmul.mubr.f32.gmra.mrb[0].mxu0 %v3507
      %v3679 = vpop.f32.mrb[0].mxu0
      %v3680 = vadd.f32 0.0, %v3679
      %v3681 = vpop.f32.mrb[0].mxu0
      %v3682 = vadd.f32 0.0, %v3681
      %3683 = vmatprep.mubr.f32.mxu0 0.0
      %3684 = vmatmul.mubr.f32.gmra.mrb[0].mxu0 %v3510
      %v3685 = vpop.f32.mrb[0].mxu0
      %v3686 = vadd.f32 0.0, %v3685
      %v3687 = vpop.f32.mrb[0].mxu0
      %v3688 = vadd.f32 0.0, %v3687
      %3689 = vdwg.mxu0
      %v3690 = vadd.f32 %v3431, %v3579
      %v3691 = vadd.f32 %v3432, %v3581
      %v3692 = vadd.f32 %v3433, %v3668
      %v3693 = vadd.f32 %v3434, %v3670
      %v3694 = vadd.f32 %v3435, %v3585
      %v3695 = vadd.f32 %v3436, %v3587
      %v3696 = vadd.f32 %v3437, %v3674
      %v3697 = vadd.f32 %v3438, %v3676
      %v3698 = vadd.f32 %v3439, %v3591
      %v3699 = vadd.f32 %v3440, %v3593
      %v3700 = vadd.f32 %v3441, %v3680
      %v3701 = vadd.f32 %v3442, %v3682
      %v3702 = vadd.f32 %v3443, %v3597
      %v3703 = vadd.f32 %v3444, %v3599
      %v3704 = vadd.f32 %v3445, %v3686
      %v3705 = vadd.f32 %v3446, %v3688
      %s3706 = scalar_lea.vmem %s4, 128
      %v3707 = vld [vmem:[%s3706] sm:$0xff]
      %v3708 = vld [vmem:[%s3706 + $0x8] sm:$0xff]
      %v3709 = vld [vmem:[%s3706 + $0x10] sm:$0xff]
      %v3710 = vld [vmem:[%s3706 + $0x18] sm:$0xff]
      %v3712 = vsel %vm457, %v3707, 0
      %v3715 = vsel %vm457, %v3708, 0
      %v3718 = vsel %vm457, %v3709, 0
      %v3721 = vsel %vm457, %v3710, 0
      %3723 = vmatprep.subr.mxu0 %v2688
      %3724 = vmatpush1.msra.mxu0 %v2687
      %3725 = vmatprep.subr.mxu0 %v2692
      %3726 = vmatpush1.msra.mxu0 %v2691
      %3727 = vmatprep.subr.mxu0 %v2696
      %3728 = vmatpush1.msra.mxu0 %v2695
      %3729 = vmatprep.subr.mxu0 %v2700
      %3730 = vmatpush1.msra.mxu0 %v2699
      %3731 = vmatprep.subr.mxu0 0.0
      %3732 = vmatpush1.msra.mxu0 0.0
      %3733 = vmatprep.subr.mxu0 0.0
      %3734 = vmatpush1.msra.mxu0 0.0
      %3735 = vmatprep.subr.mxu0 0.0
      %3736 = vmatpush1.msra.mxu0 0.0
      %3737 = vmatprep.subr.mxu0 0.0
      %3738 = vmatpush1.msra.mxu0 0.0
      %3739 = vmatprep.subr.mxu0 0.0
      %3740 = vmatpush1.msra.mxu0 0.0
      %3741 = vmatprep.subr.mxu0 0.0
      %3742 = vmatpush1.msra.mxu0 0.0
      %3743 = vmatprep.subr.mxu0 0.0
      %3744 = vmatpush1.msra.mxu0 0.0
      %3745 = vmatprep.subr.mxu0 0.0
      %3746 = vmatpush1.msra.mxu0 0.0
      %3747 = vmatprep.subr.mxu0 0.0
      %3748 = vmatpush1.msra.mxu0 0.0
      %3749 = vmatprep.subr.mxu0 0.0
      %3750 = vmatpush1.msra.mxu0 0.0
      %3751 = vmatprep.subr.mxu0 0.0
      %3752 = vmatpush1.msra.mxu0 0.0
      %3753 = vmatprep.subr.mxu0 0.0
      %3754 = vmatpush1.msra.mxu0 0.0
      %3755 = vmatprep.subr.mxu0 0.0
      %3756 = vmatpush1.msra.mxu0 0.0
      %3757 = vmatprep.subr.mxu0 0.0
      %3758 = vmatpush1.msra.mxu0 0.0
      %3759 = vmatprep.subr.mxu0 0.0
      %3760 = vmatpush1.msra.mxu0 0.0
      %3761 = vmatprep.subr.mxu0 0.0
      %3762 = vmatpush1.msra.mxu0 0.0
      %3763 = vmatprep.subr.mxu0 0.0
      %3764 = vmatpush1.msra.mxu0 0.0
      %3765 = vmatprep.subr.mxu0 0.0
      %3766 = vmatpush1.msra.mxu0 0.0
      %3767 = vmatprep.subr.mxu0 0.0
      %3768 = vmatpush1.msra.mxu0 0.0
      %3769 = vmatprep.subr.mxu0 0.0
      %3770 = vmatpush1.msra.mxu0 0.0
      %3771 = vmatprep.subr.mxu0 0.0
      %3772 = vmatpush1.msra.mxu0 0.0
      %3773 = vmatprep.subr.mxu0 0.0
      %3774 = vmatpush1.msra.mxu0 0.0
      %3775 = vmatprep.subr.mxu0 0.0
      %3776 = vmatpush1.msra.mxu0 0.0
      %3777 = vmatprep.subr.mxu0 0.0
      %3778 = vmatpush1.msra.mxu0 0.0
      %3779 = vmatprep.subr.mxu0 0.0
      %3780 = vmatpush1.msra.mxu0 0.0
      %3781 = vmatprep.subr.mxu0 0.0
      %3782 = vmatpush1.msra.mxu0 0.0
      %3783 = vmatprep.subr.mxu0 0.0
      %3784 = vmatpush1.msra.mxu0 0.0
      %3785 = vmatprep.subr.mxu0 0.0
      %3786 = vmatpush1.msra.mxu0 0.0
      %3787 = vmatprep.mubr.f32.mxu0 0.0
      %3788 = vmatmul.mubr.f32.gmra.mrb[0].mxu0 %v3712
      %v3789 = vpop.f32.mrb[0].mxu0
      %v3790 = vadd.f32 0.0, %v3789
      %v3791 = vpop.f32.mrb[0].mxu0
      %v3792 = vadd.f32 0.0, %v3791
      %3793 = vmatprep.mubr.f32.mxu0 0.0
      %3794 = vmatmul.mubr.f32.gmra.mrb[0].mxu0 %v3715
      %v3795 = vpop.f32.mrb[0].mxu0
      %v3796 = vadd.f32 0.0, %v3795
      %v3797 = vpop.f32.mrb[0].mxu0
      %v3798 = vadd.f32 0.0, %v3797
      %3799 = vmatprep.mubr.f32.mxu0 0.0
      %3800 = vmatmul.mubr.f32.gmra.mrb[0].mxu0 %v3718
      %v3801 = vpop.f32.mrb[0].mxu0
      %v3802 = vadd.f32 0.0, %v3801
      %v3803 = vpop.f32.mrb[0].mxu0
      %v3804 = vadd.f32 0.0, %v3803
      %3805 = vmatprep.mubr.f32.mxu0 0.0
      %3806 = vmatmul.mubr.f32.gmra.mrb[0].mxu0 %v3721
      %v3807 = vpop.f32.mrb[0].mxu0
      %v3808 = vadd.f32 0.0, %v3807
      %v3809 = vpop.f32.mrb[0].mxu0
      %v3810 = vadd.f32 0.0, %v3809
      %3811 = vdwg.mxu0
      %3812 = vmatprep.subr.mxu0 %v2690
      %3813 = vmatpush1.msra.mxu0 %v2689
      %3814 = vmatprep.subr.mxu0 %v2694
      %3815 = vmatpush1.msra.mxu0 %v2693
      %3816 = vmatprep.subr.mxu0 %v2698
      %3817 = vmatpush1.msra.mxu0 %v2697
      %3818 = vmatprep.subr.mxu0 %v2702
      %3819 = vmatpush1.msra.mxu0 %v2701
      %3820 = vmatprep.subr.mxu0 0.0
      %3821 = vmatpush1.msra.mxu0 0.0
      %3822 = vmatprep.subr.mxu0 0.0
      %3823 = vmatpush1.msra.mxu0 0.0
      %3824 = vmatprep.subr.mxu0 0.0
      %3825 = vmatpush1.msra.mxu0 0.0
      %3826 = vmatprep.subr.mxu0 0.0
      %3827 = vmatpush1.msra.mxu0 0.0
      %3828 = vmatprep.subr.mxu0 0.0
      %3829 = vmatpush1.msra.mxu0 0.0
      %3830 = vmatprep.subr.mxu0 0.0
      %3831 = vmatpush1.msra.mxu0 0.0
      %3832 = vmatprep.subr.mxu0 0.0
      %3833 = vmatpush1.msra.mxu0 0.0
      %3834 = vmatprep.subr.mxu0 0.0
      %3835 = vmatpush1.msra.mxu0 0.0
      %3836 = vmatprep.subr.mxu0 0.0
      %3837 = vmatpush1.msra.mxu0 0.0
      %3838 = vmatprep.subr.mxu0 0.0
      %3839 = vmatpush1.msra.mxu0 0.0
      %3840 = vmatprep.subr.mxu0 0.0
      %3841 = vmatpush1.msra.mxu0 0.0
      %3842 = vmatprep.subr.mxu0 0.0
      %3843 = vmatpush1.msra.mxu0 0.0
      %3844 = vmatprep.subr.mxu0 0.0
      %3845 = vmatpush1.msra.mxu0 0.0
      %3846 = vmatprep.subr.mxu0 0.0
      %3847 = vmatpush1.msra.mxu0 0.0
      %3848 = vmatprep.subr.mxu0 0.0
      %3849 = vmatpush1.msra.mxu0 0.0
      %3850 = vmatprep.subr.mxu0 0.0
      %3851 = vmatpush1.msra.mxu0 0.0
      %3852 = vmatprep.subr.mxu0 0.0
      %3853 = vmatpush1.msra.mxu0 0.0
      %3854 = vmatprep.subr.mxu0 0.0
      %3855 = vmatpush1.msra.mxu0 0.0
      %3856 = vmatprep.subr.mxu0 0.0
      %3857 = vmatpush1.msra.mxu0 0.0
      %3858 = vmatprep.subr.mxu0 0.0
      %3859 = vmatpush1.msra.mxu0 0.0
      %3860 = vmatprep.subr.mxu0 0.0
      %3861 = vmatpush1.msra.mxu0 0.0
      %3862 = vmatprep.subr.mxu0 0.0
      %3863 = vmatpush1.msra.mxu0 0.0
      %3864 = vmatprep.subr.mxu0 0.0
      %3865 = vmatpush1.msra.mxu0 0.0
      %3866 = vmatprep.subr.mxu0 0.0
      %3867 = vmatpush1.msra.mxu0 0.0
      %3868 = vmatprep.subr.mxu0 0.0
      %3869 = vmatpush1.msra.mxu0 0.0
      %3870 = vmatprep.subr.mxu0 0.0
      %3871 = vmatpush1.msra.mxu0 0.0
      %3872 = vmatprep.subr.mxu0 0.0
      %3873 = vmatpush1.msra.mxu0 0.0
      %3874 = vmatprep.subr.mxu0 0.0
      %3875 = vmatpush1.msra.mxu0 0.0
      %3876 = vmatprep.mubr.f32.mxu0 0.0
      %3877 = vmatmul.mubr.f32.gmra.mrb[0].mxu0 %v3712
      %v3878 = vpop.f32.mrb[0].mxu0
      %v3879 = vadd.f32 0.0, %v3878
      %v3880 = vpop.f32.mrb[0].mxu0
      %v3881 = vadd.f32 0.0, %v3880
      %3882 = vmatprep.mubr.f32.mxu0 0.0
      %3883 = vmatmul.mubr.f32.gmra.mrb[0].mxu0 %v3715
      %v3884 = vpop.f32.mrb[0].mxu0
      %v3885 = vadd.f32 0.0, %v3884
      %v3886 = vpop.f32.mrb[0].mxu0
      %v3887 = vadd.f32 0.0, %v3886
      %3888 = vmatprep.mubr.f32.mxu0 0.0
      %3889 = vmatmul.mubr.f32.gmra.mrb[0].mxu0 %v3718
      %v3890 = vpop.f32.mrb[0].mxu0
      %v3891 = vadd.f32 0.0, %v3890
      %v3892 = vpop.f32.mrb[0].mxu0
      %v3893 = vadd.f32 0.0, %v3892
      %3894 = vmatprep.mubr.f32.mxu0 0.0
      %3895 = vmatmul.mubr.f32.gmra.mrb[0].mxu0 %v3721
      %v3896 = vpop.f32.mrb[0].mxu0
      %v3897 = vadd.f32 0.0, %v3896
      %v3898 = vpop.f32.mrb[0].mxu0
      %v3899 = vadd.f32 0.0, %v3898
      %3900 = vdwg.mxu0
      %v3901 = vadd.f32 %v3690, %v3790
      %v3902 = vadd.f32 %v3691, %v3792
      %v3903 = vadd.f32 %v3692, %v3879
      %v3904 = vadd.f32 %v3693, %v3881
      %v3905 = vadd.f32 %v3694, %v3796
      %v3906 = vadd.f32 %v3695, %v3798
      %v3907 = vadd.f32 %v3696, %v3885
      %v3908 = vadd.f32 %v3697, %v3887
      %v3909 = vadd.f32 %v3698, %v3802
      %v3910 = vadd.f32 %v3699, %v3804
      %v3911 = vadd.f32 %v3700, %v3891
      %v3912 = vadd.f32 %v3701, %v3893
      %v3913 = vadd.f32 %v3702, %v3808
      %v3914 = vadd.f32 %v3703, %v3810
      %v3915 = vadd.f32 %v3704, %v3897
      %v3916 = vadd.f32 %v3705, %v3899
      %3917 = vrot.lane.b32.xlu0 %v2687, 127
      %v3918 = vpop.permute.xlu0 %3917
      %3919 = vrot.lane.b32.xlu0 %v2691, 127
      %v3920 = vpop.permute.xlu0 %3919
      %3921 = vrot.lane.b32.xlu0 %v2695, 127
      %v3922 = vpop.permute.xlu0 %3921
      %3923 = vrot.lane.b32.xlu0 %v2699, 127
      %v3924 = vpop.permute.xlu0 %3923
      %3925 = vrot.lane.b32.xlu0 %v2688, 127
      %v3926 = vpop.permute.xlu0 %3925
      %3927 = vrot.lane.b32.xlu0 %v2692, 127
      %v3928 = vpop.permute.xlu0 %3927
      %3929 = vrot.lane.b32.xlu0 %v2696, 127
      %v3930 = vpop.permute.xlu0 %3929
      %3931 = vrot.lane.b32.xlu0 %v2700, 127
      %v3932 = vpop.permute.xlu0 %3931
      %3933 = vrot.lane.b32.xlu0 %v2689, 127
      %v3934 = vpop.permute.xlu0 %3933
      %3935 = vrot.lane.b32.xlu0 %v2693, 127
      %v3936 = vpop.permute.xlu0 %3935
      %3937 = vrot.lane.b32.xlu0 %v2697, 127
      %v3938 = vpop.permute.xlu0 %3937
      %3939 = vrot.lane.b32.xlu0 %v2701, 127
      %v3940 = vpop.permute.xlu0 %3939
      %3941 = vrot.lane.b32.xlu0 %v2690, 127
      %v3942 = vpop.permute.xlu0 %3941
      %3943 = vrot.lane.b32.xlu0 %v2694, 127
      %v3944 = vpop.permute.xlu0 %3943
      %3945 = vrot.lane.b32.xlu0 %v2698, 127
      %v3946 = vpop.permute.xlu0 %3945
      %3947 = vrot.lane.b32.xlu0 %v2702, 127
      %v3948 = vpop.permute.xlu0 %3947
      %v3949 = vsel %vm1601, %v3934, %v3942
      %v3950 = vsel %vm1601, %v3936, %v3944
      %v3951 = vsel %vm1601, %v3938, %v3946
      %v3952 = vsel %vm1601, %v3940, %v3948
      %v3953 = vsel %vm1601, %v3926, %v3934
      %v3954 = vsel %vm1601, %v3928, %v3936
      %v3955 = vsel %vm1601, %v3930, %v3938
      %v3956 = vsel %vm1601, %v3932, %v3940
      %v3957 = vsel %vm1601, %v3918, %v3926
      %v3958 = vsel %vm1601, %v3920, %v3928
      %v3959 = vsel %vm1601, %v3922, %v3930
      %v3960 = vsel %vm1601, %v3924, %v3932
      %v3961 = vsel %vm1601, %v3942, %v3918
      %v3962 = vsel %vm1601, %v3944, %v3920
      %v3963 = vsel %vm1601, %v3946, %v3922
      %v3964 = vsel %vm1601, %v3948, %v3924
      %s3965 = scalar_lea.vmem %s4, 160
      %v3966 = vld [vmem:[%s3965] sm:$0xff]
      %v3967 = vld [vmem:[%s3965 + $0x8] sm:$0xff]
      %v3968 = vld [vmem:[%s3965 + $0x10] sm:$0xff]
      %v3969 = vld [vmem:[%s3965 + $0x18] sm:$0xff]
      %v3971 = vsel %vm457, %v3966, 0
      %v3974 = vsel %vm457, %v3967, 0
      %v3977 = vsel %vm457, %v3968, 0
      %v3980 = vsel %vm457, %v3969, 0
      %3982 = vmatprep.subr.mxu0 %v3953
      %3983 = vmatpush1.msra.mxu0 %v3957
      %3984 = vmatprep.subr.mxu0 %v3954
      %3985 = vmatpush1.msra.mxu0 %v3958
      %3986 = vmatprep.subr.mxu0 %v3955
      %3987 = vmatpush1.msra.mxu0 %v3959
      %3988 = vmatprep.subr.mxu0 %v3956
      %3989 = vmatpush1.msra.mxu0 %v3960
      %3990 = vmatprep.subr.mxu0 0.0
      %3991 = vmatpush1.msra.mxu0 0.0
      %3992 = vmatprep.subr.mxu0 0.0
      %3993 = vmatpush1.msra.mxu0 0.0
      %3994 = vmatprep.subr.mxu0 0.0
      %3995 = vmatpush1.msra.mxu0 0.0
      %3996 = vmatprep.subr.mxu0 0.0
      %3997 = vmatpush1.msra.mxu0 0.0
      %3998 = vmatprep.subr.mxu0 0.0
      %3999 = vmatpush1.msra.mxu0 0.0
      %4000 = vmatprep.subr.mxu0 0.0
      %4001 = vmatpush1.msra.mxu0 0.0
      %4002 = vmatprep.subr.mxu0 0.0
      %4003 = vmatpush1.msra.mxu0 0.0
      %4004 = vmatprep.subr.mxu0 0.0
      %4005 = vmatpush1.msra.mxu0 0.0
      %4006 = vmatprep.subr.mxu0 0.0
      %4007 = vmatpush1.msra.mxu0 0.0
      %4008 = vmatprep.subr.mxu0 0.0
      %4009 = vmatpush1.msra.mxu0 0.0
      %4010 = vmatprep.subr.mxu0 0.0
      %4011 = vmatpush1.msra.mxu0 0.0
      %4012 = vmatprep.subr.mxu0 0.0
      %4013 = vmatpush1.msra.mxu0 0.0
      %4014 = vmatprep.subr.mxu0 0.0
      %4015 = vmatpush1.msra.mxu0 0.0
      %4016 = vmatprep.subr.mxu0 0.0
      %4017 = vmatpush1.msra.mxu0 0.0
      %4018 = vmatprep.subr.mxu0 0.0
      %4019 = vmatpush1.msra.mxu0 0.0
      %4020 = vmatprep.subr.mxu0 0.0
      %4021 = vmatpush1.msra.mxu0 0.0
      %4022 = vmatprep.subr.mxu0 0.0
      %4023 = vmatpush1.msra.mxu0 0.0
      %4024 = vmatprep.subr.mxu0 0.0
      %4025 = vmatpush1.msra.mxu0 0.0
      %4026 = vmatprep.subr.mxu0 0.0
      %4027 = vmatpush1.msra.mxu0 0.0
      %4028 = vmatprep.subr.mxu0 0.0
      %4029 = vmatpush1.msra.mxu0 0.0
      %4030 = vmatprep.subr.mxu0 0.0
      %4031 = vmatpush1.msra.mxu0 0.0
      %4032 = vmatprep.subr.mxu0 0.0
      %4033 = vmatpush1.msra.mxu0 0.0
      %4034 = vmatprep.subr.mxu0 0.0
      %4035 = vmatpush1.msra.mxu0 0.0
      %4036 = vmatprep.subr.mxu0 0.0
      %4037 = vmatpush1.msra.mxu0 0.0
      %4038 = vmatprep.subr.mxu0 0.0
      %4039 = vmatpush1.msra.mxu0 0.0
      %4040 = vmatprep.subr.mxu0 0.0
      %4041 = vmatpush1.msra.mxu0 0.0
      %4042 = vmatprep.subr.mxu0 0.0
      %4043 = vmatpush1.msra.mxu0 0.0
      %4044 = vmatprep.subr.mxu0 0.0
      %4045 = vmatpush1.msra.mxu0 0.0
      %4046 = vmatprep.mubr.f32.mxu0 0.0
      %4047 = vmatmul.mubr.f32.gmra.mrb[0].mxu0 %v3971
      %v4048 = vpop.f32.mrb[0].mxu0
      %v4049 = vadd.f32 0.0, %v4048
      %v4050 = vpop.f32.mrb[0].mxu0
      %v4051 = vadd.f32 0.0, %v4050
      %4052 = vmatprep.mubr.f32.mxu0 0.0
      %4053 = vmatmul.mubr.f32.gmra.mrb[0].mxu0 %v3974
      %v4054 = vpop.f32.mrb[0].mxu0
      %v4055 = vadd.f32 0.0, %v4054
      %v4056 = vpop.f32.mrb[0].mxu0
      %v4057 = vadd.f32 0.0, %v4056
      %4058 = vmatprep.mubr.f32.mxu0 0.0
      %4059 = vmatmul.mubr.f32.gmra.mrb[0].mxu0 %v3977
      %v4060 = vpop.f32.mrb[0].mxu0
      %v4061 = vadd.f32 0.0, %v4060
      %v4062 = vpop.f32.mrb[0].mxu0
      %v4063 = vadd.f32 0.0, %v4062
      %4064 = vmatprep.mubr.f32.mxu0 0.0
      %4065 = vmatmul.mubr.f32.gmra.mrb[0].mxu0 %v3980
      %v4066 = vpop.f32.mrb[0].mxu0
      %v4067 = vadd.f32 0.0, %v4066
      %v4068 = vpop.f32.mrb[0].mxu0
      %v4069 = vadd.f32 0.0, %v4068
      %4070 = vdwg.mxu0
      %4071 = vmatprep.subr.mxu0 %v3961
      %4072 = vmatpush1.msra.mxu0 %v3949
      %4073 = vmatprep.subr.mxu0 %v3962
      %4074 = vmatpush1.msra.mxu0 %v3950
      %4075 = vmatprep.subr.mxu0 %v3963
      %4076 = vmatpush1.msra.mxu0 %v3951
      %4077 = vmatprep.subr.mxu0 %v3964
      %4078 = vmatpush1.msra.mxu0 %v3952
      %4079 = vmatprep.subr.mxu0 0.0
      %4080 = vmatpush1.msra.mxu0 0.0
      %4081 = vmatprep.subr.mxu0 0.0
      %4082 = vmatpush1.msra.mxu0 0.0
      %4083 = vmatprep.subr.mxu0 0.0
      %4084 = vmatpush1.msra.mxu0 0.0
      %4085 = vmatprep.subr.mxu0 0.0
      %4086 = vmatpush1.msra.mxu0 0.0
      %4087 = vmatprep.subr.mxu0 0.0
      %4088 = vmatpush1.msra.mxu0 0.0
      %4089 = vmatprep.subr.mxu0 0.0
      %4090 = vmatpush1.msra.mxu0 0.0
      %4091 = vmatprep.subr.mxu0 0.0
      %4092 = vmatpush1.msra.mxu0 0.0
      %4093 = vmatprep.subr.mxu0 0.0
      %4094 = vmatpush1.msra.mxu0 0.0
      %4095 = vmatprep.subr.mxu0 0.0
      %4096 = vmatpush1.msra.mxu0 0.0
      %4097 = vmatprep.subr.mxu0 0.0
      %4098 = vmatpush1.msra.mxu0 0.0
      %4099 = vmatprep.subr.mxu0 0.0
      %4100 = vmatpush1.msra.mxu0 0.0
      %4101 = vmatprep.subr.mxu0 0.0
      %4102 = vmatpush1.msra.mxu0 0.0
      %4103 = vmatprep.subr.mxu0 0.0
      %4104 = vmatpush1.msra.mxu0 0.0
      %4105 = vmatprep.subr.mxu0 0.0
      %4106 = vmatpush1.msra.mxu0 0.0
      %4107 = vmatprep.subr.mxu0 0.0
      %4108 = vmatpush1.msra.mxu0 0.0
      %4109 = vmatprep.subr.mxu0 0.0
      %4110 = vmatpush1.msra.mxu0 0.0
      %4111 = vmatprep.subr.mxu0 0.0
      %4112 = vmatpush1.msra.mxu0 0.0
      %4113 = vmatprep.subr.mxu0 0.0
      %4114 = vmatpush1.msra.mxu0 0.0
      %4115 = vmatprep.subr.mxu0 0.0
      %4116 = vmatpush1.msra.mxu0 0.0
      %4117 = vmatprep.subr.mxu0 0.0
      %4118 = vmatpush1.msra.mxu0 0.0
      %4119 = vmatprep.subr.mxu0 0.0
      %4120 = vmatpush1.msra.mxu0 0.0
      %4121 = vmatprep.subr.mxu0 0.0
      %4122 = vmatpush1.msra.mxu0 0.0
      %4123 = vmatprep.subr.mxu0 0.0
      %4124 = vmatpush1.msra.mxu0 0.0
      %4125 = vmatprep.subr.mxu0 0.0
      %4126 = vmatpush1.msra.mxu0 0.0
      %4127 = vmatprep.subr.mxu0 0.0
      %4128 = vmatpush1.msra.mxu0 0.0
      %4129 = vmatprep.subr.mxu0 0.0
      %4130 = vmatpush1.msra.mxu0 0.0
      %4131 = vmatprep.subr.mxu0 0.0
      %4132 = vmatpush1.msra.mxu0 0.0
      %4133 = vmatprep.subr.mxu0 0.0
      %4134 = vmatpush1.msra.mxu0 0.0
      %4135 = vmatprep.mubr.f32.mxu0 0.0
      %4136 = vmatmul.mubr.f32.gmra.mrb[0].mxu0 %v3971
      %v4137 = vpop.f32.mrb[0].mxu0
      %v4138 = vadd.f32 0.0, %v4137
      %v4139 = vpop.f32.mrb[0].mxu0
      %v4140 = vadd.f32 0.0, %v4139
      %4141 = vmatprep.mubr.f32.mxu0 0.0
      %4142 = vmatmul.mubr.f32.gmra.mrb[0].mxu0 %v3974
      %v4143 = vpop.f32.mrb[0].mxu0
      %v4144 = vadd.f32 0.0, %v4143
      %v4145 = vpop.f32.mrb[0].mxu0
      %v4146 = vadd.f32 0.0, %v4145
      %4147 = vmatprep.mubr.f32.mxu0 0.0
      %4148 = vmatmul.mubr.f32.gmra.mrb[0].mxu0 %v3977
      %v4149 = vpop.f32.mrb[0].mxu0
      %v4150 = vadd.f32 0.0, %v4149
      %v4151 = vpop.f32.mrb[0].mxu0
      %v4152 = vadd.f32 0.0, %v4151
      %4153 = vmatprep.mubr.f32.mxu0 0.0
      %4154 = vmatmul.mubr.f32.gmra.mrb[0].mxu0 %v3980
      %v4155 = vpop.f32.mrb[0].mxu0
      %v4156 = vadd.f32 0.0, %v4155
      %v4157 = vpop.f32.mrb[0].mxu0
      %v4158 = vadd.f32 0.0, %v4157
      %4159 = vdwg.mxu0
      %v4160 = vadd.f32 %v3901, %v4049
      %v4161 = vadd.f32 %v3902, %v4051
      %v4162 = vadd.f32 %v3903, %v4138
      %v4163 = vadd.f32 %v3904, %v4140
      %v4164 = vadd.f32 %v3905, %v4055
      %v4165 = vadd.f32 %v3906, %v4057
      %v4166 = vadd.f32 %v3907, %v4144
      %v4167 = vadd.f32 %v3908, %v4146
      %v4168 = vadd.f32 %v3909, %v4061
      %v4169 = vadd.f32 %v3910, %v4063
      %v4170 = vadd.f32 %v3911, %v4150
      %v4171 = vadd.f32 %v3912, %v4152
      %v4172 = vadd.f32 %v3913, %v4067
      %v4173 = vadd.f32 %v3914, %v4069
      %v4174 = vadd.f32 %v3915, %v4156
      %v4175 = vadd.f32 %v3916, %v4158
      %4176 = vrot.lane.b32.xlu0 %v2687, 109
      %v4177 = vpop.permute.xlu0 %4176
      %4178 = vrot.lane.b32.xlu0 %v2691, 109
      %v4179 = vpop.permute.xlu0 %4178
      %4180 = vrot.lane.b32.xlu0 %v2695, 109
      %v4181 = vpop.permute.xlu0 %4180
      %4182 = vrot.lane.b32.xlu0 %v2699, 109
      %v4183 = vpop.permute.xlu0 %4182
      %4184 = vrot.lane.b32.xlu0 %v2688, 109
      %v4185 = vpop.permute.xlu0 %4184
      %4186 = vrot.lane.b32.xlu0 %v2692, 109
      %v4187 = vpop.permute.xlu0 %4186
      %4188 = vrot.lane.b32.xlu0 %v2696, 109
      %v4189 = vpop.permute.xlu0 %4188
      %4190 = vrot.lane.b32.xlu0 %v2700, 109
      %v4191 = vpop.permute.xlu0 %4190
      %4192 = vrot.lane.b32.xlu0 %v2689, 109
      %v4193 = vpop.permute.xlu0 %4192
      %4194 = vrot.lane.b32.xlu0 %v2693, 109
      %v4195 = vpop.permute.xlu0 %4194
      %4196 = vrot.lane.b32.xlu0 %v2697, 109
      %v4197 = vpop.permute.xlu0 %4196
      %4198 = vrot.lane.b32.xlu0 %v2701, 109
      %v4199 = vpop.permute.xlu0 %4198
      %4200 = vrot.lane.b32.xlu0 %v2690, 109
      %v4201 = vpop.permute.xlu0 %4200
      %4202 = vrot.lane.b32.xlu0 %v2694, 109
      %v4203 = vpop.permute.xlu0 %4202
      %4204 = vrot.lane.b32.xlu0 %v2698, 109
      %v4205 = vpop.permute.xlu0 %4204
      %4206 = vrot.lane.b32.xlu0 %v2702, 109
      %v4207 = vpop.permute.xlu0 %4206
      %v4208 = vsel %vm1861, %v4193, %v4201
      %v4209 = vsel %vm1861, %v4195, %v4203
      %v4210 = vsel %vm1861, %v4197, %v4205
      %v4211 = vsel %vm1861, %v4199, %v4207
      %v4212 = vsel %vm1861, %v4185, %v4193
      %v4213 = vsel %vm1861, %v4187, %v4195
      %v4214 = vsel %vm1861, %v4189, %v4197
      %v4215 = vsel %vm1861, %v4191, %v4199
      %v4216 = vsel %vm1861, %v4177, %v4185
      %v4217 = vsel %vm1861, %v4179, %v4187
      %v4218 = vsel %vm1861, %v4181, %v4189
      %v4219 = vsel %vm1861, %v4183, %v4191
      %v4220 = vsel %vm1861, %v4201, %v4177
      %v4221 = vsel %vm1861, %v4203, %v4179
      %v4222 = vsel %vm1861, %v4205, %v4181
      %v4223 = vsel %vm1861, %v4207, %v4183
      %s4224 = scalar_lea.vmem %s4, 192
      %v4225 = vld [vmem:[%s4224] sm:$0xff]
      %v4226 = vld [vmem:[%s4224 + $0x8] sm:$0xff]
      %v4227 = vld [vmem:[%s4224 + $0x10] sm:$0xff]
      %v4228 = vld [vmem:[%s4224 + $0x18] sm:$0xff]
      %v4230 = vsel %vm457, %v4225, 0
      %v4233 = vsel %vm457, %v4226, 0
      %v4236 = vsel %vm457, %v4227, 0
      %v4239 = vsel %vm457, %v4228, 0
      %4241 = vmatprep.subr.mxu0 %v4212
      %4242 = vmatpush1.msra.mxu0 %v4216
      %4243 = vmatprep.subr.mxu0 %v4213
      %4244 = vmatpush1.msra.mxu0 %v4217
      %4245 = vmatprep.subr.mxu0 %v4214
      %4246 = vmatpush1.msra.mxu0 %v4218
      %4247 = vmatprep.subr.mxu0 %v4215
      %4248 = vmatpush1.msra.mxu0 %v4219
      %4249 = vmatprep.subr.mxu0 0.0
      %4250 = vmatpush1.msra.mxu0 0.0
      %4251 = vmatprep.subr.mxu0 0.0
      %4252 = vmatpush1.msra.mxu0 0.0
      %4253 = vmatprep.subr.mxu0 0.0
      %4254 = vmatpush1.msra.mxu0 0.0
      %4255 = vmatprep.subr.mxu0 0.0
      %4256 = vmatpush1.msra.mxu0 0.0
      %4257 = vmatprep.subr.mxu0 0.0
      %4258 = vmatpush1.msra.mxu0 0.0
      %4259 = vmatprep.subr.mxu0 0.0
      %4260 = vmatpush1.msra.mxu0 0.0
      %4261 = vmatprep.subr.mxu0 0.0
      %4262 = vmatpush1.msra.mxu0 0.0
      %4263 = vmatprep.subr.mxu0 0.0
      %4264 = vmatpush1.msra.mxu0 0.0
      %4265 = vmatprep.subr.mxu0 0.0
      %4266 = vmatpush1.msra.mxu0 0.0
      %4267 = vmatprep.subr.mxu0 0.0
      %4268 = vmatpush1.msra.mxu0 0.0
      %4269 = vmatprep.subr.mxu0 0.0
      %4270 = vmatpush1.msra.mxu0 0.0
      %4271 = vmatprep.subr.mxu0 0.0
      %4272 = vmatpush1.msra.mxu0 0.0
      %4273 = vmatprep.subr.mxu0 0.0
      %4274 = vmatpush1.msra.mxu0 0.0
      %4275 = vmatprep.subr.mxu0 0.0
      %4276 = vmatpush1.msra.mxu0 0.0
      %4277 = vmatprep.subr.mxu0 0.0
      %4278 = vmatpush1.msra.mxu0 0.0
      %4279 = vmatprep.subr.mxu0 0.0
      %4280 = vmatpush1.msra.mxu0 0.0
      %4281 = vmatprep.subr.mxu0 0.0
      %4282 = vmatpush1.msra.mxu0 0.0
      %4283 = vmatprep.subr.mxu0 0.0
      %4284 = vmatpush1.msra.mxu0 0.0
      %4285 = vmatprep.subr.mxu0 0.0
      %4286 = vmatpush1.msra.mxu0 0.0
      %4287 = vmatprep.subr.mxu0 0.0
      %4288 = vmatpush1.msra.mxu0 0.0
      %4289 = vmatprep.subr.mxu0 0.0
      %4290 = vmatpush1.msra.mxu0 0.0
      %4291 = vmatprep.subr.mxu0 0.0
      %4292 = vmatpush1.msra.mxu0 0.0
      %4293 = vmatprep.subr.mxu0 0.0
      %4294 = vmatpush1.msra.mxu0 0.0
      %4295 = vmatprep.subr.mxu0 0.0
      %4296 = vmatpush1.msra.mxu0 0.0
      %4297 = vmatprep.subr.mxu0 0.0
      %4298 = vmatpush1.msra.mxu0 0.0
      %4299 = vmatprep.subr.mxu0 0.0
      %4300 = vmatpush1.msra.mxu0 0.0
      %4301 = vmatprep.subr.mxu0 0.0
      %4302 = vmatpush1.msra.mxu0 0.0
      %4303 = vmatprep.subr.mxu0 0.0
      %4304 = vmatpush1.msra.mxu0 0.0
      %4305 = vmatprep.mubr.f32.mxu0 0.0
      %4306 = vmatmul.mubr.f32.gmra.mrb[0].mxu0 %v4230
      %v4307 = vpop.f32.mrb[0].mxu0
      %v4308 = vadd.f32 0.0, %v4307
      %v4309 = vpop.f32.mrb[0].mxu0
      %v4310 = vadd.f32 0.0, %v4309
      %4311 = vmatprep.mubr.f32.mxu0 0.0
      %4312 = vmatmul.mubr.f32.gmra.mrb[0].mxu0 %v4233
      %v4313 = vpop.f32.mrb[0].mxu0
      %v4314 = vadd.f32 0.0, %v4313
      %v4315 = vpop.f32.mrb[0].mxu0
      %v4316 = vadd.f32 0.0, %v4315
      %4317 = vmatprep.mubr.f32.mxu0 0.0
      %4318 = vmatmul.mubr.f32.gmra.mrb[0].mxu0 %v4236
      %v4319 = vpop.f32.mrb[0].mxu0
      %v4320 = vadd.f32 0.0, %v4319
      %v4321 = vpop.f32.mrb[0].mxu0
      %v4322 = vadd.f32 0.0, %v4321
      %4323 = vmatprep.mubr.f32.mxu0 0.0
      %4324 = vmatmul.mubr.f32.gmra.mrb[0].mxu0 %v4239
      %v4325 = vpop.f32.mrb[0].mxu0
      %v4326 = vadd.f32 0.0, %v4325
      %v4327 = vpop.f32.mrb[0].mxu0
      %v4328 = vadd.f32 0.0, %v4327
      %4329 = vdwg.mxu0
      %4330 = vmatprep.subr.mxu0 %v4220
      %4331 = vmatpush1.msra.mxu0 %v4208
      %4332 = vmatprep.subr.mxu0 %v4221
      %4333 = vmatpush1.msra.mxu0 %v4209
      %4334 = vmatprep.subr.mxu0 %v4222
      %4335 = vmatpush1.msra.mxu0 %v4210
      %4336 = vmatprep.subr.mxu0 %v4223
      %4337 = vmatpush1.msra.mxu0 %v4211
      %4338 = vmatprep.subr.mxu0 0.0
      %4339 = vmatpush1.msra.mxu0 0.0
      %4340 = vmatprep.subr.mxu0 0.0
      %4341 = vmatpush1.msra.mxu0 0.0
      %4342 = vmatprep.subr.mxu0 0.0
      %4343 = vmatpush1.msra.mxu0 0.0
      %4344 = vmatprep.subr.mxu0 0.0
      %4345 = vmatpush1.msra.mxu0 0.0
      %4346 = vmatprep.subr.mxu0 0.0
      %4347 = vmatpush1.msra.mxu0 0.0
      %4348 = vmatprep.subr.mxu0 0.0
      %4349 = vmatpush1.msra.mxu0 0.0
      %4350 = vmatprep.subr.mxu0 0.0
      %4351 = vmatpush1.msra.mxu0 0.0
      %4352 = vmatprep.subr.mxu0 0.0
      %4353 = vmatpush1.msra.mxu0 0.0
      %4354 = vmatprep.subr.mxu0 0.0
      %4355 = vmatpush1.msra.mxu0 0.0
      %4356 = vmatprep.subr.mxu0 0.0
      %4357 = vmatpush1.msra.mxu0 0.0
      %4358 = vmatprep.subr.mxu0 0.0
      %4359 = vmatpush1.msra.mxu0 0.0
      %4360 = vmatprep.subr.mxu0 0.0
      %4361 = vmatpush1.msra.mxu0 0.0
      %4362 = vmatprep.subr.mxu0 0.0
      %4363 = vmatpush1.msra.mxu0 0.0
      %4364 = vmatprep.subr.mxu0 0.0
      %4365 = vmatpush1.msra.mxu0 0.0
      %4366 = vmatprep.subr.mxu0 0.0
      %4367 = vmatpush1.msra.mxu0 0.0
      %4368 = vmatprep.subr.mxu0 0.0
      %4369 = vmatpush1.msra.mxu0 0.0
      %4370 = vmatprep.subr.mxu0 0.0
      %4371 = vmatpush1.msra.mxu0 0.0
      %4372 = vmatprep.subr.mxu0 0.0
      %4373 = vmatpush1.msra.mxu0 0.0
      %4374 = vmatprep.subr.mxu0 0.0
      %4375 = vmatpush1.msra.mxu0 0.0
      %4376 = vmatprep.subr.mxu0 0.0
      %4377 = vmatpush1.msra.mxu0 0.0
      %4378 = vmatprep.subr.mxu0 0.0
      %4379 = vmatpush1.msra.mxu0 0.0
      %4380 = vmatprep.subr.mxu0 0.0
      %4381 = vmatpush1.msra.mxu0 0.0
      %4382 = vmatprep.subr.mxu0 0.0
      %4383 = vmatpush1.msra.mxu0 0.0
      %4384 = vmatprep.subr.mxu0 0.0
      %4385 = vmatpush1.msra.mxu0 0.0
      %4386 = vmatprep.subr.mxu0 0.0
      %4387 = vmatpush1.msra.mxu0 0.0
      %4388 = vmatprep.subr.mxu0 0.0
      %4389 = vmatpush1.msra.mxu0 0.0
      %4390 = vmatprep.subr.mxu0 0.0
      %4391 = vmatpush1.msra.mxu0 0.0
      %4392 = vmatprep.subr.mxu0 0.0
      %4393 = vmatpush1.msra.mxu0 0.0
      %4394 = vmatprep.mubr.f32.mxu0 0.0
      %4395 = vmatmul.mubr.f32.gmra.mrb[0].mxu0 %v4230
      %v4396 = vpop.f32.mrb[0].mxu0
      %v4397 = vadd.f32 0.0, %v4396
      %v4398 = vpop.f32.mrb[0].mxu0
      %v4399 = vadd.f32 0.0, %v4398
      %4400 = vmatprep.mubr.f32.mxu0 0.0
      %4401 = vmatmul.mubr.f32.gmra.mrb[0].mxu0 %v4233
      %v4402 = vpop.f32.mrb[0].mxu0
      %v4403 = vadd.f32 0.0, %v4402
      %v4404 = vpop.f32.mrb[0].mxu0
      %v4405 = vadd.f32 0.0, %v4404
      %4406 = vmatprep.mubr.f32.mxu0 0.0
      %4407 = vmatmul.mubr.f32.gmra.mrb[0].mxu0 %v4236
      %v4408 = vpop.f32.mrb[0].mxu0
      %v4409 = vadd.f32 0.0, %v4408
      %v4410 = vpop.f32.mrb[0].mxu0
      %v4411 = vadd.f32 0.0, %v4410
      %4412 = vmatprep.mubr.f32.mxu0 0.0
      %4413 = vmatmul.mubr.f32.gmra.mrb[0].mxu0 %v4239
      %v4414 = vpop.f32.mrb[0].mxu0
      %v4415 = vadd.f32 0.0, %v4414
      %v4416 = vpop.f32.mrb[0].mxu0
      %v4417 = vadd.f32 0.0, %v4416
      %4418 = vdwg.mxu0
      %v4419 = vadd.f32 %v4160, %v4308
      %v4420 = vadd.f32 %v4161, %v4310
      %v4421 = vadd.f32 %v4162, %v4397
      %v4422 = vadd.f32 %v4163, %v4399
      %v4423 = vadd.f32 %v4164, %v4314
      %v4424 = vadd.f32 %v4165, %v4316
      %v4425 = vadd.f32 %v4166, %v4403
      %v4426 = vadd.f32 %v4167, %v4405
      %v4427 = vadd.f32 %v4168, %v4320
      %v4428 = vadd.f32 %v4169, %v4322
      %v4429 = vadd.f32 %v4170, %v4409
      %v4430 = vadd.f32 %v4171, %v4411
      %v4431 = vadd.f32 %v4172, %v4326
      %v4432 = vadd.f32 %v4173, %v4328
      %v4433 = vadd.f32 %v4174, %v4415
      %v4434 = vadd.f32 %v4175, %v4417
      %4435 = vrot.lane.b32.xlu0 %v2687, 108
      %v4436 = vpop.permute.xlu0 %4435
      %4437 = vrot.lane.b32.xlu0 %v2691, 108
      %v4438 = vpop.permute.xlu0 %4437
      %4439 = vrot.lane.b32.xlu0 %v2695, 108
      %v4440 = vpop.permute.xlu0 %4439
      %4441 = vrot.lane.b32.xlu0 %v2699, 108
      %v4442 = vpop.permute.xlu0 %4441
      %4443 = vrot.lane.b32.xlu0 %v2688, 108
      %v4444 = vpop.permute.xlu0 %4443
      %4445 = vrot.lane.b32.xlu0 %v2692, 108
      %v4446 = vpop.permute.xlu0 %4445
      %4447 = vrot.lane.b32.xlu0 %v2696, 108
      %v4448 = vpop.permute.xlu0 %4447
      %4449 = vrot.lane.b32.xlu0 %v2700, 108
      %v4450 = vpop.permute.xlu0 %4449
      %4451 = vrot.lane.b32.xlu0 %v2689, 108
      %v4452 = vpop.permute.xlu0 %4451
      %4453 = vrot.lane.b32.xlu0 %v2693, 108
      %v4454 = vpop.permute.xlu0 %4453
      %4455 = vrot.lane.b32.xlu0 %v2697, 108
      %v4456 = vpop.permute.xlu0 %4455
      %4457 = vrot.lane.b32.xlu0 %v2701, 108
      %v4458 = vpop.permute.xlu0 %4457
      %4459 = vrot.lane.b32.xlu0 %v2690, 108
      %v4460 = vpop.permute.xlu0 %4459
      %4461 = vrot.lane.b32.xlu0 %v2694, 108
      %v4462 = vpop.permute.xlu0 %4461
      %4463 = vrot.lane.b32.xlu0 %v2698, 108
      %v4464 = vpop.permute.xlu0 %4463
      %4465 = vrot.lane.b32.xlu0 %v2702, 108
      %v4466 = vpop.permute.xlu0 %4465
      %v4467 = vsel %vm2121, %v4452, %v4460
      %v4468 = vsel %vm2121, %v4454, %v4462
      %v4469 = vsel %vm2121, %v4456, %v4464
      %v4470 = vsel %vm2121, %v4458, %v4466
      %v4471 = vsel %vm2121, %v4444, %v4452
      %v4472 = vsel %vm2121, %v4446, %v4454
      %v4473 = vsel %vm2121, %v4448, %v4456
      %v4474 = vsel %vm2121, %v4450, %v4458
      %v4475 = vsel %vm2121, %v4436, %v4444
      %v4476 = vsel %vm2121, %v4438, %v4446
      %v4477 = vsel %vm2121, %v4440, %v4448
      %v4478 = vsel %vm2121, %v4442, %v4450
      %v4479 = vsel %vm2121, %v4460, %v4436
      %v4480 = vsel %vm2121, %v4462, %v4438
      %v4481 = vsel %vm2121, %v4464, %v4440
      %v4482 = vsel %vm2121, %v4466, %v4442
      %s4483 = scalar_lea.vmem %s4, 224
      %v4484 = vld [vmem:[%s4483] sm:$0xff]
      %v4485 = vld [vmem:[%s4483 + $0x8] sm:$0xff]
      %v4486 = vld [vmem:[%s4483 + $0x10] sm:$0xff]
      %v4487 = vld [vmem:[%s4483 + $0x18] sm:$0xff]
      %v4489 = vsel %vm457, %v4484, 0
      %v4492 = vsel %vm457, %v4485, 0
      %v4495 = vsel %vm457, %v4486, 0
      %v4498 = vsel %vm457, %v4487, 0
      %4500 = vmatprep.subr.mxu0 %v4471
      %4501 = vmatpush1.msra.mxu0 %v4475
      %4502 = vmatprep.subr.mxu0 %v4472
      %4503 = vmatpush1.msra.mxu0 %v4476
      %4504 = vmatprep.subr.mxu0 %v4473
      %4505 = vmatpush1.msra.mxu0 %v4477
      %4506 = vmatprep.subr.mxu0 %v4474
      %4507 = vmatpush1.msra.mxu0 %v4478
      %4508 = vmatprep.subr.mxu0 0.0
      %4509 = vmatpush1.msra.mxu0 0.0
      %4510 = vmatprep.subr.mxu0 0.0
      %4511 = vmatpush1.msra.mxu0 0.0
      %4512 = vmatprep.subr.mxu0 0.0
      %4513 = vmatpush1.msra.mxu0 0.0
      %4514 = vmatprep.subr.mxu0 0.0
      %4515 = vmatpush1.msra.mxu0 0.0
      %4516 = vmatprep.subr.mxu0 0.0
      %4517 = vmatpush1.msra.mxu0 0.0
      %4518 = vmatprep.subr.mxu0 0.0
      %4519 = vmatpush1.msra.mxu0 0.0
      %4520 = vmatprep.subr.mxu0 0.0
      %4521 = vmatpush1.msra.mxu0 0.0
      %4522 = vmatprep.subr.mxu0 0.0
      %4523 = vmatpush1.msra.mxu0 0.0
      %4524 = vmatprep.subr.mxu0 0.0
      %4525 = vmatpush1.msra.mxu0 0.0
      %4526 = vmatprep.subr.mxu0 0.0
      %4527 = vmatpush1.msra.mxu0 0.0
      %4528 = vmatprep.subr.mxu0 0.0
      %4529 = vmatpush1.msra.mxu0 0.0
      %4530 = vmatprep.subr.mxu0 0.0
      %4531 = vmatpush1.msra.mxu0 0.0
      %4532 = vmatprep.subr.mxu0 0.0
      %4533 = vmatpush1.msra.mxu0 0.0
      %4534 = vmatprep.subr.mxu0 0.0
      %4535 = vmatpush1.msra.mxu0 0.0
      %4536 = vmatprep.subr.mxu0 0.0
      %4537 = vmatpush1.msra.mxu0 0.0
      %4538 = vmatprep.subr.mxu0 0.0
      %4539 = vmatpush1.msra.mxu0 0.0
      %4540 = vmatprep.subr.mxu0 0.0
      %4541 = vmatpush1.msra.mxu0 0.0
      %4542 = vmatprep.subr.mxu0 0.0
      %4543 = vmatpush1.msra.mxu0 0.0
      %4544 = vmatprep.subr.mxu0 0.0
      %4545 = vmatpush1.msra.mxu0 0.0
      %4546 = vmatprep.subr.mxu0 0.0
      %4547 = vmatpush1.msra.mxu0 0.0
      %4548 = vmatprep.subr.mxu0 0.0
      %4549 = vmatpush1.msra.mxu0 0.0
      %4550 = vmatprep.subr.mxu0 0.0
      %4551 = vmatpush1.msra.mxu0 0.0
      %4552 = vmatprep.subr.mxu0 0.0
      %4553 = vmatpush1.msra.mxu0 0.0
      %4554 = vmatprep.subr.mxu0 0.0
      %4555 = vmatpush1.msra.mxu0 0.0
      %4556 = vmatprep.subr.mxu0 0.0
      %4557 = vmatpush1.msra.mxu0 0.0
      %4558 = vmatprep.subr.mxu0 0.0
      %4559 = vmatpush1.msra.mxu0 0.0
      %4560 = vmatprep.subr.mxu0 0.0
      %4561 = vmatpush1.msra.mxu0 0.0
      %4562 = vmatprep.subr.mxu0 0.0
      %4563 = vmatpush1.msra.mxu0 0.0
      %4564 = vmatprep.mubr.f32.mxu0 0.0
      %4565 = vmatmul.mubr.f32.gmra.mrb[0].mxu0 %v4489
      %v4566 = vpop.f32.mrb[0].mxu0
      %v4567 = vadd.f32 0.0, %v4566
      %v4568 = vpop.f32.mrb[0].mxu0
      %v4569 = vadd.f32 0.0, %v4568
      %4570 = vmatprep.mubr.f32.mxu0 0.0
      %4571 = vmatmul.mubr.f32.gmra.mrb[0].mxu0 %v4492
      %v4572 = vpop.f32.mrb[0].mxu0
      %v4573 = vadd.f32 0.0, %v4572
      %v4574 = vpop.f32.mrb[0].mxu0
      %v4575 = vadd.f32 0.0, %v4574
      %4576 = vmatprep.mubr.f32.mxu0 0.0
      %4577 = vmatmul.mubr.f32.gmra.mrb[0].mxu0 %v4495
      %v4578 = vpop.f32.mrb[0].mxu0
      %v4579 = vadd.f32 0.0, %v4578
      %v4580 = vpop.f32.mrb[0].mxu0
      %v4581 = vadd.f32 0.0, %v4580
      %4582 = vmatprep.mubr.f32.mxu0 0.0
      %4583 = vmatmul.mubr.f32.gmra.mrb[0].mxu0 %v4498
      %v4584 = vpop.f32.mrb[0].mxu0
      %v4585 = vadd.f32 0.0, %v4584
      %v4586 = vpop.f32.mrb[0].mxu0
      %v4587 = vadd.f32 0.0, %v4586
      %4588 = vdwg.mxu0
      %4589 = vmatprep.subr.mxu0 %v4479
      %4590 = vmatpush1.msra.mxu0 %v4467
      %4591 = vmatprep.subr.mxu0 %v4480
      %4592 = vmatpush1.msra.mxu0 %v4468
      %4593 = vmatprep.subr.mxu0 %v4481
      %4594 = vmatpush1.msra.mxu0 %v4469
      %4595 = vmatprep.subr.mxu0 %v4482
      %4596 = vmatpush1.msra.mxu0 %v4470
      %4597 = vmatprep.subr.mxu0 0.0
      %4598 = vmatpush1.msra.mxu0 0.0
      %4599 = vmatprep.subr.mxu0 0.0
      %4600 = vmatpush1.msra.mxu0 0.0
      %4601 = vmatprep.subr.mxu0 0.0
      %4602 = vmatpush1.msra.mxu0 0.0
      %4603 = vmatprep.subr.mxu0 0.0
      %4604 = vmatpush1.msra.mxu0 0.0
      %4605 = vmatprep.subr.mxu0 0.0
      %4606 = vmatpush1.msra.mxu0 0.0
      %4607 = vmatprep.subr.mxu0 0.0
      %4608 = vmatpush1.msra.mxu0 0.0
      %4609 = vmatprep.subr.mxu0 0.0
      %4610 = vmatpush1.msra.mxu0 0.0
      %4611 = vmatprep.subr.mxu0 0.0
      %4612 = vmatpush1.msra.mxu0 0.0
      %4613 = vmatprep.subr.mxu0 0.0
      %4614 = vmatpush1.msra.mxu0 0.0
      %4615 = vmatprep.subr.mxu0 0.0
      %4616 = vmatpush1.msra.mxu0 0.0
      %4617 = vmatprep.subr.mxu0 0.0
      %4618 = vmatpush1.msra.mxu0 0.0
      %4619 = vmatprep.subr.mxu0 0.0
      %4620 = vmatpush1.msra.mxu0 0.0
      %4621 = vmatprep.subr.mxu0 0.0
      %4622 = vmatpush1.msra.mxu0 0.0
      %4623 = vmatprep.subr.mxu0 0.0
      %4624 = vmatpush1.msra.mxu0 0.0
      %4625 = vmatprep.subr.mxu0 0.0
      %4626 = vmatpush1.msra.mxu0 0.0
      %4627 = vmatprep.subr.mxu0 0.0
      %4628 = vmatpush1.msra.mxu0 0.0
      %4629 = vmatprep.subr.mxu0 0.0
      %4630 = vmatpush1.msra.mxu0 0.0
      %4631 = vmatprep.subr.mxu0 0.0
      %4632 = vmatpush1.msra.mxu0 0.0
      %4633 = vmatprep.subr.mxu0 0.0
      %4634 = vmatpush1.msra.mxu0 0.0
      %4635 = vmatprep.subr.mxu0 0.0
      %4636 = vmatpush1.msra.mxu0 0.0
      %4637 = vmatprep.subr.mxu0 0.0
      %4638 = vmatpush1.msra.mxu0 0.0
      %4639 = vmatprep.subr.mxu0 0.0
      %4640 = vmatpush1.msra.mxu0 0.0
      %4641 = vmatprep.subr.mxu0 0.0
      %4642 = vmatpush1.msra.mxu0 0.0
      %4643 = vmatprep.subr.mxu0 0.0
      %4644 = vmatpush1.msra.mxu0 0.0
      %4645 = vmatprep.subr.mxu0 0.0
      %4646 = vmatpush1.msra.mxu0 0.0
      %4647 = vmatprep.subr.mxu0 0.0
      %4648 = vmatpush1.msra.mxu0 0.0
      %4649 = vmatprep.subr.mxu0 0.0
      %4650 = vmatpush1.msra.mxu0 0.0
      %4651 = vmatprep.subr.mxu0 0.0
      %4652 = vmatpush1.msra.mxu0 0.0
      %4653 = vmatprep.mubr.f32.mxu0 0.0
      %4654 = vmatmul.mubr.f32.gmra.mrb[0].mxu0 %v4489
      %v4655 = vpop.f32.mrb[0].mxu0
      %v4656 = vadd.f32 0.0, %v4655
      %v4657 = vpop.f32.mrb[0].mxu0
      %v4658 = vadd.f32 0.0, %v4657
      %4659 = vmatprep.mubr.f32.mxu0 0.0
      %4660 = vmatmul.mubr.f32.gmra.mrb[0].mxu0 %v4492
      %v4661 = vpop.f32.mrb[0].mxu0
      %v4662 = vadd.f32 0.0, %v4661
      %v4663 = vpop.f32.mrb[0].mxu0
      %v4664 = vadd.f32 0.0, %v4663
      %4665 = vmatprep.mubr.f32.mxu0 0.0
      %4666 = vmatmul.mubr.f32.gmra.mrb[0].mxu0 %v4495
      %v4667 = vpop.f32.mrb[0].mxu0
      %v4668 = vadd.f32 0.0, %v4667
      %v4669 = vpop.f32.mrb[0].mxu0
      %v4670 = vadd.f32 0.0, %v4669
      %4671 = vmatprep.mubr.f32.mxu0 0.0
      %4672 = vmatmul.mubr.f32.gmra.mrb[0].mxu0 %v4498
      %v4673 = vpop.f32.mrb[0].mxu0
      %v4674 = vadd.f32 0.0, %v4673
      %v4675 = vpop.f32.mrb[0].mxu0
      %v4676 = vadd.f32 0.0, %v4675
      %4677 = vdwg.mxu0
      %v4678 = vadd.f32 %v4419, %v4567
      %v4679 = vadd.f32 %v4420, %v4569
      %v4680 = vadd.f32 %v4421, %v4656
      %v4681 = vadd.f32 %v4422, %v4658
      %v4682 = vadd.f32 %v4423, %v4573
      %v4683 = vadd.f32 %v4424, %v4575
      %v4684 = vadd.f32 %v4425, %v4662
      %v4685 = vadd.f32 %v4426, %v4664
      %v4686 = vadd.f32 %v4427, %v4579
      %v4687 = vadd.f32 %v4428, %v4581
      %v4688 = vadd.f32 %v4429, %v4668
      %v4689 = vadd.f32 %v4430, %v4670
      %v4690 = vadd.f32 %v4431, %v4585
      %v4691 = vadd.f32 %v4432, %v4587
      %v4692 = vadd.f32 %v4433, %v4674
      %v4693 = vadd.f32 %v4434, %v4676
      %4694 = vrot.lane.b32.xlu0 %v2687, 107
      %v4695 = vpop.permute.xlu0 %4694
      %4696 = vrot.lane.b32.xlu0 %v2691, 107
      %v4697 = vpop.permute.xlu0 %4696
      %4698 = vrot.lane.b32.xlu0 %v2695, 107
      %v4699 = vpop.permute.xlu0 %4698
      %4700 = vrot.lane.b32.xlu0 %v2699, 107
      %v4701 = vpop.permute.xlu0 %4700
      %4702 = vrot.lane.b32.xlu0 %v2688, 107
      %v4703 = vpop.permute.xlu0 %4702
      %4704 = vrot.lane.b32.xlu0 %v2692, 107
      %v4705 = vpop.permute.xlu0 %4704
      %4706 = vrot.lane.b32.xlu0 %v2696, 107
      %v4707 = vpop.permute.xlu0 %4706
      %4708 = vrot.lane.b32.xlu0 %v2700, 107
      %v4709 = vpop.permute.xlu0 %4708
      %4710 = vrot.lane.b32.xlu0 %v2689, 107
      %v4711 = vpop.permute.xlu0 %4710
      %4712 = vrot.lane.b32.xlu0 %v2693, 107
      %v4713 = vpop.permute.xlu0 %4712
      %4714 = vrot.lane.b32.xlu0 %v2697, 107
      %v4715 = vpop.permute.xlu0 %4714
      %4716 = vrot.lane.b32.xlu0 %v2701, 107
      %v4717 = vpop.permute.xlu0 %4716
      %4718 = vrot.lane.b32.xlu0 %v2690, 107
      %v4719 = vpop.permute.xlu0 %4718
      %4720 = vrot.lane.b32.xlu0 %v2694, 107
      %v4721 = vpop.permute.xlu0 %4720
      %4722 = vrot.lane.b32.xlu0 %v2698, 107
      %v4723 = vpop.permute.xlu0 %4722
      %4724 = vrot.lane.b32.xlu0 %v2702, 107
      %v4725 = vpop.permute.xlu0 %4724
      %v4726 = vsel %vm2381, %v4711, %v4719
      %v4727 = vsel %vm2381, %v4713, %v4721
      %v4728 = vsel %vm2381, %v4715, %v4723
      %v4729 = vsel %vm2381, %v4717, %v4725
      %v4730 = vsel %vm2381, %v4703, %v4711
      %v4731 = vsel %vm2381, %v4705, %v4713
      %v4732 = vsel %vm2381, %v4707, %v4715
      %v4733 = vsel %vm2381, %v4709, %v4717
      %v4734 = vsel %vm2381, %v4695, %v4703
      %v4735 = vsel %vm2381, %v4697, %v4705
      %v4736 = vsel %vm2381, %v4699, %v4707
      %v4737 = vsel %vm2381, %v4701, %v4709
      %v4738 = vsel %vm2381, %v4719, %v4695
      %v4739 = vsel %vm2381, %v4721, %v4697
      %v4740 = vsel %vm2381, %v4723, %v4699
      %v4741 = vsel %vm2381, %v4725, %v4701
      %s4742 = scalar_lea.vmem %s4, 256
      %v4743 = vld [vmem:[%s4742] sm:$0xff]
      %v4744 = vld [vmem:[%s4742 + $0x8] sm:$0xff]
      %v4745 = vld [vmem:[%s4742 + $0x10] sm:$0xff]
      %v4746 = vld [vmem:[%s4742 + $0x18] sm:$0xff]
      %v4748 = vsel %vm457, %v4743, 0
      %v4751 = vsel %vm457, %v4744, 0
      %v4754 = vsel %vm457, %v4745, 0
      %v4757 = vsel %vm457, %v4746, 0
      %4759 = vmatprep.subr.mxu0 %v4730
      %4760 = vmatpush1.msra.mxu0 %v4734
      %4761 = vmatprep.subr.mxu0 %v4731
      %4762 = vmatpush1.msra.mxu0 %v4735
      %4763 = vmatprep.subr.mxu0 %v4732
      %4764 = vmatpush1.msra.mxu0 %v4736
      %4765 = vmatprep.subr.mxu0 %v4733
      %4766 = vmatpush1.msra.mxu0 %v4737
      %4767 = vmatprep.subr.mxu0 0.0
      %4768 = vmatpush1.msra.mxu0 0.0
      %4769 = vmatprep.subr.mxu0 0.0
      %4770 = vmatpush1.msra.mxu0 0.0
      %4771 = vmatprep.subr.mxu0 0.0
      %4772 = vmatpush1.msra.mxu0 0.0
      %4773 = vmatprep.subr.mxu0 0.0
      %4774 = vmatpush1.msra.mxu0 0.0
      %4775 = vmatprep.subr.mxu0 0.0
      %4776 = vmatpush1.msra.mxu0 0.0
      %4777 = vmatprep.subr.mxu0 0.0
      %4778 = vmatpush1.msra.mxu0 0.0
      %4779 = vmatprep.subr.mxu0 0.0
      %4780 = vmatpush1.msra.mxu0 0.0
      %4781 = vmatprep.subr.mxu0 0.0
      %4782 = vmatpush1.msra.mxu0 0.0
      %4783 = vmatprep.subr.mxu0 0.0
      %4784 = vmatpush1.msra.mxu0 0.0
      %4785 = vmatprep.subr.mxu0 0.0
      %4786 = vmatpush1.msra.mxu0 0.0
      %4787 = vmatprep.subr.mxu0 0.0
      %4788 = vmatpush1.msra.mxu0 0.0
      %4789 = vmatprep.subr.mxu0 0.0
      %4790 = vmatpush1.msra.mxu0 0.0
      %4791 = vmatprep.subr.mxu0 0.0
      %4792 = vmatpush1.msra.mxu0 0.0
      %4793 = vmatprep.subr.mxu0 0.0
      %4794 = vmatpush1.msra.mxu0 0.0
      %4795 = vmatprep.subr.mxu0 0.0
      %4796 = vmatpush1.msra.mxu0 0.0
      %4797 = vmatprep.subr.mxu0 0.0
      %4798 = vmatpush1.msra.mxu0 0.0
      %4799 = vmatprep.subr.mxu0 0.0
      %4800 = vmatpush1.msra.mxu0 0.0
      %4801 = vmatprep.subr.mxu0 0.0
      %4802 = vmatpush1.msra.mxu0 0.0
      %4803 = vmatprep.subr.mxu0 0.0
      %4804 = vmatpush1.msra.mxu0 0.0
      %4805 = vmatprep.subr.mxu0 0.0
      %4806 = vmatpush1.msra.mxu0 0.0
      %4807 = vmatprep.subr.mxu0 0.0
      %4808 = vmatpush1.msra.mxu0 0.0
      %4809 = vmatprep.subr.mxu0 0.0
      %4810 = vmatpush1.msra.mxu0 0.0
      %4811 = vmatprep.subr.mxu0 0.0
      %4812 = vmatpush1.msra.mxu0 0.0
      %4813 = vmatprep.subr.mxu0 0.0
      %4814 = vmatpush1.msra.mxu0 0.0
      %4815 = vmatprep.subr.mxu0 0.0
      %4816 = vmatpush1.msra.mxu0 0.0
      %4817 = vmatprep.subr.mxu0 0.0
      %4818 = vmatpush1.msra.mxu0 0.0
      %4819 = vmatprep.subr.mxu0 0.0
      %4820 = vmatpush1.msra.mxu0 0.0
      %4821 = vmatprep.subr.mxu0 0.0
      %4822 = vmatpush1.msra.mxu0 0.0
      %4823 = vmatprep.mubr.f32.mxu0 0.0
      %4824 = vmatmul.mubr.f32.gmra.mrb[0].mxu0 %v4748
      %v4825 = vpop.f32.mrb[0].mxu0
      %v4826 = vadd.f32 0.0, %v4825
      %v4827 = vpop.f32.mrb[0].mxu0
      %v4828 = vadd.f32 0.0, %v4827
      %4829 = vmatprep.mubr.f32.mxu0 0.0
      %4830 = vmatmul.mubr.f32.gmra.mrb[0].mxu0 %v4751
      %v4831 = vpop.f32.mrb[0].mxu0
      %v4832 = vadd.f32 0.0, %v4831
      %v4833 = vpop.f32.mrb[0].mxu0
      %v4834 = vadd.f32 0.0, %v4833
      %4835 = vmatprep.mubr.f32.mxu0 0.0
      %4836 = vmatmul.mubr.f32.gmra.mrb[0].mxu0 %v4754
      %v4837 = vpop.f32.mrb[0].mxu0
      %v4838 = vadd.f32 0.0, %v4837
      %v4839 = vpop.f32.mrb[0].mxu0
      %v4840 = vadd.f32 0.0, %v4839
      %4841 = vmatprep.mubr.f32.mxu0 0.0
      %4842 = vmatmul.mubr.f32.gmra.mrb[0].mxu0 %v4757
      %v4843 = vpop.f32.mrb[0].mxu0
      %v4844 = vadd.f32 0.0, %v4843
      %v4845 = vpop.f32.mrb[0].mxu0
      %v4846 = vadd.f32 0.0, %v4845
      %4847 = vdwg.mxu0
      %4848 = vmatprep.subr.mxu0 %v4738
      %4849 = vmatpush1.msra.mxu0 %v4726
      %4850 = vmatprep.subr.mxu0 %v4739
      %4851 = vmatpush1.msra.mxu0 %v4727
      %4852 = vmatprep.subr.mxu0 %v4740
      %4853 = vmatpush1.msra.mxu0 %v4728
      %4854 = vmatprep.subr.mxu0 %v4741
      %4855 = vmatpush1.msra.mxu0 %v4729
      %4856 = vmatprep.subr.mxu0 0.0
      %4857 = vmatpush1.msra.mxu0 0.0
      %4858 = vmatprep.subr.mxu0 0.0
      %4859 = vmatpush1.msra.mxu0 0.0
      %4860 = vmatprep.subr.mxu0 0.0
      %4861 = vmatpush1.msra.mxu0 0.0
      %4862 = vmatprep.subr.mxu0 0.0
      %4863 = vmatpush1.msra.mxu0 0.0
      %4864 = vmatprep.subr.mxu0 0.0
      %4865 = vmatpush1.msra.mxu0 0.0
      %4866 = vmatprep.subr.mxu0 0.0
      %4867 = vmatpush1.msra.mxu0 0.0
      %4868 = vmatprep.subr.mxu0 0.0
      %4869 = vmatpush1.msra.mxu0 0.0
      %4870 = vmatprep.subr.mxu0 0.0
      %4871 = vmatpush1.msra.mxu0 0.0
      %4872 = vmatprep.subr.mxu0 0.0
      %4873 = vmatpush1.msra.mxu0 0.0
      %4874 = vmatprep.subr.mxu0 0.0
      %4875 = vmatpush1.msra.mxu0 0.0
      %4876 = vmatprep.subr.mxu0 0.0
      %4877 = vmatpush1.msra.mxu0 0.0
      %4878 = vmatprep.subr.mxu0 0.0
      %4879 = vmatpush1.msra.mxu0 0.0
      %4880 = vmatprep.subr.mxu0 0.0
      %4881 = vmatpush1.msra.mxu0 0.0
      %4882 = vmatprep.subr.mxu0 0.0
      %4883 = vmatpush1.msra.mxu0 0.0
      %4884 = vmatprep.subr.mxu0 0.0
      %4885 = vmatpush1.msra.mxu0 0.0
      %4886 = vmatprep.subr.mxu0 0.0
      %4887 = vmatpush1.msra.mxu0 0.0
      %4888 = vmatprep.subr.mxu0 0.0
      %4889 = vmatpush1.msra.mxu0 0.0
      %4890 = vmatprep.subr.mxu0 0.0
      %4891 = vmatpush1.msra.mxu0 0.0
      %4892 = vmatprep.subr.mxu0 0.0
      %4893 = vmatpush1.msra.mxu0 0.0
      %4894 = vmatprep.subr.mxu0 0.0
      %4895 = vmatpush1.msra.mxu0 0.0
      %4896 = vmatprep.subr.mxu0 0.0
      %4897 = vmatpush1.msra.mxu0 0.0
      %4898 = vmatprep.subr.mxu0 0.0
      %4899 = vmatpush1.msra.mxu0 0.0
      %4900 = vmatprep.subr.mxu0 0.0
      %4901 = vmatpush1.msra.mxu0 0.0
      %4902 = vmatprep.subr.mxu0 0.0
      %4903 = vmatpush1.msra.mxu0 0.0
      %4904 = vmatprep.subr.mxu0 0.0
      %4905 = vmatpush1.msra.mxu0 0.0
      %4906 = vmatprep.subr.mxu0 0.0
      %4907 = vmatpush1.msra.mxu0 0.0
      %4908 = vmatprep.subr.mxu0 0.0
      %4909 = vmatpush1.msra.mxu0 0.0
      %4910 = vmatprep.subr.mxu0 0.0
      %4911 = vmatpush1.msra.mxu0 0.0
      %4912 = vmatprep.mubr.f32.mxu0 0.0
      %4913 = vmatmul.mubr.f32.gmra.mrb[0].mxu0 %v4748
      %v4914 = vpop.f32.mrb[0].mxu0
      %v4915 = vadd.f32 0.0, %v4914
      %v4916 = vpop.f32.mrb[0].mxu0
      %v4917 = vadd.f32 0.0, %v4916
      %4918 = vmatprep.mubr.f32.mxu0 0.0
      %4919 = vmatmul.mubr.f32.gmra.mrb[0].mxu0 %v4751
      %v4920 = vpop.f32.mrb[0].mxu0
      %v4921 = vadd.f32 0.0, %v4920
      %v4922 = vpop.f32.mrb[0].mxu0
      %v4923 = vadd.f32 0.0, %v4922
      %4924 = vmatprep.mubr.f32.mxu0 0.0
      %4925 = vmatmul.mubr.f32.gmra.mrb[0].mxu0 %v4754
      %v4926 = vpop.f32.mrb[0].mxu0
      %v4927 = vadd.f32 0.0, %v4926
      %v4928 = vpop.f32.mrb[0].mxu0
      %v4929 = vadd.f32 0.0, %v4928
      %4930 = vmatprep.mubr.f32.mxu0 0.0
      %4931 = vmatmul.mubr.f32.gmra.mrb[0].mxu0 %v4757
      %v4932 = vpop.f32.mrb[0].mxu0
      %v4933 = vadd.f32 0.0, %v4932
      %v4934 = vpop.f32.mrb[0].mxu0
      %v4935 = vadd.f32 0.0, %v4934
      %4936 = vdwg.mxu0
      %v4937 = vadd.f32 %v4678, %v4826
      %v4938 = vadd.f32 %v4679, %v4828
      %v4939 = vadd.f32 %v4680, %v4915
      %v4940 = vadd.f32 %v4681, %v4917
      %v4941 = vadd.f32 %v4682, %v4832
      %v4942 = vadd.f32 %v4683, %v4834
      %v4943 = vadd.f32 %v4684, %v4921
      %v4944 = vadd.f32 %v4685, %v4923
      %v4945 = vadd.f32 %v4686, %v4838
      %v4946 = vadd.f32 %v4687, %v4840
      %v4947 = vadd.f32 %v4688, %v4927
      %v4948 = vadd.f32 %v4689, %v4929
      %v4949 = vadd.f32 %v4690, %v4844
      %v4950 = vadd.f32 %v4691, %v4846
      %v4951 = vadd.f32 %v4692, %v4933
      %v4952 = vadd.f32 %v4693, %v4935
      %v4953 = vld [vmem:[%s5] sm:$0xff]
      %v4954 = vld [vmem:[%s5 + $0x8] sm:$0xff]
      %v4955 = vld [vmem:[%s5 + $0x10] sm:$0xff]
      %v4956 = vld [vmem:[%s5 + $0x18] sm:$0xff]
      %4958 = vset.pattern.permute.xlu0 0
      %4959 = vperm.xlu0 %4958, %v4953
      %v4960 = vpop.permute.xlu0 %4959
      %4963 = vset.pattern.permute.xlu0 0
      %4964 = vperm.xlu0 %4963, %v4954
      %v4965 = vpop.permute.xlu0 %4964
      %4968 = vset.pattern.permute.xlu0 0
      %4969 = vperm.xlu0 %4968, %v4955
      %v4970 = vpop.permute.xlu0 %4969
      %4973 = vset.pattern.permute.xlu0 0
      %4974 = vperm.xlu0 %4973, %v4956
      %v4975 = vpop.permute.xlu0 %4974
      %v4977 = vadd.f32 %v4937, %v4960
      %v4978 = vadd.f32 %v4938, %v4960
      %v4979 = vadd.f32 %v4939, %v4960
      %v4980 = vadd.f32 %v4940, %v4960
      %v4981 = vadd.f32 %v4941, %v4965
      %v4982 = vadd.f32 %v4942, %v4965
      %v4983 = vadd.f32 %v4943, %v4965
      %v4984 = vadd.f32 %v4944, %v4965
      %v4985 = vadd.f32 %v4945, %v4970
      %v4986 = vadd.f32 %v4946, %v4970
      %v4987 = vadd.f32 %v4947, %v4970
      %v4988 = vadd.f32 %v4948, %v4970
      %v4989 = vadd.f32 %v4949, %v4975
      %v4990 = vadd.f32 %v4950, %v4975
      %v4991 = vadd.f32 %v4951, %v4975
      %v4992 = vadd.f32 %v4952, %v4975
      %v4993 = vmax.f32 %v4977, 0.0
      %v4994 = vmax.f32 %v4978, 0.0
      %v4995 = vmax.f32 %v4979, 0.0
      %v4996 = vmax.f32 %v4980, 0.0
      %v4997 = vmax.f32 %v4981, 0.0
      %v4998 = vmax.f32 %v4982, 0.0
      %v4999 = vmax.f32 %v4983, 0.0
      %v5000 = vmax.f32 %v4984, 0.0
      %v5001 = vmax.f32 %v4985, 0.0
      %v5002 = vmax.f32 %v4986, 0.0
      %v5003 = vmax.f32 %v4987, 0.0
      %v5004 = vmax.f32 %v4988, 0.0
      %v5005 = vmax.f32 %v4989, 0.0
      %v5006 = vmax.f32 %v4990, 0.0
      %v5007 = vmax.f32 %v4991, 0.0
      %v5008 = vmax.f32 %v4992, 0.0
      %v5009 = vld [vmem:[%s6] sm:$0xf]
      %v5011 = vlaneseq
      %v5012 = vshrl.u32 %v5011, 7
      %v5013 = vsub.s32 0, %v5012
      %v5014 = vrot.slane %v5009, %v5013
      %v5015 = vlaneseq
      %v5016 = vshrl.u32 %v5015, 7
      %v5017 = vsub.s32 1, %v5016
      %v5018 = vrot.slane %v5009, %v5017
      %v5019 = vlaneseq
      %v5020 = vshrl.u32 %v5019, 7
      %v5021 = vsub.s32 2, %v5020
      %v5022 = vrot.slane %v5009, %v5021
      %v5023 = vlaneseq
      %v5024 = vshrl.u32 %v5023, 7
      %v5025 = vsub.s32 3, %v5024
      %v5026 = vrot.slane %v5009, %v5025
      %v5031 = vmul.f32 %v4993, %v5014
      %v5032 = vmul.f32 %v4994, %v5018
      %v5033 = vmul.f32 %v4995, %v5022
      %v5034 = vmul.f32 %v4996, %v5026
      %v5035 = vmul.f32 %v4997, %v5014
      %v5036 = vmul.f32 %v4998, %v5018
      %v5037 = vmul.f32 %v4999, %v5022
      %v5038 = vmul.f32 %v5000, %v5026
      %v5039 = vmul.f32 %v5001, %v5014
      %v5040 = vmul.f32 %v5002, %v5018
      %v5041 = vmul.f32 %v5003, %v5022
      %v5042 = vmul.f32 %v5004, %v5026
      %v5043 = vmul.f32 %v5005, %v5014
      %v5044 = vmul.f32 %v5006, %v5018
      %v5045 = vmul.f32 %v5007, %v5022
      %v5046 = vmul.f32 %v5008, %v5026
      %v5047 = vld [vmem:[%s7] sm:$0x1]
      %s5048 = sld [smem:[#allocation2]]
      %v5049 = vstv %s5048
      %v5051 = vsel %vm457, %v5047, 0
      %5053 = vmatprep.subr.mxu0 %v5032
      %5054 = vmatpush1.msra.mxu0 %v5031
      %5055 = vmatprep.subr.mxu0 %v5036
      %5056 = vmatpush1.msra.mxu0 %v5035
      %5057 = vmatprep.subr.mxu0 %v5040
      %5058 = vmatpush1.msra.mxu0 %v5039
      %5059 = vmatprep.subr.mxu0 %v5044
      %5060 = vmatpush1.msra.mxu0 %v5043
      %5061 = vmatprep.subr.mxu0 0.0
      %5062 = vmatpush1.msra.mxu0 0.0
      %5063 = vmatprep.subr.mxu0 0.0
      %5064 = vmatpush1.msra.mxu0 0.0
      %5065 = vmatprep.subr.mxu0 0.0
      %5066 = vmatpush1.msra.mxu0 0.0
      %5067 = vmatprep.subr.mxu0 0.0
      %5068 = vmatpush1.msra.mxu0 0.0
      %5069 = vmatprep.subr.mxu0 0.0
      %5070 = vmatpush1.msra.mxu0 0.0
      %5071 = vmatprep.subr.mxu0 0.0
      %5072 = vmatpush1.msra.mxu0 0.0
      %5073 = vmatprep.subr.mxu0 0.0
      %5074 = vmatpush1.msra.mxu0 0.0
      %5075 = vmatprep.subr.mxu0 0.0
      %5076 = vmatpush1.msra.mxu0 0.0
      %5077 = vmatprep.subr.mxu0 0.0
      %5078 = vmatpush1.msra.mxu0 0.0
      %5079 = vmatprep.subr.mxu0 0.0
      %5080 = vmatpush1.msra.mxu0 0.0
      %5081 = vmatprep.subr.mxu0 0.0
      %5082 = vmatpush1.msra.mxu0 0.0
      %5083 = vmatprep.subr.mxu0 0.0
      %5084 = vmatpush1.msra.mxu0 0.0
      %5085 = vmatprep.subr.mxu0 0.0
      %5086 = vmatpush1.msra.mxu0 0.0
      %5087 = vmatprep.subr.mxu0 0.0
      %5088 = vmatpush1.msra.mxu0 0.0
      %5089 = vmatprep.subr.mxu0 0.0
      %5090 = vmatpush1.msra.mxu0 0.0
      %5091 = vmatprep.subr.mxu0 0.0
      %5092 = vmatpush1.msra.mxu0 0.0
      %5093 = vmatprep.subr.mxu0 0.0
      %5094 = vmatpush1.msra.mxu0 0.0
      %5095 = vmatprep.subr.mxu0 0.0
      %5096 = vmatpush1.msra.mxu0 0.0
      %5097 = vmatprep.subr.mxu0 0.0
      %5098 = vmatpush1.msra.mxu0 0.0
      %5099 = vmatprep.subr.mxu0 0.0
      %5100 = vmatpush1.msra.mxu0 0.0
      %5101 = vmatprep.subr.mxu0 0.0
      %5102 = vmatpush1.msra.mxu0 0.0
      %5103 = vmatprep.subr.mxu0 0.0
      %5104 = vmatpush1.msra.mxu0 0.0
      %5105 = vmatprep.subr.mxu0 0.0
      %5106 = vmatpush1.msra.mxu0 0.0
      %5107 = vmatprep.subr.mxu0 0.0
      %5108 = vmatpush1.msra.mxu0 0.0
      %5109 = vmatprep.subr.mxu0 0.0
      %5110 = vmatpush1.msra.mxu0 0.0
      %5111 = vmatprep.subr.mxu0 0.0
      %5112 = vmatpush1.msra.mxu0 0.0
      %5113 = vmatprep.subr.mxu0 0.0
      %5114 = vmatpush1.msra.mxu0 0.0
      %5115 = vmatprep.subr.mxu0 0.0
      %5116 = vmatpush1.msra.mxu0 0.0
      %5117 = vmatprep.mubr.f32.mxu0 0.0
      %5118 = vmatmul.mubr.f32.gmra.mrb[0].mxu0 %v5051
      %v5119 = vpop.f32.mrb[0].mxu0
      %v5120 = vadd.f32 %v5049, %v5119
      %v5121 = vpop.f32.mrb[0].mxu0
      %v5122 = vadd.f32 %v5049, %v5121
      %5123 = vdwg.mxu0
      %5124 = vmatprep.subr.mxu0 %v5034
      %5125 = vmatpush1.msra.mxu0 %v5033
      %5126 = vmatprep.subr.mxu0 %v5038
      %5127 = vmatpush1.msra.mxu0 %v5037
      %5128 = vmatprep.subr.mxu0 %v5042
      %5129 = vmatpush1.msra.mxu0 %v5041
      %5130 = vmatprep.subr.mxu0 %v5046
      %5131 = vmatpush1.msra.mxu0 %v5045
      %5132 = vmatprep.subr.mxu0 0.0
      %5133 = vmatpush1.msra.mxu0 0.0
      %5134 = vmatprep.subr.mxu0 0.0
      %5135 = vmatpush1.msra.mxu0 0.0
      %5136 = vmatprep.subr.mxu0 0.0
      %5137 = vmatpush1.msra.mxu0 0.0
      %5138 = vmatprep.subr.mxu0 0.0
      %5139 = vmatpush1.msra.mxu0 0.0
      %5140 = vmatprep.subr.mxu0 0.0
      %5141 = vmatpush1.msra.mxu0 0.0
      %5142 = vmatprep.subr.mxu0 0.0
      %5143 = vmatpush1.msra.mxu0 0.0
      %5144 = vmatprep.subr.mxu0 0.0
      %5145 = vmatpush1.msra.mxu0 0.0
      %5146 = vmatprep.subr.mxu0 0.0
      %5147 = vmatpush1.msra.mxu0 0.0
      %5148 = vmatprep.subr.mxu0 0.0
      %5149 = vmatpush1.msra.mxu0 0.0
      %5150 = vmatprep.subr.mxu0 0.0
      %5151 = vmatpush1.msra.mxu0 0.0
      %5152 = vmatprep.subr.mxu0 0.0
      %5153 = vmatpush1.msra.mxu0 0.0
      %5154 = vmatprep.subr.mxu0 0.0
      %5155 = vmatpush1.msra.mxu0 0.0
      %5156 = vmatprep.subr.mxu0 0.0
      %5157 = vmatpush1.msra.mxu0 0.0
      %5158 = vmatprep.subr.mxu0 0.0
      %5159 = vmatpush1.msra.mxu0 0.0
      %5160 = vmatprep.subr.mxu0 0.0
      %5161 = vmatpush1.msra.mxu0 0.0
      %5162 = vmatprep.subr.mxu0 0.0
      %5163 = vmatpush1.msra.mxu0 0.0
      %5164 = vmatprep.subr.mxu0 0.0
      %5165 = vmatpush1.msra.mxu0 0.0
      %5166 = vmatprep.subr.mxu0 0.0
      %5167 = vmatpush1.msra.mxu0 0.0
      %5168 = vmatprep.subr.mxu0 0.0
      %5169 = vmatpush1.msra.mxu0 0.0
      %5170 = vmatprep.subr.mxu0 0.0
      %5171 = vmatpush1.msra.mxu0 0.0
      %5172 = vmatprep.subr.mxu0 0.0
      %5173 = vmatpush1.msra.mxu0 0.0
      %5174 = vmatprep.subr.mxu0 0.0
      %5175 = vmatpush1.msra.mxu0 0.0
      %5176 = vmatprep.subr.mxu0 0.0
      %5177 = vmatpush1.msra.mxu0 0.0
      %5178 = vmatprep.subr.mxu0 0.0
      %5179 = vmatpush1.msra.mxu0 0.0
      %5180 = vmatprep.subr.mxu0 0.0
      %5181 = vmatpush1.msra.mxu0 0.0
      %5182 = vmatprep.subr.mxu0 0.0
      %5183 = vmatpush1.msra.mxu0 0.0
      %5184 = vmatprep.subr.mxu0 0.0
      %5185 = vmatpush1.msra.mxu0 0.0
      %5186 = vmatprep.subr.mxu0 0.0
      %5187 = vmatpush1.msra.mxu0 0.0
      %5188 = vmatprep.mubr.f32.mxu0 0.0
      %5189 = vmatmul.mubr.f32.gmra.mrb[0].mxu0 %v5051
      %v5190 = vpop.f32.mrb[0].mxu0
      %v5191 = vadd.f32 %v5049, %v5190
      %v5192 = vpop.f32.mrb[0].mxu0
      %v5193 = vadd.f32 %v5049, %v5192
      %5194 = vdwg.mxu0
      %v5199 = vcombine.low %v5120, %v5122
      %v5200 = vcombine.low %v5191, %v5193
      %v5202 = vunpack.c.l.s4 1966171168
      %v5203 = vunpack.c.0.s8 %v5202
      %v5204 = vlaneseq
      %v5205 = vshrl.u32 %v5204, 7
      %v5206 = vsub.s32 %v5203, %v5205
      %v5207 = vrot.slane %v5199, %v5206
      %v5209 = vunpack.c.l.s4 1966171168
      %v5210 = vunpack.c.0.s8 %v5209
      %v5211 = vlaneseq
      %v5212 = vshrl.u32 %v5211, 7
      %v5213 = vsub.s32 %v5210, %v5212
      %v5214 = vrot.slane %v5200, %v5213
      %v5215 = vcombine.low %v5207, %v5214
      %v5217 = vunpack.c.l.s4 1966171168
      %v5218 = vunpack.c.0.s8 %v5217
      %v5219 = vlaneseq
      %v5220 = vshrl.u32 %v5219, 7
      %v5221 = vsub.s32 %v5218, %v5220
      %v5222 = vrot.slane %v5215, %v5221
      %v5224 = vlaneseq
      %vm5225 = vcmp.ge.s32.totalorder %v5224, 0
      %vm5226 = vcmp.lt.s32.totalorder %v5224, 512
      %vm5227 = vmand %vm5225, %vm5226
      %5228 = vst.msk [vmem:[%s331] sm:$0xf] %vm5227, %v5222
      %p5229 = scmp.lt.s32.totalorder %s21, 1
      %s5230 = scalar_select %p5229, %s21, 1
      %s5231 = smul.addr %s5230, 4
      %s5232 = scalar_lea.vmem %s9, %s5231
      // Predicated region
      $region57: #{_lambda_.1} parent=55 // pred_check
        %p5233 = pneg %p233
      $region58: #{_lambda_.1} parent=55 // pred_check_branch
        %5235 = sbr.rel (%p5233) target = $region60
      $region59: #{_lambda_.1} parent=55 // pred_region
        _
      $region60: #{_lambda_.1} parent=55 // pred_fallthru
        _
    $region56: #{_lambda_.1} parent=5 // pred_fallthru
      _
    %p5236 = scmp.le.s32.totalorder 2, %s16
    // Predicated region
    $region61: #{_lambda_.1} parent=5 // pred_check
      %p5237 = pneg %p5236
    $region62: #{_lambda_.1} parent=5 // pred_check_branch
      %5239 = sbr.rel (%p5237) target = $region64
    $region63: #{_lambda_.1} parent=5 // pred_region
      %s5240 = ssub.s32 %s16, 2
      // Predicated region
      $region65: #{_lambda_.1} parent=63 // pred_check
        %p5241 = pneg %p239
      $region66: #{_lambda_.1} parent=63 // pred_check_branch
        %5243 = sbr.rel (%p5241) target = $region68
      $region67: #{_lambda_.1} parent=63 // pred_region
        %p5244 = scmp.lt.s32.totalorder %s22, 1
        %s5245 = scalar_select %p5244, %s22, 1
        %s5246 = smul.addr %s5245, 4
        %s5247 = scalar_lea.vmem %s9, %s5246
      $region68: #{_lambda_.1} parent=63 // pred_fallthru
        _
    $region64: #{_lambda_.1} parent=5 // pred_fallthru
      _
  $region6: #{_lambda_.1} parent=0 // loop_footer
    %s20 = sadd.s32 1, %s16
  $region7: #{_lambda_.1} parent=0 // loop_footer_branch
    %15 = sbr.rel target = $region3
  $region8: #{_lambda_.1} parent=0 // loop_exit
    _

</llo_original>
